<compile_context>
chip_gen: v7x
topology: tpu7x:2x2x1
jax: 0.10.0
libtpu: 0.0.40
codegen_flags: <defaults>
</compile_context>

<pallas_src>
import functools

import jax
import jax.numpy as jnp
from jax import lax
from jax.experimental import pallas as pl
from jax.experimental.pallas import tpu as pltpu

_K0, _D0, _P0 = 7, 1, 3       # conv0        : 7x7,  dilation 1, padding 3
_K1, _D1, _P1 = 11, 5, 25     # conv_spatial : 11x11, dilation 5, padding 25


# ------------------------------ kernel helpers -------------------------------


def _shift_fold(a, s, hw):
    """r[:, f] = a[:, f + s] where 0 <= f + s < hw, else 0.  Static shift s."""
    if s == 0:
        return a
    c = a.shape[0]
    pad = jnp.zeros((c, abs(s)), a.dtype)
    if s > 0:
        return jnp.concatenate([a[:, s:], pad], axis=1)
    return jnp.concatenate([pad, a[:, :hw + s]], axis=1)


def _dwconv_folded(a, w_flat, col_idx, K, D, P, H, W):
    """Depthwise KxK conv (dilation D, zero-padding P) on a folded image.

    a       : (C, H*W) f32 activations (h*W + w on lanes)
    w_flat  : (C, K*K) f32, w_flat[c, kh*K + kw] == torch weight[c, 0, kh, kw]
    col_idx : (1, H*W) int32, col_idx[0, f] == f % W
    Returns (C, H*W) f32 (bias NOT added).
    """
    C, HW = a.shape
    acc = jnp.zeros((C, HW), jnp.float32)
    for kw in range(K):
        dw = kw * D - P
        ow0, ow1 = max(0, -dw), min(W, W - dw)
        if ow1 <= ow0:
            continue                              # column shift beyond the image
        col_ok = None
        if ow0 != 0 or ow1 != W:
            # Mask the columns where the folded shift wrapped across a row.
            col_ok = (col_idx >= ow0) & (col_idx < ow1)
        for kh in range(K):
            dh = kh * D - P
            if max(0, -dh) >= min(H, H - dh):
                continue                          # row shift beyond the image
            # Zero-filled fold shift handles the row (h) boundary exactly once
            # the wrapped columns are masked out.
            shifted = _shift_fold(a, dh * W + dw, HW)
            if col_ok is not None:
                shifted = jnp.where(col_ok, shifted, 0.0)
            idx = kh * K + kw
            acc = acc + shifted * w_flat[:, idx:idx + 1]      # (C,1) lane splat
    return acc


# ----------------------------- fused Pallas kernel ----------------------------


def _lka_kernel(x_ref, col_ref, w0_ref, b0_ref, w1_ref, b1_ref, w2_ref, b2_ref,
                o_ref, *, H, W):
    """One batch element, fully fused.

    x_ref : (1, C, H*W)   input (also the gate multiplier u)
    col_ref: (1, H*W)     int32 column index (f % W)
    w0_ref: (C, 49)   b0_ref: (C, 1)   depthwise 7x7
    w1_ref: (C, 121)  b1_ref: (C, 1)   depthwise 11x11 dilation 5
    w2_ref: (C, C)    b2_ref: (C, 1)   1x1 conv (Cout, Cin)
    o_ref : (1, C, H*W)
    """
    f32 = jnp.float32
    x = x_ref[0].astype(f32)                     # (C, H*W)
    col_idx = col_ref[...]                       # (1, H*W)

    # Depthwise 7x7, then depthwise 11x11 dilation 5; weights loaded once.
    a = _dwconv_folded(x, w0_ref[...].astype(f32), col_idx, _K0, _D0, _P0, H, W)
    a = a + b0_ref[...].astype(f32)
    a = _dwconv_folded(a, w1_ref[...].astype(f32), col_idx, _K1, _D1, _P1, H, W)
    a = a + b1_ref[...].astype(f32)

    # 1x1 conv: (Cout, Cin) x (Cin, H*W) on the MXU; N = H*W is lane-dense.
    attn = jnp.dot(w2_ref[...].astype(f32), a,
                   preferred_element_type=f32) + b2_ref[...].astype(f32)

    # Gate + lane-dense store (last dim H*W, a multiple of 128 at 16x16).
    o_ref[0] = (x * attn).astype(o_ref.dtype)


# ---------------------------------- wrappers ----------------------------------


def _lka_pallas(x_flat, col_idx, w0, b0, w1, b1, w2, b2, *, H, W):
    B, C, HW = x_flat.shape
    kern = functools.partial(_lka_kernel, H=H, W=W)
    return pl.pallas_call(
        kern,
        out_shape=jax.ShapeDtypeStruct((B, C, HW), x_flat.dtype),
        grid=(B,),
        in_specs=[
            pl.BlockSpec((1, C, HW), lambda b: (b, 0, 0)),        # x
            pl.BlockSpec((1, HW), lambda b: (0, 0)),              # col index
            pl.BlockSpec((C, _K0 * _K0), lambda b: (0, 0)),       # w0
            pl.BlockSpec((C, 1), lambda b: (0, 0)),               # b0
            pl.BlockSpec((C, _K1 * _K1), lambda b: (0, 0)),       # w1
            pl.BlockSpec((C, 1), lambda b: (0, 0)),               # b1
            pl.BlockSpec((C, C), lambda b: (0, 0)),               # w2
            pl.BlockSpec((C, 1), lambda b: (0, 0)),               # b2
        ],
        out_specs=pl.BlockSpec((1, C, HW), lambda b: (b, 0, 0)),
        compiler_params=pltpu.CompilerParams(
            dimension_semantics=("parallel",),
            # No vmem_limit_bytes: working set is tens of KiB on all chips.
        ),
    )(x_flat, col_idx, w0, b0, w1, b1, w2, b2)


def init_lka_params(dim, key):
    """Deterministic synthetic parameters matching nn.Conv2d shapes.

    conv0        : torch weight (dim, 1, 7, 7)  stored as (7, 7, dim),  bias (1, dim)
    conv_spatial : torch weight (dim, 1, 11,11) stored as (11, 11, dim),bias (1, dim)
    conv1        : torch weight (dim, dim, 1,1) stored as (dim, dim),   bias (1, dim)
    """
    ks = jax.random.split(key, 6)
    return dict(
        w0=jax.random.normal(ks[0], (7, 7, dim), jnp.float32) * 0.10,
        b0=jax.random.normal(ks[1], (1, dim), jnp.float32) * 0.10,
        w1=jax.random.normal(ks[2], (11, 11, dim), jnp.float32) * 0.05,
        b1=jax.random.normal(ks[3], (1, dim), jnp.float32) * 0.10,
        w2=jax.random.normal(ks[4], (dim, dim), jnp.float32) * 0.10,
        b2=jax.random.normal(ks[5], (1, dim), jnp.float32) * 0.10,
    )


@jax.jit
def lka_forward(x_nchw, params):
    """LKA.forward.  x_nchw: (B, C, H, W) -> (B, C, H, W).  No transposes."""
    B, C, H, W = x_nchw.shape
    x_flat = x_nchw.reshape(B, C, H * W)                       # free metadata op
    col_idx = (jnp.arange(H * W, dtype=jnp.int32) % W).reshape(1, H * W)
    w0 = params["w0"].reshape(_K0 * _K0, C).T                  # (C, 49)   tiny
    w1 = params["w1"].reshape(_K1 * _K1, C).T                  # (C, 121)  tiny
    b0 = params["b0"].reshape(C, 1)
    b1 = params["b1"].reshape(C, 1)
    b2 = params["b2"].reshape(C, 1)
    out = _lka_pallas(x_flat, col_idx, w0, b0, w1, b1, params["w2"], b2,
                      H=H, W=W)
    return out.reshape(B, C, H, W)                             # free metadata op


# --------------------------- pure-JAX reference check --------------------------


def _lka_ref(x_nchw, p):
    x = jnp.transpose(x_nchw, (0, 2, 3, 1))
    C = x.shape[-1]
    dn = ("NHWC", "HWIO", "NHWC")
    a = lax.conv_general_dilated(
        x, p["w0"][:, :, None, :], (1, 1), ((3, 3), (3, 3)),
        dimension_numbers=dn, feature_group_count=C) + p["b0"][0]
    a = lax.conv_general_dilated(
        a, p["w1"][:, :, None, :], (1, 1), ((25, 25), (25, 25)),
        rhs_dilation=(5, 5),
        dimension_numbers=dn, feature_group_count=C) + p["b1"][0]
    a = jnp.einsum("bhwc,oc->bhwo", a, p["w2"]) + p["b2"][0]
    return jnp.transpose(x * a, (0, 3, 1, 2))


if __name__ == "__main__":
    key = jax.random.PRNGKey(0)
    k_x, k_p = jax.random.split(key)

    B, C, H, W = 2, 4, 16, 16
    x = jax.random.normal(k_x, (B, C, H, W), jnp.float32)
    params = init_lka_params(C, k_p)

    out = jax.block_until_ready(lka_forward(x, params))

    ref = _lka_ref(x, params)
    assert out.shape == (B, C, H, W)
    err = float(jnp.max(jnp.abs(out - ref)))
    assert jnp.allclose(out, ref, rtol=5e-4, atol=5e-4), err

    print("KERNEL_OK")
</pallas_src>

<mosaic_0001>
module attributes {stable_mosaic.version = 11 : i64} {
  func.func @_lka_kernel(%arg0: i32, %arg1: memref<1x4x256xf32, #tpu.memory_space<vmem>>, %arg2: memref<1x256xi32, #tpu.memory_space<vmem>>, %arg3: memref<4x49xf32, #tpu.memory_space<vmem>>, %arg4: memref<4x1xf32, #tpu.memory_space<vmem>>, %arg5: memref<4x121xf32, #tpu.memory_space<vmem>>, %arg6: memref<4x1xf32, #tpu.memory_space<vmem>>, %arg7: memref<4x4xf32, #tpu.memory_space<vmem>>, %arg8: memref<4x1xf32, #tpu.memory_space<vmem>>, %arg9: memref<1x4x256xf32, #tpu.memory_space<vmem>>) attributes {dimension_semantics = [#tpu.dimension_semantics<parallel>], iteration_bounds = array<i64: 2>, scalar_prefetch = 0 : i64, scratch_operands = 0 : i64, tpu.core_type = #tpu.core_type<tc>, window_params = [{transform_indices = @transform_0, window_bounds = array<i64: 1, 4, 256>}, {pipeline_mode = #tpu.pipeline_mode<synchronous>, transform_indices = @transform_1, window_bounds = array<i64: 1, 256>}, {pipeline_mode = #tpu.pipeline_mode<synchronous>, transform_indices = @transform_2, window_bounds = array<i64: 4, 49>}, {pipeline_mode = #tpu.pipeline_mode<synchronous>, transform_indices = @transform_3, window_bounds = array<i64: 4, 1>}, {pipeline_mode = #tpu.pipeline_mode<synchronous>, transform_indices = @transform_4, window_bounds = array<i64: 4, 121>}, {pipeline_mode = #tpu.pipeline_mode<synchronous>, transform_indices = @transform_5, window_bounds = array<i64: 4, 1>}, {pipeline_mode = #tpu.pipeline_mode<synchronous>, transform_indices = @transform_6, window_bounds = array<i64: 4, 4>}, {pipeline_mode = #tpu.pipeline_mode<synchronous>, transform_indices = @transform_7, window_bounds = array<i64: 4, 1>}, {transform_indices = @transform_8, window_bounds = array<i64: 1, 4, 256>}]} {
    %c0 = arith.constant 0 : index
    %c0_0 = arith.constant 0 : index
    %c0_1 = arith.constant 0 : index
    %0 = vector.load %arg1[%c0, %c0_0, %c0_1] : memref<1x4x256xf32, #tpu.memory_space<vmem>>, vector<1x4x256xf32>
    %1 = vector.shape_cast %0 : vector<1x4x256xf32> to vector<4x256xf32>
    %c0_2 = arith.constant 0 : index
    %c0_3 = arith.constant 0 : index
    %2 = vector.load %arg2[%c0_2, %c0_3] : memref<1x256xi32, #tpu.memory_space<vmem>>, vector<1x256xi32>
    %c0_4 = arith.constant 0 : index
    %c0_5 = arith.constant 0 : index
    %3 = vector.load %arg3[%c0_4, %c0_5] : memref<4x49xf32, #tpu.memory_space<vmem>>, vector<4x49xf32>
    %cst = arith.constant 0.000000e+00 : f32
    %4 = vector.broadcast %cst : f32 to vector<4x256xf32>
    %c3_i32 = arith.constant 3 : i32
    %5 = vector.broadcast %c3_i32 : i32 to vector<1x256xi32>
    %6 = arith.cmpi sge, %2, %5 : vector<1x256xi32>
    %c16_i32 = arith.constant 16 : i32
    %7 = vector.broadcast %c16_i32 : i32 to vector<1x256xi32>
    %8 = arith.cmpi slt, %2, %7 : vector<1x256xi32>
    %9 = arith.andi %6, %8 : vector<1x256xi1>
    %cst_6 = arith.constant 0.000000e+00 : f32
    %10 = vector.broadcast %cst_6 : f32 to vector<4x51xf32>
    %11 = vector.extract_strided_slice %1 {offsets = [0, 0], sizes = [4, 205], strides = [1, 1]} : vector<4x256xf32> to vector<4x205xf32>
    %12 = tpu.concatenate %10, %11 in 1 : vector<4x51xf32>, vector<4x205xf32> -> vector<4x256xf32>
    %cst_7 = arith.constant 0.000000e+00 : f32
    %13 = vector.shape_cast %9 : vector<1x256xi1> to vector<1x256xi1>
    %14 = vector.broadcast %13 : vector<1x256xi1> to vector<4x256xi1>
    %15 = vector.broadcast %cst_7 : f32 to vector<4x256xf32>
    %16 = arith.select %14, %12, %15 : vector<4x256xi1>, vector<4x256xf32>
    %17 = vector.extract_strided_slice %3 {offsets = [0, 0], sizes = [4, 1], strides = [1, 1]} : vector<4x49xf32> to vector<4x1xf32>
    %18 = vector.broadcast %17 : vector<4x1xf32> to vector<4x256xf32>
    %19 = arith.mulf %16, %18 : vector<4x256xf32>
    %20 = arith.addf %4, %19 : vector<4x256xf32>
    %cst_8 = arith.constant 0.000000e+00 : f32
    %21 = vector.broadcast %cst_8 : f32 to vector<4x35xf32>
    %22 = vector.extract_strided_slice %1 {offsets = [0, 0], sizes = [4, 221], strides = [1, 1]} : vector<4x256xf32> to vector<4x221xf32>
    %23 = tpu.concatenate %21, %22 in 1 : vector<4x35xf32>, vector<4x221xf32> -> vector<4x256xf32>
    %cst_9 = arith.constant 0.000000e+00 : f32
    %24 = vector.shape_cast %9 : vector<1x256xi1> to vector<1x256xi1>
    %25 = vector.broadcast %24 : vector<1x256xi1> to vector<4x256xi1>
    %26 = vector.broadcast %cst_9 : f32 to vector<4x256xf32>
    %27 = arith.select %25, %23, %26 : vector<4x256xi1>, vector<4x256xf32>
    %28 = vector.extract_strided_slice %3 {offsets = [0, 7], sizes = [4, 1], strides = [1, 1]} : vector<4x49xf32> to vector<4x1xf32>
    %29 = vector.broadcast %28 : vector<4x1xf32> to vector<4x256xf32>
    %30 = arith.mulf %27, %29 : vector<4x256xf32>
    %31 = arith.addf %20, %30 : vector<4x256xf32>
    %cst_10 = arith.constant 0.000000e+00 : f32
    %32 = vector.broadcast %cst_10 : f32 to vector<4x19xf32>
    %33 = vector.extract_strided_slice %1 {offsets = [0, 0], sizes = [4, 237], strides = [1, 1]} : vector<4x256xf32> to vector<4x237xf32>
    %34 = tpu.concatenate %32, %33 in 1 : vector<4x19xf32>, vector<4x237xf32> -> vector<4x256xf32>
    %cst_11 = arith.constant 0.000000e+00 : f32
    %35 = vector.shape_cast %9 : vector<1x256xi1> to vector<1x256xi1>
    %36 = vector.broadcast %35 : vector<1x256xi1> to vector<4x256xi1>
    %37 = vector.broadcast %cst_11 : f32 to vector<4x256xf32>
    %38 = arith.select %36, %34, %37 : vector<4x256xi1>, vector<4x256xf32>
    %39 = vector.extract_strided_slice %3 {offsets = [0, 14], sizes = [4, 1], strides = [1, 1]} : vector<4x49xf32> to vector<4x1xf32>
    %40 = vector.broadcast %39 : vector<4x1xf32> to vector<4x256xf32>
    %41 = arith.mulf %38, %40 : vector<4x256xf32>
    %42 = arith.addf %31, %41 : vector<4x256xf32>
    %cst_12 = arith.constant 0.000000e+00 : f32
    %43 = vector.broadcast %cst_12 : f32 to vector<4x3xf32>
    %44 = vector.extract_strided_slice %1 {offsets = [0, 0], sizes = [4, 253], strides = [1, 1]} : vector<4x256xf32> to vector<4x253xf32>
    %45 = tpu.concatenate %43, %44 in 1 : vector<4x3xf32>, vector<4x253xf32> -> vector<4x256xf32>
    %cst_13 = arith.constant 0.000000e+00 : f32
    %46 = vector.shape_cast %9 : vector<1x256xi1> to vector<1x256xi1>
    %47 = vector.broadcast %46 : vector<1x256xi1> to vector<4x256xi1>
    %48 = vector.broadcast %cst_13 : f32 to vector<4x256xf32>
    %49 = arith.select %47, %45, %48 : vector<4x256xi1>, vector<4x256xf32>
    %50 = vector.extract_strided_slice %3 {offsets = [0, 21], sizes = [4, 1], strides = [1, 1]} : vector<4x49xf32> to vector<4x1xf32>
    %51 = vector.broadcast %50 : vector<4x1xf32> to vector<4x256xf32>
    %52 = arith.mulf %49, %51 : vector<4x256xf32>
    %53 = arith.addf %42, %52 : vector<4x256xf32>
    %cst_14 = arith.constant 0.000000e+00 : f32
    %54 = vector.broadcast %cst_14 : f32 to vector<4x13xf32>
    %55 = vector.extract_strided_slice %1 {offsets = [0, 13], sizes = [4, 243], strides = [1, 1]} : vector<4x256xf32> to vector<4x243xf32>
    %56 = tpu.concatenate %55, %54 in 1 : vector<4x243xf32>, vector<4x13xf32> -> vector<4x256xf32>
    %cst_15 = arith.constant 0.000000e+00 : f32
    %57 = vector.shape_cast %9 : vector<1x256xi1> to vector<1x256xi1>
    %58 = vector.broadcast %57 : vector<1x256xi1> to vector<4x256xi1>
    %59 = vector.broadcast %cst_15 : f32 to vector<4x256xf32>
    %60 = arith.select %58, %56, %59 : vector<4x256xi1>, vector<4x256xf32>
    %61 = vector.extract_strided_slice %3 {offsets = [0, 28], sizes = [4, 1], strides = [1, 1]} : vector<4x49xf32> to vector<4x1xf32>
    %62 = vector.broadcast %61 : vector<4x1xf32> to vector<4x256xf32>
    %63 = arith.mulf %60, %62 : vector<4x256xf32>
    %64 = arith.addf %53, %63 : vector<4x256xf32>
    %cst_16 = arith.constant 0.000000e+00 : f32
    %65 = vector.broadcast %cst_16 : f32 to vector<4x29xf32>
    %66 = vector.extract_strided_slice %1 {offsets = [0, 29], sizes = [4, 227], strides = [1, 1]} : vector<4x256xf32> to vector<4x227xf32>
    %67 = tpu.concatenate %66, %65 in 1 : vector<4x227xf32>, vector<4x29xf32> -> vector<4x256xf32>
    %cst_17 = arith.constant 0.000000e+00 : f32
    %68 = vector.shape_cast %9 : vector<1x256xi1> to vector<1x256xi1>
    %69 = vector.broadcast %68 : vector<1x256xi1> to vector<4x256xi1>
    %70 = vector.broadcast %cst_17 : f32 to vector<4x256xf32>
    %71 = arith.select %69, %67, %70 : vector<4x256xi1>, vector<4x256xf32>
    %72 = vector.extract_strided_slice %3 {offsets = [0, 35], sizes = [4, 1], strides = [1, 1]} : vector<4x49xf32> to vector<4x1xf32>
    %73 = vector.broadcast %72 : vector<4x1xf32> to vector<4x256xf32>
    %74 = arith.mulf %71, %73 : vector<4x256xf32>
    %75 = arith.addf %64, %74 : vector<4x256xf32>
    %cst_18 = arith.constant 0.000000e+00 : f32
    %76 = vector.broadcast %cst_18 : f32 to vector<4x45xf32>
    %77 = vector.extract_strided_slice %1 {offsets = [0, 45], sizes = [4, 211], strides = [1, 1]} : vector<4x256xf32> to vector<4x211xf32>
    %78 = tpu.concatenate %77, %76 in 1 : vector<4x211xf32>, vector<4x45xf32> -> vector<4x256xf32>
    %cst_19 = arith.constant 0.000000e+00 : f32
    %79 = vector.shape_cast %9 : vector<1x256xi1> to vector<1x256xi1>
    %80 = vector.broadcast %79 : vector<1x256xi1> to vector<4x256xi1>
    %81 = vector.broadcast %cst_19 : f32 to vector<4x256xf32>
    %82 = arith.select %80, %78, %81 : vector<4x256xi1>, vector<4x256xf32>
    %83 = vector.extract_strided_slice %3 {offsets = [0, 42], sizes = [4, 1], strides = [1, 1]} : vector<4x49xf32> to vector<4x1xf32>
    %84 = vector.broadcast %83 : vector<4x1xf32> to vector<4x256xf32>
    %85 = arith.mulf %82, %84 : vector<4x256xf32>
    %86 = arith.addf %75, %85 : vector<4x256xf32>
    %c2_i32 = arith.constant 2 : i32
    %87 = vector.broadcast %c2_i32 : i32 to vector<1x256xi32>
    %88 = arith.cmpi sge, %2, %87 : vector<1x256xi32>
    %c16_i32_20 = arith.constant 16 : i32
    %89 = vector.broadcast %c16_i32_20 : i32 to vector<1x256xi32>
    %90 = arith.cmpi slt, %2, %89 : vector<1x256xi32>
    %91 = arith.andi %88, %90 : vector<1x256xi1>
    %cst_21 = arith.constant 0.000000e+00 : f32
    %92 = vector.broadcast %cst_21 : f32 to vector<4x50xf32>
    %93 = vector.extract_strided_slice %1 {offsets = [0, 0], sizes = [4, 206], strides = [1, 1]} : vector<4x256xf32> to vector<4x206xf32>
    %94 = tpu.concatenate %92, %93 in 1 : vector<4x50xf32>, vector<4x206xf32> -> vector<4x256xf32>
    %cst_22 = arith.constant 0.000000e+00 : f32
    %95 = vector.shape_cast %91 : vector<1x256xi1> to vector<1x256xi1>
    %96 = vector.broadcast %95 : vector<1x256xi1> to vector<4x256xi1>
    %97 = vector.broadcast %cst_22 : f32 to vector<4x256xf32>
    %98 = arith.select %96, %94, %97 : vector<4x256xi1>, vector<4x256xf32>
    %99 = vector.extract_strided_slice %3 {offsets = [0, 1], sizes = [4, 1], strides = [1, 1]} : vector<4x49xf32> to vector<4x1xf32>
    %100 = vector.broadcast %99 : vector<4x1xf32> to vector<4x256xf32>
    %101 = arith.mulf %98, %100 : vector<4x256xf32>
    %102 = arith.addf %86, %101 : vector<4x256xf32>
    %cst_23 = arith.constant 0.000000e+00 : f32
    %103 = vector.broadcast %cst_23 : f32 to vector<4x34xf32>
    %104 = vector.extract_strided_slice %1 {offsets = [0, 0], sizes = [4, 222], strides = [1, 1]} : vector<4x256xf32> to vector<4x222xf32>
    %105 = tpu.concatenate %103, %104 in 1 : vector<4x34xf32>, vector<4x222xf32> -> vector<4x256xf32>
    %cst_24 = arith.constant 0.000000e+00 : f32
    %106 = vector.shape_cast %91 : vector<1x256xi1> to vector<1x256xi1>
    %107 = vector.broadcast %106 : vector<1x256xi1> to vector<4x256xi1>
    %108 = vector.broadcast %cst_24 : f32 to vector<4x256xf32>
    %109 = arith.select %107, %105, %108 : vector<4x256xi1>, vector<4x256xf32>
    %110 = vector.extract_strided_slice %3 {offsets = [0, 8], sizes = [4, 1], strides = [1, 1]} : vector<4x49xf32> to vector<4x1xf32>
    %111 = vector.broadcast %110 : vector<4x1xf32> to vector<4x256xf32>
    %112 = arith.mulf %109, %111 : vector<4x256xf32>
    %113 = arith.addf %102, %112 : vector<4x256xf32>
    %cst_25 = arith.constant 0.000000e+00 : f32
    %114 = vector.broadcast %cst_25 : f32 to vector<4x18xf32>
    %115 = vector.extract_strided_slice %1 {offsets = [0, 0], sizes = [4, 238], strides = [1, 1]} : vector<4x256xf32> to vector<4x238xf32>
    %116 = tpu.concatenate %114, %115 in 1 : vector<4x18xf32>, vector<4x238xf32> -> vector<4x256xf32>
    %cst_26 = arith.constant 0.000000e+00 : f32
    %117 = vector.shape_cast %91 : vector<1x256xi1> to vector<1x256xi1>
    %118 = vector.broadcast %117 : vector<1x256xi1> to vector<4x256xi1>
    %119 = vector.broadcast %cst_26 : f32 to vector<4x256xf32>
    %120 = arith.select %118, %116, %119 : vector<4x256xi1>, vector<4x256xf32>
    %121 = vector.extract_strided_slice %3 {offsets = [0, 15], sizes = [4, 1], strides = [1, 1]} : vector<4x49xf32> to vector<4x1xf32>
    %122 = vector.broadcast %121 : vector<4x1xf32> to vector<4x256xf32>
    %123 = arith.mulf %120, %122 : vector<4x256xf32>
    %124 = arith.addf %113, %123 : vector<4x256xf32>
    %cst_27 = arith.constant 0.000000e+00 : f32
    %125 = vector.broadcast %cst_27 : f32 to vector<4x2xf32>
    %126 = vector.extract_strided_slice %1 {offsets = [0, 0], sizes = [4, 254], strides = [1, 1]} : vector<4x256xf32> to vector<4x254xf32>
    %127 = tpu.concatenate %125, %126 in 1 : vector<4x2xf32>, vector<4x254xf32> -> vector<4x256xf32>
    %cst_28 = arith.constant 0.000000e+00 : f32
    %128 = vector.shape_cast %91 : vector<1x256xi1> to vector<1x256xi1>
    %129 = vector.broadcast %128 : vector<1x256xi1> to vector<4x256xi1>
    %130 = vector.broadcast %cst_28 : f32 to vector<4x256xf32>
    %131 = arith.select %129, %127, %130 : vector<4x256xi1>, vector<4x256xf32>
    %132 = vector.extract_strided_slice %3 {offsets = [0, 22], sizes = [4, 1], strides = [1, 1]} : vector<4x49xf32> to vector<4x1xf32>
    %133 = vector.broadcast %132 : vector<4x1xf32> to vector<4x256xf32>
    %134 = arith.mulf %131, %133 : vector<4x256xf32>
    %135 = arith.addf %124, %134 : vector<4x256xf32>
    %cst_29 = arith.constant 0.000000e+00 : f32
    %136 = vector.broadcast %cst_29 : f32 to vector<4x14xf32>
    %137 = vector.extract_strided_slice %1 {offsets = [0, 14], sizes = [4, 242], strides = [1, 1]} : vector<4x256xf32> to vector<4x242xf32>
    %138 = tpu.concatenate %137, %136 in 1 : vector<4x242xf32>, vector<4x14xf32> -> vector<4x256xf32>
    %cst_30 = arith.constant 0.000000e+00 : f32
    %139 = vector.shape_cast %91 : vector<1x256xi1> to vector<1x256xi1>
    %140 = vector.broadcast %139 : vector<1x256xi1> to vector<4x256xi1>
    %141 = vector.broadcast %cst_30 : f32 to vector<4x256xf32>
    %142 = arith.select %140, %138, %141 : vector<4x256xi1>, vector<4x256xf32>
    %143 = vector.extract_strided_slice %3 {offsets = [0, 29], sizes = [4, 1], strides = [1, 1]} : vector<4x49xf32> to vector<4x1xf32>
    %144 = vector.broadcast %143 : vector<4x1xf32> to vector<4x256xf32>
    %145 = arith.mulf %142, %144 : vector<4x256xf32>
    %146 = arith.addf %135, %145 : vector<4x256xf32>
    %cst_31 = arith.constant 0.000000e+00 : f32
    %147 = vector.broadcast %cst_31 : f32 to vector<4x30xf32>
    %148 = vector.extract_strided_slice %1 {offsets = [0, 30], sizes = [4, 226], strides = [1, 1]} : vector<4x256xf32> to vector<4x226xf32>
    %149 = tpu.concatenate %148, %147 in 1 : vector<4x226xf32>, vector<4x30xf32> -> vector<4x256xf32>
    %cst_32 = arith.constant 0.000000e+00 : f32
    %150 = vector.shape_cast %91 : vector<1x256xi1> to vector<1x256xi1>
    %151 = vector.broadcast %150 : vector<1x256xi1> to vector<4x256xi1>
    %152 = vector.broadcast %cst_32 : f32 to vector<4x256xf32>
    %153 = arith.select %151, %149, %152 : vector<4x256xi1>, vector<4x256xf32>
    %154 = vector.extract_strided_slice %3 {offsets = [0, 36], sizes = [4, 1], strides = [1, 1]} : vector<4x49xf32> to vector<4x1xf32>
    %155 = vector.broadcast %154 : vector<4x1xf32> to vector<4x256xf32>
    %156 = arith.mulf %153, %155 : vector<4x256xf32>
    %157 = arith.addf %146, %156 : vector<4x256xf32>
    %cst_33 = arith.constant 0.000000e+00 : f32
    %158 = vector.broadcast %cst_33 : f32 to vector<4x46xf32>
    %159 = vector.extract_strided_slice %1 {offsets = [0, 46], sizes = [4, 210], strides = [1, 1]} : vector<4x256xf32> to vector<4x210xf32>
    %160 = tpu.concatenate %159, %158 in 1 : vector<4x210xf32>, vector<4x46xf32> -> vector<4x256xf32>
    %cst_34 = arith.constant 0.000000e+00 : f32
    %161 = vector.shape_cast %91 : vector<1x256xi1> to vector<1x256xi1>
    %162 = vector.broadcast %161 : vector<1x256xi1> to vector<4x256xi1>
    %163 = vector.broadcast %cst_34 : f32 to vector<4x256xf32>
    %164 = arith.select %162, %160, %163 : vector<4x256xi1>, vector<4x256xf32>
    %165 = vector.extract_strided_slice %3 {offsets = [0, 43], sizes = [4, 1], strides = [1, 1]} : vector<4x49xf32> to vector<4x1xf32>
    %166 = vector.broadcast %165 : vector<4x1xf32> to vector<4x256xf32>
    %167 = arith.mulf %164, %166 : vector<4x256xf32>
    %168 = arith.addf %157, %167 : vector<4x256xf32>
    %c1_i32 = arith.constant 1 : i32
    %169 = vector.broadcast %c1_i32 : i32 to vector<1x256xi32>
    %170 = arith.cmpi sge, %2, %169 : vector<1x256xi32>
    %c16_i32_35 = arith.constant 16 : i32
    %171 = vector.broadcast %c16_i32_35 : i32 to vector<1x256xi32>
    %172 = arith.cmpi slt, %2, %171 : vector<1x256xi32>
    %173 = arith.andi %170, %172 : vector<1x256xi1>
    %cst_36 = arith.constant 0.000000e+00 : f32
    %174 = vector.broadcast %cst_36 : f32 to vector<4x49xf32>
    %175 = vector.extract_strided_slice %1 {offsets = [0, 0], sizes = [4, 207], strides = [1, 1]} : vector<4x256xf32> to vector<4x207xf32>
    %176 = tpu.concatenate %174, %175 in 1 : vector<4x49xf32>, vector<4x207xf32> -> vector<4x256xf32>
    %cst_37 = arith.constant 0.000000e+00 : f32
    %177 = vector.shape_cast %173 : vector<1x256xi1> to vector<1x256xi1>
    %178 = vector.broadcast %177 : vector<1x256xi1> to vector<4x256xi1>
    %179 = vector.broadcast %cst_37 : f32 to vector<4x256xf32>
    %180 = arith.select %178, %176, %179 : vector<4x256xi1>, vector<4x256xf32>
    %181 = vector.extract_strided_slice %3 {offsets = [0, 2], sizes = [4, 1], strides = [1, 1]} : vector<4x49xf32> to vector<4x1xf32>
    %182 = vector.broadcast %181 : vector<4x1xf32> to vector<4x256xf32>
    %183 = arith.mulf %180, %182 : vector<4x256xf32>
    %184 = arith.addf %168, %183 : vector<4x256xf32>
    %cst_38 = arith.constant 0.000000e+00 : f32
    %185 = vector.broadcast %cst_38 : f32 to vector<4x33xf32>
    %186 = vector.extract_strided_slice %1 {offsets = [0, 0], sizes = [4, 223], strides = [1, 1]} : vector<4x256xf32> to vector<4x223xf32>
    %187 = tpu.concatenate %185, %186 in 1 : vector<4x33xf32>, vector<4x223xf32> -> vector<4x256xf32>
    %cst_39 = arith.constant 0.000000e+00 : f32
    %188 = vector.shape_cast %173 : vector<1x256xi1> to vector<1x256xi1>
    %189 = vector.broadcast %188 : vector<1x256xi1> to vector<4x256xi1>
    %190 = vector.broadcast %cst_39 : f32 to vector<4x256xf32>
    %191 = arith.select %189, %187, %190 : vector<4x256xi1>, vector<4x256xf32>
    %192 = vector.extract_strided_slice %3 {offsets = [0, 9], sizes = [4, 1], strides = [1, 1]} : vector<4x49xf32> to vector<4x1xf32>
    %193 = vector.broadcast %192 : vector<4x1xf32> to vector<4x256xf32>
    %194 = arith.mulf %191, %193 : vector<4x256xf32>
    %195 = arith.addf %184, %194 : vector<4x256xf32>
    %cst_40 = arith.constant 0.000000e+00 : f32
    %196 = vector.broadcast %cst_40 : f32 to vector<4x17xf32>
    %197 = vector.extract_strided_slice %1 {offsets = [0, 0], sizes = [4, 239], strides = [1, 1]} : vector<4x256xf32> to vector<4x239xf32>
    %198 = tpu.concatenate %196, %197 in 1 : vector<4x17xf32>, vector<4x239xf32> -> vector<4x256xf32>
    %cst_41 = arith.constant 0.000000e+00 : f32
    %199 = vector.shape_cast %173 : vector<1x256xi1> to vector<1x256xi1>
    %200 = vector.broadcast %199 : vector<1x256xi1> to vector<4x256xi1>
    %201 = vector.broadcast %cst_41 : f32 to vector<4x256xf32>
    %202 = arith.select %200, %198, %201 : vector<4x256xi1>, vector<4x256xf32>
    %203 = vector.extract_strided_slice %3 {offsets = [0, 16], sizes = [4, 1], strides = [1, 1]} : vector<4x49xf32> to vector<4x1xf32>
    %204 = vector.broadcast %203 : vector<4x1xf32> to vector<4x256xf32>
    %205 = arith.mulf %202, %204 : vector<4x256xf32>
    %206 = arith.addf %195, %205 : vector<4x256xf32>
    %cst_42 = arith.constant 0.000000e+00 : f32
    %207 = vector.broadcast %cst_42 : f32 to vector<4x1xf32>
    %208 = vector.extract_strided_slice %1 {offsets = [0, 0], sizes = [4, 255], strides = [1, 1]} : vector<4x256xf32> to vector<4x255xf32>
    %209 = tpu.concatenate %207, %208 in 1 : vector<4x1xf32>, vector<4x255xf32> -> vector<4x256xf32>
    %cst_43 = arith.constant 0.000000e+00 : f32
    %210 = vector.shape_cast %173 : vector<1x256xi1> to vector<1x256xi1>
    %211 = vector.broadcast %210 : vector<1x256xi1> to vector<4x256xi1>
    %212 = vector.broadcast %cst_43 : f32 to vector<4x256xf32>
    %213 = arith.select %211, %209, %212 : vector<4x256xi1>, vector<4x256xf32>
    %214 = vector.extract_strided_slice %3 {offsets = [0, 23], sizes = [4, 1], strides = [1, 1]} : vector<4x49xf32> to vector<4x1xf32>
    %215 = vector.broadcast %214 : vector<4x1xf32> to vector<4x256xf32>
    %216 = arith.mulf %213, %215 : vector<4x256xf32>
    %217 = arith.addf %206, %216 : vector<4x256xf32>
    %cst_44 = arith.constant 0.000000e+00 : f32
    %218 = vector.broadcast %cst_44 : f32 to vector<4x15xf32>
    %219 = vector.extract_strided_slice %1 {offsets = [0, 15], sizes = [4, 241], strides = [1, 1]} : vector<4x256xf32> to vector<4x241xf32>
    %220 = tpu.concatenate %219, %218 in 1 : vector<4x241xf32>, vector<4x15xf32> -> vector<4x256xf32>
    %cst_45 = arith.constant 0.000000e+00 : f32
    %221 = vector.shape_cast %173 : vector<1x256xi1> to vector<1x256xi1>
    %222 = vector.broadcast %221 : vector<1x256xi1> to vector<4x256xi1>
    %223 = vector.broadcast %cst_45 : f32 to vector<4x256xf32>
    %224 = arith.select %222, %220, %223 : vector<4x256xi1>, vector<4x256xf32>
    %225 = vector.extract_strided_slice %3 {offsets = [0, 30], sizes = [4, 1], strides = [1, 1]} : vector<4x49xf32> to vector<4x1xf32>
    %226 = vector.broadcast %225 : vector<4x1xf32> to vector<4x256xf32>
    %227 = arith.mulf %224, %226 : vector<4x256xf32>
    %228 = arith.addf %217, %227 : vector<4x256xf32>
    %cst_46 = arith.constant 0.000000e+00 : f32
    %229 = vector.broadcast %cst_46 : f32 to vector<4x31xf32>
    %230 = vector.extract_strided_slice %1 {offsets = [0, 31], sizes = [4, 225], strides = [1, 1]} : vector<4x256xf32> to vector<4x225xf32>
    %231 = tpu.concatenate %230, %229 in 1 : vector<4x225xf32>, vector<4x31xf32> -> vector<4x256xf32>
    %cst_47 = arith.constant 0.000000e+00 : f32
    %232 = vector.shape_cast %173 : vector<1x256xi1> to vector<1x256xi1>
    %233 = vector.broadcast %232 : vector<1x256xi1> to vector<4x256xi1>
    %234 = vector.broadcast %cst_47 : f32 to vector<4x256xf32>
    %235 = arith.select %233, %231, %234 : vector<4x256xi1>, vector<4x256xf32>
    %236 = vector.extract_strided_slice %3 {offsets = [0, 37], sizes = [4, 1], strides = [1, 1]} : vector<4x49xf32> to vector<4x1xf32>
    %237 = vector.broadcast %236 : vector<4x1xf32> to vector<4x256xf32>
    %238 = arith.mulf %235, %237 : vector<4x256xf32>
    %239 = arith.addf %228, %238 : vector<4x256xf32>
    %cst_48 = arith.constant 0.000000e+00 : f32
    %240 = vector.broadcast %cst_48 : f32 to vector<4x47xf32>
    %241 = vector.extract_strided_slice %1 {offsets = [0, 47], sizes = [4, 209], strides = [1, 1]} : vector<4x256xf32> to vector<4x209xf32>
    %242 = tpu.concatenate %241, %240 in 1 : vector<4x209xf32>, vector<4x47xf32> -> vector<4x256xf32>
    %cst_49 = arith.constant 0.000000e+00 : f32
    %243 = vector.shape_cast %173 : vector<1x256xi1> to vector<1x256xi1>
    %244 = vector.broadcast %243 : vector<1x256xi1> to vector<4x256xi1>
    %245 = vector.broadcast %cst_49 : f32 to vector<4x256xf32>
    %246 = arith.select %244, %242, %245 : vector<4x256xi1>, vector<4x256xf32>
    %247 = vector.extract_strided_slice %3 {offsets = [0, 44], sizes = [4, 1], strides = [1, 1]} : vector<4x49xf32> to vector<4x1xf32>
    %248 = vector.broadcast %247 : vector<4x1xf32> to vector<4x256xf32>
    %249 = arith.mulf %246, %248 : vector<4x256xf32>
    %250 = arith.addf %239, %249 : vector<4x256xf32>
    %cst_50 = arith.constant 0.000000e+00 : f32
    %251 = vector.broadcast %cst_50 : f32 to vector<4x48xf32>
    %252 = vector.extract_strided_slice %1 {offsets = [0, 0], sizes = [4, 208], strides = [1, 1]} : vector<4x256xf32> to vector<4x208xf32>
    %253 = tpu.concatenate %251, %252 in 1 : vector<4x48xf32>, vector<4x208xf32> -> vector<4x256xf32>
    %254 = vector.extract_strided_slice %3 {offsets = [0, 3], sizes = [4, 1], strides = [1, 1]} : vector<4x49xf32> to vector<4x1xf32>
    %255 = vector.broadcast %254 : vector<4x1xf32> to vector<4x256xf32>
    %256 = arith.mulf %253, %255 : vector<4x256xf32>
    %257 = arith.addf %250, %256 : vector<4x256xf32>
    %cst_51 = arith.constant 0.000000e+00 : f32
    %258 = vector.broadcast %cst_51 : f32 to vector<4x32xf32>
    %259 = vector.extract_strided_slice %1 {offsets = [0, 0], sizes = [4, 224], strides = [1, 1]} : vector<4x256xf32> to vector<4x224xf32>
    %260 = tpu.concatenate %258, %259 in 1 : vector<4x32xf32>, vector<4x224xf32> -> vector<4x256xf32>
    %261 = vector.extract_strided_slice %3 {offsets = [0, 10], sizes = [4, 1], strides = [1, 1]} : vector<4x49xf32> to vector<4x1xf32>
    %262 = vector.broadcast %261 : vector<4x1xf32> to vector<4x256xf32>
    %263 = arith.mulf %260, %262 : vector<4x256xf32>
    %264 = arith.addf %257, %263 : vector<4x256xf32>
    %cst_52 = arith.constant 0.000000e+00 : f32
    %265 = vector.broadcast %cst_52 : f32 to vector<4x16xf32>
    %266 = vector.extract_strided_slice %1 {offsets = [0, 0], sizes = [4, 240], strides = [1, 1]} : vector<4x256xf32> to vector<4x240xf32>
    %267 = tpu.concatenate %265, %266 in 1 : vector<4x16xf32>, vector<4x240xf32> -> vector<4x256xf32>
    %268 = vector.extract_strided_slice %3 {offsets = [0, 17], sizes = [4, 1], strides = [1, 1]} : vector<4x49xf32> to vector<4x1xf32>
    %269 = vector.broadcast %268 : vector<4x1xf32> to vector<4x256xf32>
    %270 = arith.mulf %267, %269 : vector<4x256xf32>
    %271 = arith.addf %264, %270 : vector<4x256xf32>
    %272 = vector.extract_strided_slice %3 {offsets = [0, 24], sizes = [4, 1], strides = [1, 1]} : vector<4x49xf32> to vector<4x1xf32>
    %273 = vector.broadcast %272 : vector<4x1xf32> to vector<4x256xf32>
    %274 = arith.mulf %1, %273 : vector<4x256xf32>
    %275 = arith.addf %271, %274 : vector<4x256xf32>
    %cst_53 = arith.constant 0.000000e+00 : f32
    %276 = vector.broadcast %cst_53 : f32 to vector<4x16xf32>
    %277 = vector.extract_strided_slice %1 {offsets = [0, 16], sizes = [4, 240], strides = [1, 1]} : vector<4x256xf32> to vector<4x240xf32>
    %278 = tpu.concatenate %277, %276 in 1 : vector<4x240xf32>, vector<4x16xf32> -> vector<4x256xf32>
    %279 = vector.extract_strided_slice %3 {offsets = [0, 31], sizes = [4, 1], strides = [1, 1]} : vector<4x49xf32> to vector<4x1xf32>
    %280 = vector.broadcast %279 : vector<4x1xf32> to vector<4x256xf32>
    %281 = arith.mulf %278, %280 : vector<4x256xf32>
    %282 = arith.addf %275, %281 : vector<4x256xf32>
    %cst_54 = arith.constant 0.000000e+00 : f32
    %283 = vector.broadcast %cst_54 : f32 to vector<4x32xf32>
    %284 = vector.extract_strided_slice %1 {offsets = [0, 32], sizes = [4, 224], strides = [1, 1]} : vector<4x256xf32> to vector<4x224xf32>
    %285 = tpu.concatenate %284, %283 in 1 : vector<4x224xf32>, vector<4x32xf32> -> vector<4x256xf32>
    %286 = vector.extract_strided_slice %3 {offsets = [0, 38], sizes = [4, 1], strides = [1, 1]} : vector<4x49xf32> to vector<4x1xf32>
    %287 = vector.broadcast %286 : vector<4x1xf32> to vector<4x256xf32>
    %288 = arith.mulf %285, %287 : vector<4x256xf32>
    %289 = arith.addf %282, %288 : vector<4x256xf32>
    %cst_55 = arith.constant 0.000000e+00 : f32
    %290 = vector.broadcast %cst_55 : f32 to vector<4x48xf32>
    %291 = vector.extract_strided_slice %1 {offsets = [0, 48], sizes = [4, 208], strides = [1, 1]} : vector<4x256xf32> to vector<4x208xf32>
    %292 = tpu.concatenate %291, %290 in 1 : vector<4x208xf32>, vector<4x48xf32> -> vector<4x256xf32>
    %293 = vector.extract_strided_slice %3 {offsets = [0, 45], sizes = [4, 1], strides = [1, 1]} : vector<4x49xf32> to vector<4x1xf32>
    %294 = vector.broadcast %293 : vector<4x1xf32> to vector<4x256xf32>
    %295 = arith.mulf %292, %294 : vector<4x256xf32>
    %296 = arith.addf %289, %295 : vector<4x256xf32>
    %c0_i32 = arith.constant 0 : i32
    %297 = vector.broadcast %c0_i32 : i32 to vector<1x256xi32>
    %298 = arith.cmpi sge, %2, %297 : vector<1x256xi32>
    %c15_i32 = arith.constant 15 : i32
    %299 = vector.broadcast %c15_i32 : i32 to vector<1x256xi32>
    %300 = arith.cmpi slt, %2, %299 : vector<1x256xi32>
    %301 = arith.andi %298, %300 : vector<1x256xi1>
    %cst_56 = arith.constant 0.000000e+00 : f32
    %302 = vector.broadcast %cst_56 : f32 to vector<4x47xf32>
    %303 = vector.extract_strided_slice %1 {offsets = [0, 0], sizes = [4, 209], strides = [1, 1]} : vector<4x256xf32> to vector<4x209xf32>
    %304 = tpu.concatenate %302, %303 in 1 : vector<4x47xf32>, vector<4x209xf32> -> vector<4x256xf32>
    %cst_57 = arith.constant 0.000000e+00 : f32
    %305 = vector.shape_cast %301 : vector<1x256xi1> to vector<1x256xi1>
    %306 = vector.broadcast %305 : vector<1x256xi1> to vector<4x256xi1>
    %307 = vector.broadcast %cst_57 : f32 to vector<4x256xf32>
    %308 = arith.select %306, %304, %307 : vector<4x256xi1>, vector<4x256xf32>
    %309 = vector.extract_strided_slice %3 {offsets = [0, 4], sizes = [4, 1], strides = [1, 1]} : vector<4x49xf32> to vector<4x1xf32>
    %310 = vector.broadcast %309 : vector<4x1xf32> to vector<4x256xf32>
    %311 = arith.mulf %308, %310 : vector<4x256xf32>
    %312 = arith.addf %296, %311 : vector<4x256xf32>
    %cst_58 = arith.constant 0.000000e+00 : f32
    %313 = vector.broadcast %cst_58 : f32 to vector<4x31xf32>
    %314 = vector.extract_strided_slice %1 {offsets = [0, 0], sizes = [4, 225], strides = [1, 1]} : vector<4x256xf32> to vector<4x225xf32>
    %315 = tpu.concatenate %313, %314 in 1 : vector<4x31xf32>, vector<4x225xf32> -> vector<4x256xf32>
    %cst_59 = arith.constant 0.000000e+00 : f32
    %316 = vector.shape_cast %301 : vector<1x256xi1> to vector<1x256xi1>
    %317 = vector.broadcast %316 : vector<1x256xi1> to vector<4x256xi1>
    %318 = vector.broadcast %cst_59 : f32 to vector<4x256xf32>
    %319 = arith.select %317, %315, %318 : vector<4x256xi1>, vector<4x256xf32>
    %320 = vector.extract_strided_slice %3 {offsets = [0, 11], sizes = [4, 1], strides = [1, 1]} : vector<4x49xf32> to vector<4x1xf32>
    %321 = vector.broadcast %320 : vector<4x1xf32> to vector<4x256xf32>
    %322 = arith.mulf %319, %321 : vector<4x256xf32>
    %323 = arith.addf %312, %322 : vector<4x256xf32>
    %cst_60 = arith.constant 0.000000e+00 : f32
    %324 = vector.broadcast %cst_60 : f32 to vector<4x15xf32>
    %325 = vector.extract_strided_slice %1 {offsets = [0, 0], sizes = [4, 241], strides = [1, 1]} : vector<4x256xf32> to vector<4x241xf32>
    %326 = tpu.concatenate %324, %325 in 1 : vector<4x15xf32>, vector<4x241xf32> -> vector<4x256xf32>
    %cst_61 = arith.constant 0.000000e+00 : f32
    %327 = vector.shape_cast %301 : vector<1x256xi1> to vector<1x256xi1>
    %328 = vector.broadcast %327 : vector<1x256xi1> to vector<4x256xi1>
    %329 = vector.broadcast %cst_61 : f32 to vector<4x256xf32>
    %330 = arith.select %328, %326, %329 : vector<4x256xi1>, vector<4x256xf32>
    %331 = vector.extract_strided_slice %3 {offsets = [0, 18], sizes = [4, 1], strides = [1, 1]} : vector<4x49xf32> to vector<4x1xf32>
    %332 = vector.broadcast %331 : vector<4x1xf32> to vector<4x256xf32>
    %333 = arith.mulf %330, %332 : vector<4x256xf32>
    %334 = arith.addf %323, %333 : vector<4x256xf32>
    %cst_62 = arith.constant 0.000000e+00 : f32
    %335 = vector.broadcast %cst_62 : f32 to vector<4x1xf32>
    %336 = vector.extract_strided_slice %1 {offsets = [0, 1], sizes = [4, 255], strides = [1, 1]} : vector<4x256xf32> to vector<4x255xf32>
    %337 = tpu.concatenate %336, %335 in 1 : vector<4x255xf32>, vector<4x1xf32> -> vector<4x256xf32>
    %cst_63 = arith.constant 0.000000e+00 : f32
    %338 = vector.shape_cast %301 : vector<1x256xi1> to vector<1x256xi1>
    %339 = vector.broadcast %338 : vector<1x256xi1> to vector<4x256xi1>
    %340 = vector.broadcast %cst_63 : f32 to vector<4x256xf32>
    %341 = arith.select %339, %337, %340 : vector<4x256xi1>, vector<4x256xf32>
    %342 = vector.extract_strided_slice %3 {offsets = [0, 25], sizes = [4, 1], strides = [1, 1]} : vector<4x49xf32> to vector<4x1xf32>
    %343 = vector.broadcast %342 : vector<4x1xf32> to vector<4x256xf32>
    %344 = arith.mulf %341, %343 : vector<4x256xf32>
    %345 = arith.addf %334, %344 : vector<4x256xf32>
    %cst_64 = arith.constant 0.000000e+00 : f32
    %346 = vector.broadcast %cst_64 : f32 to vector<4x17xf32>
    %347 = vector.extract_strided_slice %1 {offsets = [0, 17], sizes = [4, 239], strides = [1, 1]} : vector<4x256xf32> to vector<4x239xf32>
    %348 = tpu.concatenate %347, %346 in 1 : vector<4x239xf32>, vector<4x17xf32> -> vector<4x256xf32>
    %cst_65 = arith.constant 0.000000e+00 : f32
    %349 = vector.shape_cast %301 : vector<1x256xi1> to vector<1x256xi1>
    %350 = vector.broadcast %349 : vector<1x256xi1> to vector<4x256xi1>
    %351 = vector.broadcast %cst_65 : f32 to vector<4x256xf32>
    %352 = arith.select %350, %348, %351 : vector<4x256xi1>, vector<4x256xf32>
    %353 = vector.extract_strided_slice %3 {offsets = [0, 32], sizes = [4, 1], strides = [1, 1]} : vector<4x49xf32> to vector<4x1xf32>
    %354 = vector.broadcast %353 : vector<4x1xf32> to vector<4x256xf32>
    %355 = arith.mulf %352, %354 : vector<4x256xf32>
    %356 = arith.addf %345, %355 : vector<4x256xf32>
    %cst_66 = arith.constant 0.000000e+00 : f32
    %357 = vector.broadcast %cst_66 : f32 to vector<4x33xf32>
    %358 = vector.extract_strided_slice %1 {offsets = [0, 33], sizes = [4, 223], strides = [1, 1]} : vector<4x256xf32> to vector<4x223xf32>
    %359 = tpu.concatenate %358, %357 in 1 : vector<4x223xf32>, vector<4x33xf32> -> vector<4x256xf32>
    %cst_67 = arith.constant 0.000000e+00 : f32
    %360 = vector.shape_cast %301 : vector<1x256xi1> to vector<1x256xi1>
    %361 = vector.broadcast %360 : vector<1x256xi1> to vector<4x256xi1>
    %362 = vector.broadcast %cst_67 : f32 to vector<4x256xf32>
    %363 = arith.select %361, %359, %362 : vector<4x256xi1>, vector<4x256xf32>
    %364 = vector.extract_strided_slice %3 {offsets = [0, 39], sizes = [4, 1], strides = [1, 1]} : vector<4x49xf32> to vector<4x1xf32>
    %365 = vector.broadcast %364 : vector<4x1xf32> to vector<4x256xf32>
    %366 = arith.mulf %363, %365 : vector<4x256xf32>
    %367 = arith.addf %356, %366 : vector<4x256xf32>
    %cst_68 = arith.constant 0.000000e+00 : f32
    %368 = vector.broadcast %cst_68 : f32 to vector<4x49xf32>
    %369 = vector.extract_strided_slice %1 {offsets = [0, 49], sizes = [4, 207], strides = [1, 1]} : vector<4x256xf32> to vector<4x207xf32>
    %370 = tpu.concatenate %369, %368 in 1 : vector<4x207xf32>, vector<4x49xf32> -> vector<4x256xf32>
    %cst_69 = arith.constant 0.000000e+00 : f32
    %371 = vector.shape_cast %301 : vector<1x256xi1> to vector<1x256xi1>
    %372 = vector.broadcast %371 : vector<1x256xi1> to vector<4x256xi1>
    %373 = vector.broadcast %cst_69 : f32 to vector<4x256xf32>
    %374 = arith.select %372, %370, %373 : vector<4x256xi1>, vector<4x256xf32>
    %375 = vector.extract_strided_slice %3 {offsets = [0, 46], sizes = [4, 1], strides = [1, 1]} : vector<4x49xf32> to vector<4x1xf32>
    %376 = vector.broadcast %375 : vector<4x1xf32> to vector<4x256xf32>
    %377 = arith.mulf %374, %376 : vector<4x256xf32>
    %378 = arith.addf %367, %377 : vector<4x256xf32>
    %c0_i32_70 = arith.constant 0 : i32
    %379 = vector.broadcast %c0_i32_70 : i32 to vector<1x256xi32>
    %380 = arith.cmpi sge, %2, %379 : vector<1x256xi32>
    %c14_i32 = arith.constant 14 : i32
    %381 = vector.broadcast %c14_i32 : i32 to vector<1x256xi32>
    %382 = arith.cmpi slt, %2, %381 : vector<1x256xi32>
    %383 = arith.andi %380, %382 : vector<1x256xi1>
    %cst_71 = arith.constant 0.000000e+00 : f32
    %384 = vector.broadcast %cst_71 : f32 to vector<4x46xf32>
    %385 = vector.extract_strided_slice %1 {offsets = [0, 0], sizes = [4, 210], strides = [1, 1]} : vector<4x256xf32> to vector<4x210xf32>
    %386 = tpu.concatenate %384, %385 in 1 : vector<4x46xf32>, vector<4x210xf32> -> vector<4x256xf32>
    %cst_72 = arith.constant 0.000000e+00 : f32
    %387 = vector.shape_cast %383 : vector<1x256xi1> to vector<1x256xi1>
    %388 = vector.broadcast %387 : vector<1x256xi1> to vector<4x256xi1>
    %389 = vector.broadcast %cst_72 : f32 to vector<4x256xf32>
    %390 = arith.select %388, %386, %389 : vector<4x256xi1>, vector<4x256xf32>
    %391 = vector.extract_strided_slice %3 {offsets = [0, 5], sizes = [4, 1], strides = [1, 1]} : vector<4x49xf32> to vector<4x1xf32>
    %392 = vector.broadcast %391 : vector<4x1xf32> to vector<4x256xf32>
    %393 = arith.mulf %390, %392 : vector<4x256xf32>
    %394 = arith.addf %378, %393 : vector<4x256xf32>
    %cst_73 = arith.constant 0.000000e+00 : f32
    %395 = vector.broadcast %cst_73 : f32 to vector<4x30xf32>
    %396 = vector.extract_strided_slice %1 {offsets = [0, 0], sizes = [4, 226], strides = [1, 1]} : vector<4x256xf32> to vector<4x226xf32>
    %397 = tpu.concatenate %395, %396 in 1 : vector<4x30xf32>, vector<4x226xf32> -> vector<4x256xf32>
    %cst_74 = arith.constant 0.000000e+00 : f32
    %398 = vector.shape_cast %383 : vector<1x256xi1> to vector<1x256xi1>
    %399 = vector.broadcast %398 : vector<1x256xi1> to vector<4x256xi1>
    %400 = vector.broadcast %cst_74 : f32 to vector<4x256xf32>
    %401 = arith.select %399, %397, %400 : vector<4x256xi1>, vector<4x256xf32>
    %402 = vector.extract_strided_slice %3 {offsets = [0, 12], sizes = [4, 1], strides = [1, 1]} : vector<4x49xf32> to vector<4x1xf32>
    %403 = vector.broadcast %402 : vector<4x1xf32> to vector<4x256xf32>
    %404 = arith.mulf %401, %403 : vector<4x256xf32>
    %405 = arith.addf %394, %404 : vector<4x256xf32>
    %cst_75 = arith.constant 0.000000e+00 : f32
    %406 = vector.broadcast %cst_75 : f32 to vector<4x14xf32>
    %407 = vector.extract_strided_slice %1 {offsets = [0, 0], sizes = [4, 242], strides = [1, 1]} : vector<4x256xf32> to vector<4x242xf32>
    %408 = tpu.concatenate %406, %407 in 1 : vector<4x14xf32>, vector<4x242xf32> -> vector<4x256xf32>
    %cst_76 = arith.constant 0.000000e+00 : f32
    %409 = vector.shape_cast %383 : vector<1x256xi1> to vector<1x256xi1>
    %410 = vector.broadcast %409 : vector<1x256xi1> to vector<4x256xi1>
    %411 = vector.broadcast %cst_76 : f32 to vector<4x256xf32>
    %412 = arith.select %410, %408, %411 : vector<4x256xi1>, vector<4x256xf32>
    %413 = vector.extract_strided_slice %3 {offsets = [0, 19], sizes = [4, 1], strides = [1, 1]} : vector<4x49xf32> to vector<4x1xf32>
    %414 = vector.broadcast %413 : vector<4x1xf32> to vector<4x256xf32>
    %415 = arith.mulf %412, %414 : vector<4x256xf32>
    %416 = arith.addf %405, %415 : vector<4x256xf32>
    %cst_77 = arith.constant 0.000000e+00 : f32
    %417 = vector.broadcast %cst_77 : f32 to vector<4x2xf32>
    %418 = vector.extract_strided_slice %1 {offsets = [0, 2], sizes = [4, 254], strides = [1, 1]} : vector<4x256xf32> to vector<4x254xf32>
    %419 = tpu.concatenate %418, %417 in 1 : vector<4x254xf32>, vector<4x2xf32> -> vector<4x256xf32>
    %cst_78 = arith.constant 0.000000e+00 : f32
    %420 = vector.shape_cast %383 : vector<1x256xi1> to vector<1x256xi1>
    %421 = vector.broadcast %420 : vector<1x256xi1> to vector<4x256xi1>
    %422 = vector.broadcast %cst_78 : f32 to vector<4x256xf32>
    %423 = arith.select %421, %419, %422 : vector<4x256xi1>, vector<4x256xf32>
    %424 = vector.extract_strided_slice %3 {offsets = [0, 26], sizes = [4, 1], strides = [1, 1]} : vector<4x49xf32> to vector<4x1xf32>
    %425 = vector.broadcast %424 : vector<4x1xf32> to vector<4x256xf32>
    %426 = arith.mulf %423, %425 : vector<4x256xf32>
    %427 = arith.addf %416, %426 : vector<4x256xf32>
    %cst_79 = arith.constant 0.000000e+00 : f32
    %428 = vector.broadcast %cst_79 : f32 to vector<4x18xf32>
    %429 = vector.extract_strided_slice %1 {offsets = [0, 18], sizes = [4, 238], strides = [1, 1]} : vector<4x256xf32> to vector<4x238xf32>
    %430 = tpu.concatenate %429, %428 in 1 : vector<4x238xf32>, vector<4x18xf32> -> vector<4x256xf32>
    %cst_80 = arith.constant 0.000000e+00 : f32
    %431 = vector.shape_cast %383 : vector<1x256xi1> to vector<1x256xi1>
    %432 = vector.broadcast %431 : vector<1x256xi1> to vector<4x256xi1>
    %433 = vector.broadcast %cst_80 : f32 to vector<4x256xf32>
    %434 = arith.select %432, %430, %433 : vector<4x256xi1>, vector<4x256xf32>
    %435 = vector.extract_strided_slice %3 {offsets = [0, 33], sizes = [4, 1], strides = [1, 1]} : vector<4x49xf32> to vector<4x1xf32>
    %436 = vector.broadcast %435 : vector<4x1xf32> to vector<4x256xf32>
    %437 = arith.mulf %434, %436 : vector<4x256xf32>
    %438 = arith.addf %427, %437 : vector<4x256xf32>
    %cst_81 = arith.constant 0.000000e+00 : f32
    %439 = vector.broadcast %cst_81 : f32 to vector<4x34xf32>
    %440 = vector.extract_strided_slice %1 {offsets = [0, 34], sizes = [4, 222], strides = [1, 1]} : vector<4x256xf32> to vector<4x222xf32>
    %441 = tpu.concatenate %440, %439 in 1 : vector<4x222xf32>, vector<4x34xf32> -> vector<4x256xf32>
    %cst_82 = arith.constant 0.000000e+00 : f32
    %442 = vector.shape_cast %383 : vector<1x256xi1> to vector<1x256xi1>
    %443 = vector.broadcast %442 : vector<1x256xi1> to vector<4x256xi1>
    %444 = vector.broadcast %cst_82 : f32 to vector<4x256xf32>
    %445 = arith.select %443, %441, %444 : vector<4x256xi1>, vector<4x256xf32>
    %446 = vector.extract_strided_slice %3 {offsets = [0, 40], sizes = [4, 1], strides = [1, 1]} : vector<4x49xf32> to vector<4x1xf32>
    %447 = vector.broadcast %446 : vector<4x1xf32> to vector<4x256xf32>
    %448 = arith.mulf %445, %447 : vector<4x256xf32>
    %449 = arith.addf %438, %448 : vector<4x256xf32>
    %cst_83 = arith.constant 0.000000e+00 : f32
    %450 = vector.broadcast %cst_83 : f32 to vector<4x50xf32>
    %451 = vector.extract_strided_slice %1 {offsets = [0, 50], sizes = [4, 206], strides = [1, 1]} : vector<4x256xf32> to vector<4x206xf32>
    %452 = tpu.concatenate %451, %450 in 1 : vector<4x206xf32>, vector<4x50xf32> -> vector<4x256xf32>
    %cst_84 = arith.constant 0.000000e+00 : f32
    %453 = vector.shape_cast %383 : vector<1x256xi1> to vector<1x256xi1>
    %454 = vector.broadcast %453 : vector<1x256xi1> to vector<4x256xi1>
    %455 = vector.broadcast %cst_84 : f32 to vector<4x256xf32>
    %456 = arith.select %454, %452, %455 : vector<4x256xi1>, vector<4x256xf32>
    %457 = vector.extract_strided_slice %3 {offsets = [0, 47], sizes = [4, 1], strides = [1, 1]} : vector<4x49xf32> to vector<4x1xf32>
    %458 = vector.broadcast %457 : vector<4x1xf32> to vector<4x256xf32>
    %459 = arith.mulf %456, %458 : vector<4x256xf32>
    %460 = arith.addf %449, %459 : vector<4x256xf32>
    %c0_i32_85 = arith.constant 0 : i32
    %461 = vector.broadcast %c0_i32_85 : i32 to vector<1x256xi32>
    %462 = arith.cmpi sge, %2, %461 : vector<1x256xi32>
    %c13_i32 = arith.constant 13 : i32
    %463 = vector.broadcast %c13_i32 : i32 to vector<1x256xi32>
    %464 = arith.cmpi slt, %2, %463 : vector<1x256xi32>
    %465 = arith.andi %462, %464 : vector<1x256xi1>
    %cst_86 = arith.constant 0.000000e+00 : f32
    %466 = vector.broadcast %cst_86 : f32 to vector<4x45xf32>
    %467 = vector.extract_strided_slice %1 {offsets = [0, 0], sizes = [4, 211], strides = [1, 1]} : vector<4x256xf32> to vector<4x211xf32>
    %468 = tpu.concatenate %466, %467 in 1 : vector<4x45xf32>, vector<4x211xf32> -> vector<4x256xf32>
    %cst_87 = arith.constant 0.000000e+00 : f32
    %469 = vector.shape_cast %465 : vector<1x256xi1> to vector<1x256xi1>
    %470 = vector.broadcast %469 : vector<1x256xi1> to vector<4x256xi1>
    %471 = vector.broadcast %cst_87 : f32 to vector<4x256xf32>
    %472 = arith.select %470, %468, %471 : vector<4x256xi1>, vector<4x256xf32>
    %473 = vector.extract_strided_slice %3 {offsets = [0, 6], sizes = [4, 1], strides = [1, 1]} : vector<4x49xf32> to vector<4x1xf32>
    %474 = vector.broadcast %473 : vector<4x1xf32> to vector<4x256xf32>
    %475 = arith.mulf %472, %474 : vector<4x256xf32>
    %476 = arith.addf %460, %475 : vector<4x256xf32>
    %cst_88 = arith.constant 0.000000e+00 : f32
    %477 = vector.broadcast %cst_88 : f32 to vector<4x29xf32>
    %478 = vector.extract_strided_slice %1 {offsets = [0, 0], sizes = [4, 227], strides = [1, 1]} : vector<4x256xf32> to vector<4x227xf32>
    %479 = tpu.concatenate %477, %478 in 1 : vector<4x29xf32>, vector<4x227xf32> -> vector<4x256xf32>
    %cst_89 = arith.constant 0.000000e+00 : f32
    %480 = vector.shape_cast %465 : vector<1x256xi1> to vector<1x256xi1>
    %481 = vector.broadcast %480 : vector<1x256xi1> to vector<4x256xi1>
    %482 = vector.broadcast %cst_89 : f32 to vector<4x256xf32>
    %483 = arith.select %481, %479, %482 : vector<4x256xi1>, vector<4x256xf32>
    %484 = vector.extract_strided_slice %3 {offsets = [0, 13], sizes = [4, 1], strides = [1, 1]} : vector<4x49xf32> to vector<4x1xf32>
    %485 = vector.broadcast %484 : vector<4x1xf32> to vector<4x256xf32>
    %486 = arith.mulf %483, %485 : vector<4x256xf32>
    %487 = arith.addf %476, %486 : vector<4x256xf32>
    %cst_90 = arith.constant 0.000000e+00 : f32
    %488 = vector.broadcast %cst_90 : f32 to vector<4x13xf32>
    %489 = vector.extract_strided_slice %1 {offsets = [0, 0], sizes = [4, 243], strides = [1, 1]} : vector<4x256xf32> to vector<4x243xf32>
    %490 = tpu.concatenate %488, %489 in 1 : vector<4x13xf32>, vector<4x243xf32> -> vector<4x256xf32>
    %cst_91 = arith.constant 0.000000e+00 : f32
    %491 = vector.shape_cast %465 : vector<1x256xi1> to vector<1x256xi1>
    %492 = vector.broadcast %491 : vector<1x256xi1> to vector<4x256xi1>
    %493 = vector.broadcast %cst_91 : f32 to vector<4x256xf32>
    %494 = arith.select %492, %490, %493 : vector<4x256xi1>, vector<4x256xf32>
    %495 = vector.extract_strided_slice %3 {offsets = [0, 20], sizes = [4, 1], strides = [1, 1]} : vector<4x49xf32> to vector<4x1xf32>
    %496 = vector.broadcast %495 : vector<4x1xf32> to vector<4x256xf32>
    %497 = arith.mulf %494, %496 : vector<4x256xf32>
    %498 = arith.addf %487, %497 : vector<4x256xf32>
    %cst_92 = arith.constant 0.000000e+00 : f32
    %499 = vector.broadcast %cst_92 : f32 to vector<4x3xf32>
    %500 = vector.extract_strided_slice %1 {offsets = [0, 3], sizes = [4, 253], strides = [1, 1]} : vector<4x256xf32> to vector<4x253xf32>
    %501 = tpu.concatenate %500, %499 in 1 : vector<4x253xf32>, vector<4x3xf32> -> vector<4x256xf32>
    %cst_93 = arith.constant 0.000000e+00 : f32
    %502 = vector.shape_cast %465 : vector<1x256xi1> to vector<1x256xi1>
    %503 = vector.broadcast %502 : vector<1x256xi1> to vector<4x256xi1>
    %504 = vector.broadcast %cst_93 : f32 to vector<4x256xf32>
    %505 = arith.select %503, %501, %504 : vector<4x256xi1>, vector<4x256xf32>
    %506 = vector.extract_strided_slice %3 {offsets = [0, 27], sizes = [4, 1], strides = [1, 1]} : vector<4x49xf32> to vector<4x1xf32>
    %507 = vector.broadcast %506 : vector<4x1xf32> to vector<4x256xf32>
    %508 = arith.mulf %505, %507 : vector<4x256xf32>
    %509 = arith.addf %498, %508 : vector<4x256xf32>
    %cst_94 = arith.constant 0.000000e+00 : f32
    %510 = vector.broadcast %cst_94 : f32 to vector<4x19xf32>
    %511 = vector.extract_strided_slice %1 {offsets = [0, 19], sizes = [4, 237], strides = [1, 1]} : vector<4x256xf32> to vector<4x237xf32>
    %512 = tpu.concatenate %511, %510 in 1 : vector<4x237xf32>, vector<4x19xf32> -> vector<4x256xf32>
    %cst_95 = arith.constant 0.000000e+00 : f32
    %513 = vector.shape_cast %465 : vector<1x256xi1> to vector<1x256xi1>
    %514 = vector.broadcast %513 : vector<1x256xi1> to vector<4x256xi1>
    %515 = vector.broadcast %cst_95 : f32 to vector<4x256xf32>
    %516 = arith.select %514, %512, %515 : vector<4x256xi1>, vector<4x256xf32>
    %517 = vector.extract_strided_slice %3 {offsets = [0, 34], sizes = [4, 1], strides = [1, 1]} : vector<4x49xf32> to vector<4x1xf32>
    %518 = vector.broadcast %517 : vector<4x1xf32> to vector<4x256xf32>
    %519 = arith.mulf %516, %518 : vector<4x256xf32>
    %520 = arith.addf %509, %519 : vector<4x256xf32>
    %cst_96 = arith.constant 0.000000e+00 : f32
    %521 = vector.broadcast %cst_96 : f32 to vector<4x35xf32>
    %522 = vector.extract_strided_slice %1 {offsets = [0, 35], sizes = [4, 221], strides = [1, 1]} : vector<4x256xf32> to vector<4x221xf32>
    %523 = tpu.concatenate %522, %521 in 1 : vector<4x221xf32>, vector<4x35xf32> -> vector<4x256xf32>
    %cst_97 = arith.constant 0.000000e+00 : f32
    %524 = vector.shape_cast %465 : vector<1x256xi1> to vector<1x256xi1>
    %525 = vector.broadcast %524 : vector<1x256xi1> to vector<4x256xi1>
    %526 = vector.broadcast %cst_97 : f32 to vector<4x256xf32>
    %527 = arith.select %525, %523, %526 : vector<4x256xi1>, vector<4x256xf32>
    %528 = vector.extract_strided_slice %3 {offsets = [0, 41], sizes = [4, 1], strides = [1, 1]} : vector<4x49xf32> to vector<4x1xf32>
    %529 = vector.broadcast %528 : vector<4x1xf32> to vector<4x256xf32>
    %530 = arith.mulf %527, %529 : vector<4x256xf32>
    %531 = arith.addf %520, %530 : vector<4x256xf32>
    %cst_98 = arith.constant 0.000000e+00 : f32
    %532 = vector.broadcast %cst_98 : f32 to vector<4x51xf32>
    %533 = vector.extract_strided_slice %1 {offsets = [0, 51], sizes = [4, 205], strides = [1, 1]} : vector<4x256xf32> to vector<4x205xf32>
    %534 = tpu.concatenate %533, %532 in 1 : vector<4x205xf32>, vector<4x51xf32> -> vector<4x256xf32>
    %cst_99 = arith.constant 0.000000e+00 : f32
    %535 = vector.shape_cast %465 : vector<1x256xi1> to vector<1x256xi1>
    %536 = vector.broadcast %535 : vector<1x256xi1> to vector<4x256xi1>
    %537 = vector.broadcast %cst_99 : f32 to vector<4x256xf32>
    %538 = arith.select %536, %534, %537 : vector<4x256xi1>, vector<4x256xf32>
    %539 = vector.extract_strided_slice %3 {offsets = [0, 48], sizes = [4, 1], strides = [1, 1]} : vector<4x49xf32> to vector<4x1xf32>
    %540 = vector.broadcast %539 : vector<4x1xf32> to vector<4x256xf32>
    %541 = arith.mulf %538, %540 : vector<4x256xf32>
    %542 = arith.addf %531, %541 : vector<4x256xf32>
    %c0_100 = arith.constant 0 : index
    %c0_101 = arith.constant 0 : index
    %543 = vector.load %arg4[%c0_100, %c0_101] : memref<4x1xf32, #tpu.memory_space<vmem>>, vector<4x1xf32>
    %544 = vector.broadcast %543 : vector<4x1xf32> to vector<4x256xf32>
    %545 = arith.addf %542, %544 : vector<4x256xf32>
    %c0_102 = arith.constant 0 : index
    %c0_103 = arith.constant 0 : index
    %546 = vector.load %arg5[%c0_102, %c0_103] : memref<4x121xf32, #tpu.memory_space<vmem>>, vector<4x121xf32>
    %cst_104 = arith.constant 0.000000e+00 : f32
    %547 = vector.broadcast %cst_104 : f32 to vector<4x256xf32>
    %c15_i32_105 = arith.constant 15 : i32
    %548 = vector.broadcast %c15_i32_105 : i32 to vector<1x256xi32>
    %549 = arith.cmpi sge, %2, %548 : vector<1x256xi32>
    %c16_i32_106 = arith.constant 16 : i32
    %550 = vector.broadcast %c16_i32_106 : i32 to vector<1x256xi32>
    %551 = arith.cmpi slt, %2, %550 : vector<1x256xi32>
    %552 = arith.andi %549, %551 : vector<1x256xi1>
    %cst_107 = arith.constant 0.000000e+00 : f32
    %553 = vector.broadcast %cst_107 : f32 to vector<4x255xf32>
    %554 = vector.extract_strided_slice %545 {offsets = [0, 0], sizes = [4, 1], strides = [1, 1]} : vector<4x256xf32> to vector<4x1xf32>
    %555 = tpu.concatenate %553, %554 in 1 : vector<4x255xf32>, vector<4x1xf32> -> vector<4x256xf32>
    %cst_108 = arith.constant 0.000000e+00 : f32
    %556 = vector.shape_cast %552 : vector<1x256xi1> to vector<1x256xi1>
    %557 = vector.broadcast %556 : vector<1x256xi1> to vector<4x256xi1>
    %558 = vector.broadcast %cst_108 : f32 to vector<4x256xf32>
    %559 = arith.select %557, %555, %558 : vector<4x256xi1>, vector<4x256xf32>
    %560 = vector.extract_strided_slice %546 {offsets = [0, 24], sizes = [4, 1], strides = [1, 1]} : vector<4x121xf32> to vector<4x1xf32>
    %561 = vector.broadcast %560 : vector<4x1xf32> to vector<4x256xf32>
    %562 = arith.mulf %559, %561 : vector<4x256xf32>
    %563 = arith.addf %547, %562 : vector<4x256xf32>
    %cst_109 = arith.constant 0.000000e+00 : f32
    %564 = vector.broadcast %cst_109 : f32 to vector<4x175xf32>
    %565 = vector.extract_strided_slice %545 {offsets = [0, 0], sizes = [4, 81], strides = [1, 1]} : vector<4x256xf32> to vector<4x81xf32>
    %566 = tpu.concatenate %564, %565 in 1 : vector<4x175xf32>, vector<4x81xf32> -> vector<4x256xf32>
    %cst_110 = arith.constant 0.000000e+00 : f32
    %567 = vector.shape_cast %552 : vector<1x256xi1> to vector<1x256xi1>
    %568 = vector.broadcast %567 : vector<1x256xi1> to vector<4x256xi1>
    %569 = vector.broadcast %cst_110 : f32 to vector<4x256xf32>
    %570 = arith.select %568, %566, %569 : vector<4x256xi1>, vector<4x256xf32>
    %571 = vector.extract_strided_slice %546 {offsets = [0, 35], sizes = [4, 1], strides = [1, 1]} : vector<4x121xf32> to vector<4x1xf32>
    %572 = vector.broadcast %571 : vector<4x1xf32> to vector<4x256xf32>
    %573 = arith.mulf %570, %572 : vector<4x256xf32>
    %574 = arith.addf %563, %573 : vector<4x256xf32>
    %cst_111 = arith.constant 0.000000e+00 : f32
    %575 = vector.broadcast %cst_111 : f32 to vector<4x95xf32>
    %576 = vector.extract_strided_slice %545 {offsets = [0, 0], sizes = [4, 161], strides = [1, 1]} : vector<4x256xf32> to vector<4x161xf32>
    %577 = tpu.concatenate %575, %576 in 1 : vector<4x95xf32>, vector<4x161xf32> -> vector<4x256xf32>
    %cst_112 = arith.constant 0.000000e+00 : f32
    %578 = vector.shape_cast %552 : vector<1x256xi1> to vector<1x256xi1>
    %579 = vector.broadcast %578 : vector<1x256xi1> to vector<4x256xi1>
    %580 = vector.broadcast %cst_112 : f32 to vector<4x256xf32>
    %581 = arith.select %579, %577, %580 : vector<4x256xi1>, vector<4x256xf32>
    %582 = vector.extract_strided_slice %546 {offsets = [0, 46], sizes = [4, 1], strides = [1, 1]} : vector<4x121xf32> to vector<4x1xf32>
    %583 = vector.broadcast %582 : vector<4x1xf32> to vector<4x256xf32>
    %584 = arith.mulf %581, %583 : vector<4x256xf32>
    %585 = arith.addf %574, %584 : vector<4x256xf32>
    %cst_113 = arith.constant 0.000000e+00 : f32
    %586 = vector.broadcast %cst_113 : f32 to vector<4x15xf32>
    %587 = vector.extract_strided_slice %545 {offsets = [0, 0], sizes = [4, 241], strides = [1, 1]} : vector<4x256xf32> to vector<4x241xf32>
    %588 = tpu.concatenate %586, %587 in 1 : vector<4x15xf32>, vector<4x241xf32> -> vector<4x256xf32>
    %cst_114 = arith.constant 0.000000e+00 : f32
    %589 = vector.shape_cast %552 : vector<1x256xi1> to vector<1x256xi1>
    %590 = vector.broadcast %589 : vector<1x256xi1> to vector<4x256xi1>
    %591 = vector.broadcast %cst_114 : f32 to vector<4x256xf32>
    %592 = arith.select %590, %588, %591 : vector<4x256xi1>, vector<4x256xf32>
    %593 = vector.extract_strided_slice %546 {offsets = [0, 57], sizes = [4, 1], strides = [1, 1]} : vector<4x121xf32> to vector<4x1xf32>
    %594 = vector.broadcast %593 : vector<4x1xf32> to vector<4x256xf32>
    %595 = arith.mulf %592, %594 : vector<4x256xf32>
    %596 = arith.addf %585, %595 : vector<4x256xf32>
    %cst_115 = arith.constant 0.000000e+00 : f32
    %597 = vector.broadcast %cst_115 : f32 to vector<4x65xf32>
    %598 = vector.extract_strided_slice %545 {offsets = [0, 65], sizes = [4, 191], strides = [1, 1]} : vector<4x256xf32> to vector<4x191xf32>
    %599 = tpu.concatenate %598, %597 in 1 : vector<4x191xf32>, vector<4x65xf32> -> vector<4x256xf32>
    %cst_116 = arith.constant 0.000000e+00 : f32
    %600 = vector.shape_cast %552 : vector<1x256xi1> to vector<1x256xi1>
    %601 = vector.broadcast %600 : vector<1x256xi1> to vector<4x256xi1>
    %602 = vector.broadcast %cst_116 : f32 to vector<4x256xf32>
    %603 = arith.select %601, %599, %602 : vector<4x256xi1>, vector<4x256xf32>
    %604 = vector.extract_strided_slice %546 {offsets = [0, 68], sizes = [4, 1], strides = [1, 1]} : vector<4x121xf32> to vector<4x1xf32>
    %605 = vector.broadcast %604 : vector<4x1xf32> to vector<4x256xf32>
    %606 = arith.mulf %603, %605 : vector<4x256xf32>
    %607 = arith.addf %596, %606 : vector<4x256xf32>
    %cst_117 = arith.constant 0.000000e+00 : f32
    %608 = vector.broadcast %cst_117 : f32 to vector<4x145xf32>
    %609 = vector.extract_strided_slice %545 {offsets = [0, 145], sizes = [4, 111], strides = [1, 1]} : vector<4x256xf32> to vector<4x111xf32>
    %610 = tpu.concatenate %609, %608 in 1 : vector<4x111xf32>, vector<4x145xf32> -> vector<4x256xf32>
    %cst_118 = arith.constant 0.000000e+00 : f32
    %611 = vector.shape_cast %552 : vector<1x256xi1> to vector<1x256xi1>
    %612 = vector.broadcast %611 : vector<1x256xi1> to vector<4x256xi1>
    %613 = vector.broadcast %cst_118 : f32 to vector<4x256xf32>
    %614 = arith.select %612, %610, %613 : vector<4x256xi1>, vector<4x256xf32>
    %615 = vector.extract_strided_slice %546 {offsets = [0, 79], sizes = [4, 1], strides = [1, 1]} : vector<4x121xf32> to vector<4x1xf32>
    %616 = vector.broadcast %615 : vector<4x1xf32> to vector<4x256xf32>
    %617 = arith.mulf %614, %616 : vector<4x256xf32>
    %618 = arith.addf %607, %617 : vector<4x256xf32>
    %cst_119 = arith.constant 0.000000e+00 : f32
    %619 = vector.broadcast %cst_119 : f32 to vector<4x225xf32>
    %620 = vector.extract_strided_slice %545 {offsets = [0, 225], sizes = [4, 31], strides = [1, 1]} : vector<4x256xf32> to vector<4x31xf32>
    %621 = tpu.concatenate %620, %619 in 1 : vector<4x31xf32>, vector<4x225xf32> -> vector<4x256xf32>
    %cst_120 = arith.constant 0.000000e+00 : f32
    %622 = vector.shape_cast %552 : vector<1x256xi1> to vector<1x256xi1>
    %623 = vector.broadcast %622 : vector<1x256xi1> to vector<4x256xi1>
    %624 = vector.broadcast %cst_120 : f32 to vector<4x256xf32>
    %625 = arith.select %623, %621, %624 : vector<4x256xi1>, vector<4x256xf32>
    %626 = vector.extract_strided_slice %546 {offsets = [0, 90], sizes = [4, 1], strides = [1, 1]} : vector<4x121xf32> to vector<4x1xf32>
    %627 = vector.broadcast %626 : vector<4x1xf32> to vector<4x256xf32>
    %628 = arith.mulf %625, %627 : vector<4x256xf32>
    %629 = arith.addf %618, %628 : vector<4x256xf32>
    %c10_i32 = arith.constant 10 : i32
    %630 = vector.broadcast %c10_i32 : i32 to vector<1x256xi32>
    %631 = arith.cmpi sge, %2, %630 : vector<1x256xi32>
    %c16_i32_121 = arith.constant 16 : i32
    %632 = vector.broadcast %c16_i32_121 : i32 to vector<1x256xi32>
    %633 = arith.cmpi slt, %2, %632 : vector<1x256xi32>
    %634 = arith.andi %631, %633 : vector<1x256xi1>
    %cst_122 = arith.constant 0.000000e+00 : f32
    %635 = vector.broadcast %cst_122 : f32 to vector<4x250xf32>
    %636 = vector.extract_strided_slice %545 {offsets = [0, 0], sizes = [4, 6], strides = [1, 1]} : vector<4x256xf32> to vector<4x6xf32>
    %637 = tpu.concatenate %635, %636 in 1 : vector<4x250xf32>, vector<4x6xf32> -> vector<4x256xf32>
    %cst_123 = arith.constant 0.000000e+00 : f32
    %638 = vector.shape_cast %634 : vector<1x256xi1> to vector<1x256xi1>
    %639 = vector.broadcast %638 : vector<1x256xi1> to vector<4x256xi1>
    %640 = vector.broadcast %cst_123 : f32 to vector<4x256xf32>
    %641 = arith.select %639, %637, %640 : vector<4x256xi1>, vector<4x256xf32>
    %642 = vector.extract_strided_slice %546 {offsets = [0, 25], sizes = [4, 1], strides = [1, 1]} : vector<4x121xf32> to vector<4x1xf32>
    %643 = vector.broadcast %642 : vector<4x1xf32> to vector<4x256xf32>
    %644 = arith.mulf %641, %643 : vector<4x256xf32>
    %645 = arith.addf %629, %644 : vector<4x256xf32>
    %cst_124 = arith.constant 0.000000e+00 : f32
    %646 = vector.broadcast %cst_124 : f32 to vector<4x170xf32>
    %647 = vector.extract_strided_slice %545 {offsets = [0, 0], sizes = [4, 86], strides = [1, 1]} : vector<4x256xf32> to vector<4x86xf32>
    %648 = tpu.concatenate %646, %647 in 1 : vector<4x170xf32>, vector<4x86xf32> -> vector<4x256xf32>
    %cst_125 = arith.constant 0.000000e+00 : f32
    %649 = vector.shape_cast %634 : vector<1x256xi1> to vector<1x256xi1>
    %650 = vector.broadcast %649 : vector<1x256xi1> to vector<4x256xi1>
    %651 = vector.broadcast %cst_125 : f32 to vector<4x256xf32>
    %652 = arith.select %650, %648, %651 : vector<4x256xi1>, vector<4x256xf32>
    %653 = vector.extract_strided_slice %546 {offsets = [0, 36], sizes = [4, 1], strides = [1, 1]} : vector<4x121xf32> to vector<4x1xf32>
    %654 = vector.broadcast %653 : vector<4x1xf32> to vector<4x256xf32>
    %655 = arith.mulf %652, %654 : vector<4x256xf32>
    %656 = arith.addf %645, %655 : vector<4x256xf32>
    %cst_126 = arith.constant 0.000000e+00 : f32
    %657 = vector.broadcast %cst_126 : f32 to vector<4x90xf32>
    %658 = vector.extract_strided_slice %545 {offsets = [0, 0], sizes = [4, 166], strides = [1, 1]} : vector<4x256xf32> to vector<4x166xf32>
    %659 = tpu.concatenate %657, %658 in 1 : vector<4x90xf32>, vector<4x166xf32> -> vector<4x256xf32>
    %cst_127 = arith.constant 0.000000e+00 : f32
    %660 = vector.shape_cast %634 : vector<1x256xi1> to vector<1x256xi1>
    %661 = vector.broadcast %660 : vector<1x256xi1> to vector<4x256xi1>
    %662 = vector.broadcast %cst_127 : f32 to vector<4x256xf32>
    %663 = arith.select %661, %659, %662 : vector<4x256xi1>, vector<4x256xf32>
    %664 = vector.extract_strided_slice %546 {offsets = [0, 47], sizes = [4, 1], strides = [1, 1]} : vector<4x121xf32> to vector<4x1xf32>
    %665 = vector.broadcast %664 : vector<4x1xf32> to vector<4x256xf32>
    %666 = arith.mulf %663, %665 : vector<4x256xf32>
    %667 = arith.addf %656, %666 : vector<4x256xf32>
    %cst_128 = arith.constant 0.000000e+00 : f32
    %668 = vector.broadcast %cst_128 : f32 to vector<4x10xf32>
    %669 = vector.extract_strided_slice %545 {offsets = [0, 0], sizes = [4, 246], strides = [1, 1]} : vector<4x256xf32> to vector<4x246xf32>
    %670 = tpu.concatenate %668, %669 in 1 : vector<4x10xf32>, vector<4x246xf32> -> vector<4x256xf32>
    %cst_129 = arith.constant 0.000000e+00 : f32
    %671 = vector.shape_cast %634 : vector<1x256xi1> to vector<1x256xi1>
    %672 = vector.broadcast %671 : vector<1x256xi1> to vector<4x256xi1>
    %673 = vector.broadcast %cst_129 : f32 to vector<4x256xf32>
    %674 = arith.select %672, %670, %673 : vector<4x256xi1>, vector<4x256xf32>
    %675 = vector.extract_strided_slice %546 {offsets = [0, 58], sizes = [4, 1], strides = [1, 1]} : vector<4x121xf32> to vector<4x1xf32>
    %676 = vector.broadcast %675 : vector<4x1xf32> to vector<4x256xf32>
    %677 = arith.mulf %674, %676 : vector<4x256xf32>
    %678 = arith.addf %667, %677 : vector<4x256xf32>
    %cst_130 = arith.constant 0.000000e+00 : f32
    %679 = vector.broadcast %cst_130 : f32 to vector<4x70xf32>
    %680 = vector.extract_strided_slice %545 {offsets = [0, 70], sizes = [4, 186], strides = [1, 1]} : vector<4x256xf32> to vector<4x186xf32>
    %681 = tpu.concatenate %680, %679 in 1 : vector<4x186xf32>, vector<4x70xf32> -> vector<4x256xf32>
    %cst_131 = arith.constant 0.000000e+00 : f32
    %682 = vector.shape_cast %634 : vector<1x256xi1> to vector<1x256xi1>
    %683 = vector.broadcast %682 : vector<1x256xi1> to vector<4x256xi1>
    %684 = vector.broadcast %cst_131 : f32 to vector<4x256xf32>
    %685 = arith.select %683, %681, %684 : vector<4x256xi1>, vector<4x256xf32>
    %686 = vector.extract_strided_slice %546 {offsets = [0, 69], sizes = [4, 1], strides = [1, 1]} : vector<4x121xf32> to vector<4x1xf32>
    %687 = vector.broadcast %686 : vector<4x1xf32> to vector<4x256xf32>
    %688 = arith.mulf %685, %687 : vector<4x256xf32>
    %689 = arith.addf %678, %688 : vector<4x256xf32>
    %cst_132 = arith.constant 0.000000e+00 : f32
    %690 = vector.broadcast %cst_132 : f32 to vector<4x150xf32>
    %691 = vector.extract_strided_slice %545 {offsets = [0, 150], sizes = [4, 106], strides = [1, 1]} : vector<4x256xf32> to vector<4x106xf32>
    %692 = tpu.concatenate %691, %690 in 1 : vector<4x106xf32>, vector<4x150xf32> -> vector<4x256xf32>
    %cst_133 = arith.constant 0.000000e+00 : f32
    %693 = vector.shape_cast %634 : vector<1x256xi1> to vector<1x256xi1>
    %694 = vector.broadcast %693 : vector<1x256xi1> to vector<4x256xi1>
    %695 = vector.broadcast %cst_133 : f32 to vector<4x256xf32>
    %696 = arith.select %694, %692, %695 : vector<4x256xi1>, vector<4x256xf32>
    %697 = vector.extract_strided_slice %546 {offsets = [0, 80], sizes = [4, 1], strides = [1, 1]} : vector<4x121xf32> to vector<4x1xf32>
    %698 = vector.broadcast %697 : vector<4x1xf32> to vector<4x256xf32>
    %699 = arith.mulf %696, %698 : vector<4x256xf32>
    %700 = arith.addf %689, %699 : vector<4x256xf32>
    %cst_134 = arith.constant 0.000000e+00 : f32
    %701 = vector.broadcast %cst_134 : f32 to vector<4x230xf32>
    %702 = vector.extract_strided_slice %545 {offsets = [0, 230], sizes = [4, 26], strides = [1, 1]} : vector<4x256xf32> to vector<4x26xf32>
    %703 = tpu.concatenate %702, %701 in 1 : vector<4x26xf32>, vector<4x230xf32> -> vector<4x256xf32>
    %cst_135 = arith.constant 0.000000e+00 : f32
    %704 = vector.shape_cast %634 : vector<1x256xi1> to vector<1x256xi1>
    %705 = vector.broadcast %704 : vector<1x256xi1> to vector<4x256xi1>
    %706 = vector.broadcast %cst_135 : f32 to vector<4x256xf32>
    %707 = arith.select %705, %703, %706 : vector<4x256xi1>, vector<4x256xf32>
    %708 = vector.extract_strided_slice %546 {offsets = [0, 91], sizes = [4, 1], strides = [1, 1]} : vector<4x121xf32> to vector<4x1xf32>
    %709 = vector.broadcast %708 : vector<4x1xf32> to vector<4x256xf32>
    %710 = arith.mulf %707, %709 : vector<4x256xf32>
    %711 = arith.addf %700, %710 : vector<4x256xf32>
    %c5_i32 = arith.constant 5 : i32
    %712 = vector.broadcast %c5_i32 : i32 to vector<1x256xi32>
    %713 = arith.cmpi sge, %2, %712 : vector<1x256xi32>
    %c16_i32_136 = arith.constant 16 : i32
    %714 = vector.broadcast %c16_i32_136 : i32 to vector<1x256xi32>
    %715 = arith.cmpi slt, %2, %714 : vector<1x256xi32>
    %716 = arith.andi %713, %715 : vector<1x256xi1>
    %cst_137 = arith.constant 0.000000e+00 : f32
    %717 = vector.broadcast %cst_137 : f32 to vector<4x245xf32>
    %718 = vector.extract_strided_slice %545 {offsets = [0, 0], sizes = [4, 11], strides = [1, 1]} : vector<4x256xf32> to vector<4x11xf32>
    %719 = tpu.concatenate %717, %718 in 1 : vector<4x245xf32>, vector<4x11xf32> -> vector<4x256xf32>
    %cst_138 = arith.constant 0.000000e+00 : f32
    %720 = vector.shape_cast %716 : vector<1x256xi1> to vector<1x256xi1>
    %721 = vector.broadcast %720 : vector<1x256xi1> to vector<4x256xi1>
    %722 = vector.broadcast %cst_138 : f32 to vector<4x256xf32>
    %723 = arith.select %721, %719, %722 : vector<4x256xi1>, vector<4x256xf32>
    %724 = vector.extract_strided_slice %546 {offsets = [0, 26], sizes = [4, 1], strides = [1, 1]} : vector<4x121xf32> to vector<4x1xf32>
    %725 = vector.broadcast %724 : vector<4x1xf32> to vector<4x256xf32>
    %726 = arith.mulf %723, %725 : vector<4x256xf32>
    %727 = arith.addf %711, %726 : vector<4x256xf32>
    %cst_139 = arith.constant 0.000000e+00 : f32
    %728 = vector.broadcast %cst_139 : f32 to vector<4x165xf32>
    %729 = vector.extract_strided_slice %545 {offsets = [0, 0], sizes = [4, 91], strides = [1, 1]} : vector<4x256xf32> to vector<4x91xf32>
    %730 = tpu.concatenate %728, %729 in 1 : vector<4x165xf32>, vector<4x91xf32> -> vector<4x256xf32>
    %cst_140 = arith.constant 0.000000e+00 : f32
    %731 = vector.shape_cast %716 : vector<1x256xi1> to vector<1x256xi1>
    %732 = vector.broadcast %731 : vector<1x256xi1> to vector<4x256xi1>
    %733 = vector.broadcast %cst_140 : f32 to vector<4x256xf32>
    %734 = arith.select %732, %730, %733 : vector<4x256xi1>, vector<4x256xf32>
    %735 = vector.extract_strided_slice %546 {offsets = [0, 37], sizes = [4, 1], strides = [1, 1]} : vector<4x121xf32> to vector<4x1xf32>
    %736 = vector.broadcast %735 : vector<4x1xf32> to vector<4x256xf32>
    %737 = arith.mulf %734, %736 : vector<4x256xf32>
    %738 = arith.addf %727, %737 : vector<4x256xf32>
    %cst_141 = arith.constant 0.000000e+00 : f32
    %739 = vector.broadcast %cst_141 : f32 to vector<4x85xf32>
    %740 = vector.extract_strided_slice %545 {offsets = [0, 0], sizes = [4, 171], strides = [1, 1]} : vector<4x256xf32> to vector<4x171xf32>
    %741 = tpu.concatenate %739, %740 in 1 : vector<4x85xf32>, vector<4x171xf32> -> vector<4x256xf32>
    %cst_142 = arith.constant 0.000000e+00 : f32
    %742 = vector.shape_cast %716 : vector<1x256xi1> to vector<1x256xi1>
    %743 = vector.broadcast %742 : vector<1x256xi1> to vector<4x256xi1>
    %744 = vector.broadcast %cst_142 : f32 to vector<4x256xf32>
    %745 = arith.select %743, %741, %744 : vector<4x256xi1>, vector<4x256xf32>
    %746 = vector.extract_strided_slice %546 {offsets = [0, 48], sizes = [4, 1], strides = [1, 1]} : vector<4x121xf32> to vector<4x1xf32>
    %747 = vector.broadcast %746 : vector<4x1xf32> to vector<4x256xf32>
    %748 = arith.mulf %745, %747 : vector<4x256xf32>
    %749 = arith.addf %738, %748 : vector<4x256xf32>
    %cst_143 = arith.constant 0.000000e+00 : f32
    %750 = vector.broadcast %cst_143 : f32 to vector<4x5xf32>
    %751 = vector.extract_strided_slice %545 {offsets = [0, 0], sizes = [4, 251], strides = [1, 1]} : vector<4x256xf32> to vector<4x251xf32>
    %752 = tpu.concatenate %750, %751 in 1 : vector<4x5xf32>, vector<4x251xf32> -> vector<4x256xf32>
    %cst_144 = arith.constant 0.000000e+00 : f32
    %753 = vector.shape_cast %716 : vector<1x256xi1> to vector<1x256xi1>
    %754 = vector.broadcast %753 : vector<1x256xi1> to vector<4x256xi1>
    %755 = vector.broadcast %cst_144 : f32 to vector<4x256xf32>
    %756 = arith.select %754, %752, %755 : vector<4x256xi1>, vector<4x256xf32>
    %757 = vector.extract_strided_slice %546 {offsets = [0, 59], sizes = [4, 1], strides = [1, 1]} : vector<4x121xf32> to vector<4x1xf32>
    %758 = vector.broadcast %757 : vector<4x1xf32> to vector<4x256xf32>
    %759 = arith.mulf %756, %758 : vector<4x256xf32>
    %760 = arith.addf %749, %759 : vector<4x256xf32>
    %cst_145 = arith.constant 0.000000e+00 : f32
    %761 = vector.broadcast %cst_145 : f32 to vector<4x75xf32>
    %762 = vector.extract_strided_slice %545 {offsets = [0, 75], sizes = [4, 181], strides = [1, 1]} : vector<4x256xf32> to vector<4x181xf32>
    %763 = tpu.concatenate %762, %761 in 1 : vector<4x181xf32>, vector<4x75xf32> -> vector<4x256xf32>
    %cst_146 = arith.constant 0.000000e+00 : f32
    %764 = vector.shape_cast %716 : vector<1x256xi1> to vector<1x256xi1>
    %765 = vector.broadcast %764 : vector<1x256xi1> to vector<4x256xi1>
    %766 = vector.broadcast %cst_146 : f32 to vector<4x256xf32>
    %767 = arith.select %765, %763, %766 : vector<4x256xi1>, vector<4x256xf32>
    %768 = vector.extract_strided_slice %546 {offsets = [0, 70], sizes = [4, 1], strides = [1, 1]} : vector<4x121xf32> to vector<4x1xf32>
    %769 = vector.broadcast %768 : vector<4x1xf32> to vector<4x256xf32>
    %770 = arith.mulf %767, %769 : vector<4x256xf32>
    %771 = arith.addf %760, %770 : vector<4x256xf32>
    %cst_147 = arith.constant 0.000000e+00 : f32
    %772 = vector.broadcast %cst_147 : f32 to vector<4x155xf32>
    %773 = vector.extract_strided_slice %545 {offsets = [0, 155], sizes = [4, 101], strides = [1, 1]} : vector<4x256xf32> to vector<4x101xf32>
    %774 = tpu.concatenate %773, %772 in 1 : vector<4x101xf32>, vector<4x155xf32> -> vector<4x256xf32>
    %cst_148 = arith.constant 0.000000e+00 : f32
    %775 = vector.shape_cast %716 : vector<1x256xi1> to vector<1x256xi1>
    %776 = vector.broadcast %775 : vector<1x256xi1> to vector<4x256xi1>
    %777 = vector.broadcast %cst_148 : f32 to vector<4x256xf32>
    %778 = arith.select %776, %774, %777 : vector<4x256xi1>, vector<4x256xf32>
    %779 = vector.extract_strided_slice %546 {offsets = [0, 81], sizes = [4, 1], strides = [1, 1]} : vector<4x121xf32> to vector<4x1xf32>
    %780 = vector.broadcast %779 : vector<4x1xf32> to vector<4x256xf32>
    %781 = arith.mulf %778, %780 : vector<4x256xf32>
    %782 = arith.addf %771, %781 : vector<4x256xf32>
    %cst_149 = arith.constant 0.000000e+00 : f32
    %783 = vector.broadcast %cst_149 : f32 to vector<4x235xf32>
    %784 = vector.extract_strided_slice %545 {offsets = [0, 235], sizes = [4, 21], strides = [1, 1]} : vector<4x256xf32> to vector<4x21xf32>
    %785 = tpu.concatenate %784, %783 in 1 : vector<4x21xf32>, vector<4x235xf32> -> vector<4x256xf32>
    %cst_150 = arith.constant 0.000000e+00 : f32
    %786 = vector.shape_cast %716 : vector<1x256xi1> to vector<1x256xi1>
    %787 = vector.broadcast %786 : vector<1x256xi1> to vector<4x256xi1>
    %788 = vector.broadcast %cst_150 : f32 to vector<4x256xf32>
    %789 = arith.select %787, %785, %788 : vector<4x256xi1>, vector<4x256xf32>
    %790 = vector.extract_strided_slice %546 {offsets = [0, 92], sizes = [4, 1], strides = [1, 1]} : vector<4x121xf32> to vector<4x1xf32>
    %791 = vector.broadcast %790 : vector<4x1xf32> to vector<4x256xf32>
    %792 = arith.mulf %789, %791 : vector<4x256xf32>
    %793 = arith.addf %782, %792 : vector<4x256xf32>
    %cst_151 = arith.constant 0.000000e+00 : f32
    %794 = vector.broadcast %cst_151 : f32 to vector<4x240xf32>
    %795 = vector.extract_strided_slice %545 {offsets = [0, 0], sizes = [4, 16], strides = [1, 1]} : vector<4x256xf32> to vector<4x16xf32>
    %796 = tpu.concatenate %794, %795 in 1 : vector<4x240xf32>, vector<4x16xf32> -> vector<4x256xf32>
    %797 = vector.extract_strided_slice %546 {offsets = [0, 27], sizes = [4, 1], strides = [1, 1]} : vector<4x121xf32> to vector<4x1xf32>
    %798 = vector.broadcast %797 : vector<4x1xf32> to vector<4x256xf32>
    %799 = arith.mulf %796, %798 : vector<4x256xf32>
    %800 = arith.addf %793, %799 : vector<4x256xf32>
    %cst_152 = arith.constant 0.000000e+00 : f32
    %801 = vector.broadcast %cst_152 : f32 to vector<4x160xf32>
    %802 = vector.extract_strided_slice %545 {offsets = [0, 0], sizes = [4, 96], strides = [1, 1]} : vector<4x256xf32> to vector<4x96xf32>
    %803 = tpu.concatenate %801, %802 in 1 : vector<4x160xf32>, vector<4x96xf32> -> vector<4x256xf32>
    %804 = vector.extract_strided_slice %546 {offsets = [0, 38], sizes = [4, 1], strides = [1, 1]} : vector<4x121xf32> to vector<4x1xf32>
    %805 = vector.broadcast %804 : vector<4x1xf32> to vector<4x256xf32>
    %806 = arith.mulf %803, %805 : vector<4x256xf32>
    %807 = arith.addf %800, %806 : vector<4x256xf32>
    %cst_153 = arith.constant 0.000000e+00 : f32
    %808 = vector.broadcast %cst_153 : f32 to vector<4x80xf32>
    %809 = vector.extract_strided_slice %545 {offsets = [0, 0], sizes = [4, 176], strides = [1, 1]} : vector<4x256xf32> to vector<4x176xf32>
    %810 = tpu.concatenate %808, %809 in 1 : vector<4x80xf32>, vector<4x176xf32> -> vector<4x256xf32>
    %811 = vector.extract_strided_slice %546 {offsets = [0, 49], sizes = [4, 1], strides = [1, 1]} : vector<4x121xf32> to vector<4x1xf32>
    %812 = vector.broadcast %811 : vector<4x1xf32> to vector<4x256xf32>
    %813 = arith.mulf %810, %812 : vector<4x256xf32>
    %814 = arith.addf %807, %813 : vector<4x256xf32>
    %815 = vector.extract_strided_slice %546 {offsets = [0, 60], sizes = [4, 1], strides = [1, 1]} : vector<4x121xf32> to vector<4x1xf32>
    %816 = vector.broadcast %815 : vector<4x1xf32> to vector<4x256xf32>
    %817 = arith.mulf %545, %816 : vector<4x256xf32>
    %818 = arith.addf %814, %817 : vector<4x256xf32>
    %cst_154 = arith.constant 0.000000e+00 : f32
    %819 = vector.broadcast %cst_154 : f32 to vector<4x80xf32>
    %820 = vector.extract_strided_slice %545 {offsets = [0, 80], sizes = [4, 176], strides = [1, 1]} : vector<4x256xf32> to vector<4x176xf32>
    %821 = tpu.concatenate %820, %819 in 1 : vector<4x176xf32>, vector<4x80xf32> -> vector<4x256xf32>
    %822 = vector.extract_strided_slice %546 {offsets = [0, 71], sizes = [4, 1], strides = [1, 1]} : vector<4x121xf32> to vector<4x1xf32>
    %823 = vector.broadcast %822 : vector<4x1xf32> to vector<4x256xf32>
    %824 = arith.mulf %821, %823 : vector<4x256xf32>
    %825 = arith.addf %818, %824 : vector<4x256xf32>
    %cst_155 = arith.constant 0.000000e+00 : f32
    %826 = vector.broadcast %cst_155 : f32 to vector<4x160xf32>
    %827 = vector.extract_strided_slice %545 {offsets = [0, 160], sizes = [4, 96], strides = [1, 1]} : vector<4x256xf32> to vector<4x96xf32>
    %828 = tpu.concatenate %827, %826 in 1 : vector<4x96xf32>, vector<4x160xf32> -> vector<4x256xf32>
    %829 = vector.extract_strided_slice %546 {offsets = [0, 82], sizes = [4, 1], strides = [1, 1]} : vector<4x121xf32> to vector<4x1xf32>
    %830 = vector.broadcast %829 : vector<4x1xf32> to vector<4x256xf32>
    %831 = arith.mulf %828, %830 : vector<4x256xf32>
    %832 = arith.addf %825, %831 : vector<4x256xf32>
    %cst_156 = arith.constant 0.000000e+00 : f32
    %833 = vector.broadcast %cst_156 : f32 to vector<4x240xf32>
    %834 = vector.extract_strided_slice %545 {offsets = [0, 240], sizes = [4, 16], strides = [1, 1]} : vector<4x256xf32> to vector<4x16xf32>
    %835 = tpu.concatenate %834, %833 in 1 : vector<4x16xf32>, vector<4x240xf32> -> vector<4x256xf32>
    %836 = vector.extract_strided_slice %546 {offsets = [0, 93], sizes = [4, 1], strides = [1, 1]} : vector<4x121xf32> to vector<4x1xf32>
    %837 = vector.broadcast %836 : vector<4x1xf32> to vector<4x256xf32>
    %838 = arith.mulf %835, %837 : vector<4x256xf32>
    %839 = arith.addf %832, %838 : vector<4x256xf32>
    %c0_i32_157 = arith.constant 0 : i32
    %840 = vector.broadcast %c0_i32_157 : i32 to vector<1x256xi32>
    %841 = arith.cmpi sge, %2, %840 : vector<1x256xi32>
    %c11_i32 = arith.constant 11 : i32
    %842 = vector.broadcast %c11_i32 : i32 to vector<1x256xi32>
    %843 = arith.cmpi slt, %2, %842 : vector<1x256xi32>
    %844 = arith.andi %841, %843 : vector<1x256xi1>
    %cst_158 = arith.constant 0.000000e+00 : f32
    %845 = vector.broadcast %cst_158 : f32 to vector<4x235xf32>
    %846 = vector.extract_strided_slice %545 {offsets = [0, 0], sizes = [4, 21], strides = [1, 1]} : vector<4x256xf32> to vector<4x21xf32>
    %847 = tpu.concatenate %845, %846 in 1 : vector<4x235xf32>, vector<4x21xf32> -> vector<4x256xf32>
    %cst_159 = arith.constant 0.000000e+00 : f32
    %848 = vector.shape_cast %844 : vector<1x256xi1> to vector<1x256xi1>
    %849 = vector.broadcast %848 : vector<1x256xi1> to vector<4x256xi1>
    %850 = vector.broadcast %cst_159 : f32 to vector<4x256xf32>
    %851 = arith.select %849, %847, %850 : vector<4x256xi1>, vector<4x256xf32>
    %852 = vector.extract_strided_slice %546 {offsets = [0, 28], sizes = [4, 1], strides = [1, 1]} : vector<4x121xf32> to vector<4x1xf32>
    %853 = vector.broadcast %852 : vector<4x1xf32> to vector<4x256xf32>
    %854 = arith.mulf %851, %853 : vector<4x256xf32>
    %855 = arith.addf %839, %854 : vector<4x256xf32>
    %cst_160 = arith.constant 0.000000e+00 : f32
    %856 = vector.broadcast %cst_160 : f32 to vector<4x155xf32>
    %857 = vector.extract_strided_slice %545 {offsets = [0, 0], sizes = [4, 101], strides = [1, 1]} : vector<4x256xf32> to vector<4x101xf32>
    %858 = tpu.concatenate %856, %857 in 1 : vector<4x155xf32>, vector<4x101xf32> -> vector<4x256xf32>
    %cst_161 = arith.constant 0.000000e+00 : f32
    %859 = vector.shape_cast %844 : vector<1x256xi1> to vector<1x256xi1>
    %860 = vector.broadcast %859 : vector<1x256xi1> to vector<4x256xi1>
    %861 = vector.broadcast %cst_161 : f32 to vector<4x256xf32>
    %862 = arith.select %860, %858, %861 : vector<4x256xi1>, vector<4x256xf32>
    %863 = vector.extract_strided_slice %546 {offsets = [0, 39], sizes = [4, 1], strides = [1, 1]} : vector<4x121xf32> to vector<4x1xf32>
    %864 = vector.broadcast %863 : vector<4x1xf32> to vector<4x256xf32>
    %865 = arith.mulf %862, %864 : vector<4x256xf32>
    %866 = arith.addf %855, %865 : vector<4x256xf32>
    %cst_162 = arith.constant 0.000000e+00 : f32
    %867 = vector.broadcast %cst_162 : f32 to vector<4x75xf32>
    %868 = vector.extract_strided_slice %545 {offsets = [0, 0], sizes = [4, 181], strides = [1, 1]} : vector<4x256xf32> to vector<4x181xf32>
    %869 = tpu.concatenate %867, %868 in 1 : vector<4x75xf32>, vector<4x181xf32> -> vector<4x256xf32>
    %cst_163 = arith.constant 0.000000e+00 : f32
    %870 = vector.shape_cast %844 : vector<1x256xi1> to vector<1x256xi1>
    %871 = vector.broadcast %870 : vector<1x256xi1> to vector<4x256xi1>
    %872 = vector.broadcast %cst_163 : f32 to vector<4x256xf32>
    %873 = arith.select %871, %869, %872 : vector<4x256xi1>, vector<4x256xf32>
    %874 = vector.extract_strided_slice %546 {offsets = [0, 50], sizes = [4, 1], strides = [1, 1]} : vector<4x121xf32> to vector<4x1xf32>
    %875 = vector.broadcast %874 : vector<4x1xf32> to vector<4x256xf32>
    %876 = arith.mulf %873, %875 : vector<4x256xf32>
    %877 = arith.addf %866, %876 : vector<4x256xf32>
    %cst_164 = arith.constant 0.000000e+00 : f32
    %878 = vector.broadcast %cst_164 : f32 to vector<4x5xf32>
    %879 = vector.extract_strided_slice %545 {offsets = [0, 5], sizes = [4, 251], strides = [1, 1]} : vector<4x256xf32> to vector<4x251xf32>
    %880 = tpu.concatenate %879, %878 in 1 : vector<4x251xf32>, vector<4x5xf32> -> vector<4x256xf32>
    %cst_165 = arith.constant 0.000000e+00 : f32
    %881 = vector.shape_cast %844 : vector<1x256xi1> to vector<1x256xi1>
    %882 = vector.broadcast %881 : vector<1x256xi1> to vector<4x256xi1>
    %883 = vector.broadcast %cst_165 : f32 to vector<4x256xf32>
    %884 = arith.select %882, %880, %883 : vector<4x256xi1>, vector<4x256xf32>
    %885 = vector.extract_strided_slice %546 {offsets = [0, 61], sizes = [4, 1], strides = [1, 1]} : vector<4x121xf32> to vector<4x1xf32>
    %886 = vector.broadcast %885 : vector<4x1xf32> to vector<4x256xf32>
    %887 = arith.mulf %884, %886 : vector<4x256xf32>
    %888 = arith.addf %877, %887 : vector<4x256xf32>
    %cst_166 = arith.constant 0.000000e+00 : f32
    %889 = vector.broadcast %cst_166 : f32 to vector<4x85xf32>
    %890 = vector.extract_strided_slice %545 {offsets = [0, 85], sizes = [4, 171], strides = [1, 1]} : vector<4x256xf32> to vector<4x171xf32>
    %891 = tpu.concatenate %890, %889 in 1 : vector<4x171xf32>, vector<4x85xf32> -> vector<4x256xf32>
    %cst_167 = arith.constant 0.000000e+00 : f32
    %892 = vector.shape_cast %844 : vector<1x256xi1> to vector<1x256xi1>
    %893 = vector.broadcast %892 : vector<1x256xi1> to vector<4x256xi1>
    %894 = vector.broadcast %cst_167 : f32 to vector<4x256xf32>
    %895 = arith.select %893, %891, %894 : vector<4x256xi1>, vector<4x256xf32>
    %896 = vector.extract_strided_slice %546 {offsets = [0, 72], sizes = [4, 1], strides = [1, 1]} : vector<4x121xf32> to vector<4x1xf32>
    %897 = vector.broadcast %896 : vector<4x1xf32> to vector<4x256xf32>
    %898 = arith.mulf %895, %897 : vector<4x256xf32>
    %899 = arith.addf %888, %898 : vector<4x256xf32>
    %cst_168 = arith.constant 0.000000e+00 : f32
    %900 = vector.broadcast %cst_168 : f32 to vector<4x165xf32>
    %901 = vector.extract_strided_slice %545 {offsets = [0, 165], sizes = [4, 91], strides = [1, 1]} : vector<4x256xf32> to vector<4x91xf32>
    %902 = tpu.concatenate %901, %900 in 1 : vector<4x91xf32>, vector<4x165xf32> -> vector<4x256xf32>
    %cst_169 = arith.constant 0.000000e+00 : f32
    %903 = vector.shape_cast %844 : vector<1x256xi1> to vector<1x256xi1>
    %904 = vector.broadcast %903 : vector<1x256xi1> to vector<4x256xi1>
    %905 = vector.broadcast %cst_169 : f32 to vector<4x256xf32>
    %906 = arith.select %904, %902, %905 : vector<4x256xi1>, vector<4x256xf32>
    %907 = vector.extract_strided_slice %546 {offsets = [0, 83], sizes = [4, 1], strides = [1, 1]} : vector<4x121xf32> to vector<4x1xf32>
    %908 = vector.broadcast %907 : vector<4x1xf32> to vector<4x256xf32>
    %909 = arith.mulf %906, %908 : vector<4x256xf32>
    %910 = arith.addf %899, %909 : vector<4x256xf32>
    %cst_170 = arith.constant 0.000000e+00 : f32
    %911 = vector.broadcast %cst_170 : f32 to vector<4x245xf32>
    %912 = vector.extract_strided_slice %545 {offsets = [0, 245], sizes = [4, 11], strides = [1, 1]} : vector<4x256xf32> to vector<4x11xf32>
    %913 = tpu.concatenate %912, %911 in 1 : vector<4x11xf32>, vector<4x245xf32> -> vector<4x256xf32>
    %cst_171 = arith.constant 0.000000e+00 : f32
    %914 = vector.shape_cast %844 : vector<1x256xi1> to vector<1x256xi1>
    %915 = vector.broadcast %914 : vector<1x256xi1> to vector<4x256xi1>
    %916 = vector.broadcast %cst_171 : f32 to vector<4x256xf32>
    %917 = arith.select %915, %913, %916 : vector<4x256xi1>, vector<4x256xf32>
    %918 = vector.extract_strided_slice %546 {offsets = [0, 94], sizes = [4, 1], strides = [1, 1]} : vector<4x121xf32> to vector<4x1xf32>
    %919 = vector.broadcast %918 : vector<4x1xf32> to vector<4x256xf32>
    %920 = arith.mulf %917, %919 : vector<4x256xf32>
    %921 = arith.addf %910, %920 : vector<4x256xf32>
    %c0_i32_172 = arith.constant 0 : i32
    %922 = vector.broadcast %c0_i32_172 : i32 to vector<1x256xi32>
    %923 = arith.cmpi sge, %2, %922 : vector<1x256xi32>
    %c6_i32 = arith.constant 6 : i32
    %924 = vector.broadcast %c6_i32 : i32 to vector<1x256xi32>
    %925 = arith.cmpi slt, %2, %924 : vector<1x256xi32>
    %926 = arith.andi %923, %925 : vector<1x256xi1>
    %cst_173 = arith.constant 0.000000e+00 : f32
    %927 = vector.broadcast %cst_173 : f32 to vector<4x230xf32>
    %928 = vector.extract_strided_slice %545 {offsets = [0, 0], sizes = [4, 26], strides = [1, 1]} : vector<4x256xf32> to vector<4x26xf32>
    %929 = tpu.concatenate %927, %928 in 1 : vector<4x230xf32>, vector<4x26xf32> -> vector<4x256xf32>
    %cst_174 = arith.constant 0.000000e+00 : f32
    %930 = vector.shape_cast %926 : vector<1x256xi1> to vector<1x256xi1>
    %931 = vector.broadcast %930 : vector<1x256xi1> to vector<4x256xi1>
    %932 = vector.broadcast %cst_174 : f32 to vector<4x256xf32>
    %933 = arith.select %931, %929, %932 : vector<4x256xi1>, vector<4x256xf32>
    %934 = vector.extract_strided_slice %546 {offsets = [0, 29], sizes = [4, 1], strides = [1, 1]} : vector<4x121xf32> to vector<4x1xf32>
    %935 = vector.broadcast %934 : vector<4x1xf32> to vector<4x256xf32>
    %936 = arith.mulf %933, %935 : vector<4x256xf32>
    %937 = arith.addf %921, %936 : vector<4x256xf32>
    %cst_175 = arith.constant 0.000000e+00 : f32
    %938 = vector.broadcast %cst_175 : f32 to vector<4x150xf32>
    %939 = vector.extract_strided_slice %545 {offsets = [0, 0], sizes = [4, 106], strides = [1, 1]} : vector<4x256xf32> to vector<4x106xf32>
    %940 = tpu.concatenate %938, %939 in 1 : vector<4x150xf32>, vector<4x106xf32> -> vector<4x256xf32>
    %cst_176 = arith.constant 0.000000e+00 : f32
    %941 = vector.shape_cast %926 : vector<1x256xi1> to vector<1x256xi1>
    %942 = vector.broadcast %941 : vector<1x256xi1> to vector<4x256xi1>
    %943 = vector.broadcast %cst_176 : f32 to vector<4x256xf32>
    %944 = arith.select %942, %940, %943 : vector<4x256xi1>, vector<4x256xf32>
    %945 = vector.extract_strided_slice %546 {offsets = [0, 40], sizes = [4, 1], strides = [1, 1]} : vector<4x121xf32> to vector<4x1xf32>
    %946 = vector.broadcast %945 : vector<4x1xf32> to vector<4x256xf32>
    %947 = arith.mulf %944, %946 : vector<4x256xf32>
    %948 = arith.addf %937, %947 : vector<4x256xf32>
    %cst_177 = arith.constant 0.000000e+00 : f32
    %949 = vector.broadcast %cst_177 : f32 to vector<4x70xf32>
    %950 = vector.extract_strided_slice %545 {offsets = [0, 0], sizes = [4, 186], strides = [1, 1]} : vector<4x256xf32> to vector<4x186xf32>
    %951 = tpu.concatenate %949, %950 in 1 : vector<4x70xf32>, vector<4x186xf32> -> vector<4x256xf32>
    %cst_178 = arith.constant 0.000000e+00 : f32
    %952 = vector.shape_cast %926 : vector<1x256xi1> to vector<1x256xi1>
    %953 = vector.broadcast %952 : vector<1x256xi1> to vector<4x256xi1>
    %954 = vector.broadcast %cst_178 : f32 to vector<4x256xf32>
    %955 = arith.select %953, %951, %954 : vector<4x256xi1>, vector<4x256xf32>
    %956 = vector.extract_strided_slice %546 {offsets = [0, 51], sizes = [4, 1], strides = [1, 1]} : vector<4x121xf32> to vector<4x1xf32>
    %957 = vector.broadcast %956 : vector<4x1xf32> to vector<4x256xf32>
    %958 = arith.mulf %955, %957 : vector<4x256xf32>
    %959 = arith.addf %948, %958 : vector<4x256xf32>
    %cst_179 = arith.constant 0.000000e+00 : f32
    %960 = vector.broadcast %cst_179 : f32 to vector<4x10xf32>
    %961 = vector.extract_strided_slice %545 {offsets = [0, 10], sizes = [4, 246], strides = [1, 1]} : vector<4x256xf32> to vector<4x246xf32>
    %962 = tpu.concatenate %961, %960 in 1 : vector<4x246xf32>, vector<4x10xf32> -> vector<4x256xf32>
    %cst_180 = arith.constant 0.000000e+00 : f32
    %963 = vector.shape_cast %926 : vector<1x256xi1> to vector<1x256xi1>
    %964 = vector.broadcast %963 : vector<1x256xi1> to vector<4x256xi1>
    %965 = vector.broadcast %cst_180 : f32 to vector<4x256xf32>
    %966 = arith.select %964, %962, %965 : vector<4x256xi1>, vector<4x256xf32>
    %967 = vector.extract_strided_slice %546 {offsets = [0, 62], sizes = [4, 1], strides = [1, 1]} : vector<4x121xf32> to vector<4x1xf32>
    %968 = vector.broadcast %967 : vector<4x1xf32> to vector<4x256xf32>
    %969 = arith.mulf %966, %968 : vector<4x256xf32>
    %970 = arith.addf %959, %969 : vector<4x256xf32>
    %cst_181 = arith.constant 0.000000e+00 : f32
    %971 = vector.broadcast %cst_181 : f32 to vector<4x90xf32>
    %972 = vector.extract_strided_slice %545 {offsets = [0, 90], sizes = [4, 166], strides = [1, 1]} : vector<4x256xf32> to vector<4x166xf32>
    %973 = tpu.concatenate %972, %971 in 1 : vector<4x166xf32>, vector<4x90xf32> -> vector<4x256xf32>
    %cst_182 = arith.constant 0.000000e+00 : f32
    %974 = vector.shape_cast %926 : vector<1x256xi1> to vector<1x256xi1>
    %975 = vector.broadcast %974 : vector<1x256xi1> to vector<4x256xi1>
    %976 = vector.broadcast %cst_182 : f32 to vector<4x256xf32>
    %977 = arith.select %975, %973, %976 : vector<4x256xi1>, vector<4x256xf32>
    %978 = vector.extract_strided_slice %546 {offsets = [0, 73], sizes = [4, 1], strides = [1, 1]} : vector<4x121xf32> to vector<4x1xf32>
    %979 = vector.broadcast %978 : vector<4x1xf32> to vector<4x256xf32>
    %980 = arith.mulf %977, %979 : vector<4x256xf32>
    %981 = arith.addf %970, %980 : vector<4x256xf32>
    %cst_183 = arith.constant 0.000000e+00 : f32
    %982 = vector.broadcast %cst_183 : f32 to vector<4x170xf32>
    %983 = vector.extract_strided_slice %545 {offsets = [0, 170], sizes = [4, 86], strides = [1, 1]} : vector<4x256xf32> to vector<4x86xf32>
    %984 = tpu.concatenate %983, %982 in 1 : vector<4x86xf32>, vector<4x170xf32> -> vector<4x256xf32>
    %cst_184 = arith.constant 0.000000e+00 : f32
    %985 = vector.shape_cast %926 : vector<1x256xi1> to vector<1x256xi1>
    %986 = vector.broadcast %985 : vector<1x256xi1> to vector<4x256xi1>
    %987 = vector.broadcast %cst_184 : f32 to vector<4x256xf32>
    %988 = arith.select %986, %984, %987 : vector<4x256xi1>, vector<4x256xf32>
    %989 = vector.extract_strided_slice %546 {offsets = [0, 84], sizes = [4, 1], strides = [1, 1]} : vector<4x121xf32> to vector<4x1xf32>
    %990 = vector.broadcast %989 : vector<4x1xf32> to vector<4x256xf32>
    %991 = arith.mulf %988, %990 : vector<4x256xf32>
    %992 = arith.addf %981, %991 : vector<4x256xf32>
    %cst_185 = arith.constant 0.000000e+00 : f32
    %993 = vector.broadcast %cst_185 : f32 to vector<4x250xf32>
    %994 = vector.extract_strided_slice %545 {offsets = [0, 250], sizes = [4, 6], strides = [1, 1]} : vector<4x256xf32> to vector<4x6xf32>
    %995 = tpu.concatenate %994, %993 in 1 : vector<4x6xf32>, vector<4x250xf32> -> vector<4x256xf32>
    %cst_186 = arith.constant 0.000000e+00 : f32
    %996 = vector.shape_cast %926 : vector<1x256xi1> to vector<1x256xi1>
    %997 = vector.broadcast %996 : vector<1x256xi1> to vector<4x256xi1>
    %998 = vector.broadcast %cst_186 : f32 to vector<4x256xf32>
    %999 = arith.select %997, %995, %998 : vector<4x256xi1>, vector<4x256xf32>
    %1000 = vector.extract_strided_slice %546 {offsets = [0, 95], sizes = [4, 1], strides = [1, 1]} : vector<4x121xf32> to vector<4x1xf32>
    %1001 = vector.broadcast %1000 : vector<4x1xf32> to vector<4x256xf32>
    %1002 = arith.mulf %999, %1001 : vector<4x256xf32>
    %1003 = arith.addf %992, %1002 : vector<4x256xf32>
    %c0_i32_187 = arith.constant 0 : i32
    %1004 = vector.broadcast %c0_i32_187 : i32 to vector<1x256xi32>
    %1005 = arith.cmpi sge, %2, %1004 : vector<1x256xi32>
    %c1_i32_188 = arith.constant 1 : i32
    %1006 = vector.broadcast %c1_i32_188 : i32 to vector<1x256xi32>
    %1007 = arith.cmpi slt, %2, %1006 : vector<1x256xi32>
    %1008 = arith.andi %1005, %1007 : vector<1x256xi1>
    %cst_189 = arith.constant 0.000000e+00 : f32
    %1009 = vector.broadcast %cst_189 : f32 to vector<4x225xf32>
    %1010 = vector.extract_strided_slice %545 {offsets = [0, 0], sizes = [4, 31], strides = [1, 1]} : vector<4x256xf32> to vector<4x31xf32>
    %1011 = tpu.concatenate %1009, %1010 in 1 : vector<4x225xf32>, vector<4x31xf32> -> vector<4x256xf32>
    %cst_190 = arith.constant 0.000000e+00 : f32
    %1012 = vector.shape_cast %1008 : vector<1x256xi1> to vector<1x256xi1>
    %1013 = vector.broadcast %1012 : vector<1x256xi1> to vector<4x256xi1>
    %1014 = vector.broadcast %cst_190 : f32 to vector<4x256xf32>
    %1015 = arith.select %1013, %1011, %1014 : vector<4x256xi1>, vector<4x256xf32>
    %1016 = vector.extract_strided_slice %546 {offsets = [0, 30], sizes = [4, 1], strides = [1, 1]} : vector<4x121xf32> to vector<4x1xf32>
    %1017 = vector.broadcast %1016 : vector<4x1xf32> to vector<4x256xf32>
    %1018 = arith.mulf %1015, %1017 : vector<4x256xf32>
    %1019 = arith.addf %1003, %1018 : vector<4x256xf32>
    %cst_191 = arith.constant 0.000000e+00 : f32
    %1020 = vector.broadcast %cst_191 : f32 to vector<4x145xf32>
    %1021 = vector.extract_strided_slice %545 {offsets = [0, 0], sizes = [4, 111], strides = [1, 1]} : vector<4x256xf32> to vector<4x111xf32>
    %1022 = tpu.concatenate %1020, %1021 in 1 : vector<4x145xf32>, vector<4x111xf32> -> vector<4x256xf32>
    %cst_192 = arith.constant 0.000000e+00 : f32
    %1023 = vector.shape_cast %1008 : vector<1x256xi1> to vector<1x256xi1>
    %1024 = vector.broadcast %1023 : vector<1x256xi1> to vector<4x256xi1>
    %1025 = vector.broadcast %cst_192 : f32 to vector<4x256xf32>
    %1026 = arith.select %1024, %1022, %1025 : vector<4x256xi1>, vector<4x256xf32>
    %1027 = vector.extract_strided_slice %546 {offsets = [0, 41], sizes = [4, 1], strides = [1, 1]} : vector<4x121xf32> to vector<4x1xf32>
    %1028 = vector.broadcast %1027 : vector<4x1xf32> to vector<4x256xf32>
    %1029 = arith.mulf %1026, %1028 : vector<4x256xf32>
    %1030 = arith.addf %1019, %1029 : vector<4x256xf32>
    %cst_193 = arith.constant 0.000000e+00 : f32
    %1031 = vector.broadcast %cst_193 : f32 to vector<4x65xf32>
    %1032 = vector.extract_strided_slice %545 {offsets = [0, 0], sizes = [4, 191], strides = [1, 1]} : vector<4x256xf32> to vector<4x191xf32>
    %1033 = tpu.concatenate %1031, %1032 in 1 : vector<4x65xf32>, vector<4x191xf32> -> vector<4x256xf32>
    %cst_194 = arith.constant 0.000000e+00 : f32
    %1034 = vector.shape_cast %1008 : vector<1x256xi1> to vector<1x256xi1>
    %1035 = vector.broadcast %1034 : vector<1x256xi1> to vector<4x256xi1>
    %1036 = vector.broadcast %cst_194 : f32 to vector<4x256xf32>
    %1037 = arith.select %1035, %1033, %1036 : vector<4x256xi1>, vector<4x256xf32>
    %1038 = vector.extract_strided_slice %546 {offsets = [0, 52], sizes = [4, 1], strides = [1, 1]} : vector<4x121xf32> to vector<4x1xf32>
    %1039 = vector.broadcast %1038 : vector<4x1xf32> to vector<4x256xf32>
    %1040 = arith.mulf %1037, %1039 : vector<4x256xf32>
    %1041 = arith.addf %1030, %1040 : vector<4x256xf32>
    %cst_195 = arith.constant 0.000000e+00 : f32
    %1042 = vector.broadcast %cst_195 : f32 to vector<4x15xf32>
    %1043 = vector.extract_strided_slice %545 {offsets = [0, 15], sizes = [4, 241], strides = [1, 1]} : vector<4x256xf32> to vector<4x241xf32>
    %1044 = tpu.concatenate %1043, %1042 in 1 : vector<4x241xf32>, vector<4x15xf32> -> vector<4x256xf32>
    %cst_196 = arith.constant 0.000000e+00 : f32
    %1045 = vector.shape_cast %1008 : vector<1x256xi1> to vector<1x256xi1>
    %1046 = vector.broadcast %1045 : vector<1x256xi1> to vector<4x256xi1>
    %1047 = vector.broadcast %cst_196 : f32 to vector<4x256xf32>
    %1048 = arith.select %1046, %1044, %1047 : vector<4x256xi1>, vector<4x256xf32>
    %1049 = vector.extract_strided_slice %546 {offsets = [0, 63], sizes = [4, 1], strides = [1, 1]} : vector<4x121xf32> to vector<4x1xf32>
    %1050 = vector.broadcast %1049 : vector<4x1xf32> to vector<4x256xf32>
    %1051 = arith.mulf %1048, %1050 : vector<4x256xf32>
    %1052 = arith.addf %1041, %1051 : vector<4x256xf32>
    %cst_197 = arith.constant 0.000000e+00 : f32
    %1053 = vector.broadcast %cst_197 : f32 to vector<4x95xf32>
    %1054 = vector.extract_strided_slice %545 {offsets = [0, 95], sizes = [4, 161], strides = [1, 1]} : vector<4x256xf32> to vector<4x161xf32>
    %1055 = tpu.concatenate %1054, %1053 in 1 : vector<4x161xf32>, vector<4x95xf32> -> vector<4x256xf32>
    %cst_198 = arith.constant 0.000000e+00 : f32
    %1056 = vector.shape_cast %1008 : vector<1x256xi1> to vector<1x256xi1>
    %1057 = vector.broadcast %1056 : vector<1x256xi1> to vector<4x256xi1>
    %1058 = vector.broadcast %cst_198 : f32 to vector<4x256xf32>
    %1059 = arith.select %1057, %1055, %1058 : vector<4x256xi1>, vector<4x256xf32>
    %1060 = vector.extract_strided_slice %546 {offsets = [0, 74], sizes = [4, 1], strides = [1, 1]} : vector<4x121xf32> to vector<4x1xf32>
    %1061 = vector.broadcast %1060 : vector<4x1xf32> to vector<4x256xf32>
    %1062 = arith.mulf %1059, %1061 : vector<4x256xf32>
    %1063 = arith.addf %1052, %1062 : vector<4x256xf32>
    %cst_199 = arith.constant 0.000000e+00 : f32
    %1064 = vector.broadcast %cst_199 : f32 to vector<4x175xf32>
    %1065 = vector.extract_strided_slice %545 {offsets = [0, 175], sizes = [4, 81], strides = [1, 1]} : vector<4x256xf32> to vector<4x81xf32>
    %1066 = tpu.concatenate %1065, %1064 in 1 : vector<4x81xf32>, vector<4x175xf32> -> vector<4x256xf32>
    %cst_200 = arith.constant 0.000000e+00 : f32
    %1067 = vector.shape_cast %1008 : vector<1x256xi1> to vector<1x256xi1>
    %1068 = vector.broadcast %1067 : vector<1x256xi1> to vector<4x256xi1>
    %1069 = vector.broadcast %cst_200 : f32 to vector<4x256xf32>
    %1070 = arith.select %1068, %1066, %1069 : vector<4x256xi1>, vector<4x256xf32>
    %1071 = vector.extract_strided_slice %546 {offsets = [0, 85], sizes = [4, 1], strides = [1, 1]} : vector<4x121xf32> to vector<4x1xf32>
    %1072 = vector.broadcast %1071 : vector<4x1xf32> to vector<4x256xf32>
    %1073 = arith.mulf %1070, %1072 : vector<4x256xf32>
    %1074 = arith.addf %1063, %1073 : vector<4x256xf32>
    %cst_201 = arith.constant 0.000000e+00 : f32
    %1075 = vector.broadcast %cst_201 : f32 to vector<4x255xf32>
    %1076 = vector.extract_strided_slice %545 {offsets = [0, 255], sizes = [4, 1], strides = [1, 1]} : vector<4x256xf32> to vector<4x1xf32>
    %1077 = tpu.concatenate %1076, %1075 in 1 : vector<4x1xf32>, vector<4x255xf32> -> vector<4x256xf32>
    %cst_202 = arith.constant 0.000000e+00 : f32
    %1078 = vector.shape_cast %1008 : vector<1x256xi1> to vector<1x256xi1>
    %1079 = vector.broadcast %1078 : vector<1x256xi1> to vector<4x256xi1>
    %1080 = vector.broadcast %cst_202 : f32 to vector<4x256xf32>
    %1081 = arith.select %1079, %1077, %1080 : vector<4x256xi1>, vector<4x256xf32>
    %1082 = vector.extract_strided_slice %546 {offsets = [0, 96], sizes = [4, 1], strides = [1, 1]} : vector<4x121xf32> to vector<4x1xf32>
    %1083 = vector.broadcast %1082 : vector<4x1xf32> to vector<4x256xf32>
    %1084 = arith.mulf %1081, %1083 : vector<4x256xf32>
    %1085 = arith.addf %1074, %1084 : vector<4x256xf32>
    %c0_203 = arith.constant 0 : index
    %c0_204 = arith.constant 0 : index
    %1086 = vector.load %arg6[%c0_203, %c0_204] : memref<4x1xf32, #tpu.memory_space<vmem>>, vector<4x1xf32>
    %1087 = vector.broadcast %1086 : vector<4x1xf32> to vector<4x256xf32>
    %1088 = arith.addf %1085, %1087 : vector<4x256xf32>
    %c0_205 = arith.constant 0 : index
    %c0_206 = arith.constant 0 : index
    %1089 = vector.load %arg7[%c0_205, %c0_206] : memref<4x4xf32, #tpu.memory_space<vmem>>, vector<4x4xf32>
    %cst_207 = arith.constant dense<0.000000e+00> : vector<4x256xf32>
    %1090 = tpu.matmul %1089, %1088, %cst_207 {dimension_numbers = #tpu.dot_dimension_numbers<[1], [0], [0], [1], [0, 0, 1, 1], [], []>} : vector<4x4xf32>, vector<4x256xf32>, vector<4x256xf32> -> vector<4x256xf32>
    %c0_208 = arith.constant 0 : index
    %c0_209 = arith.constant 0 : index
    %1091 = vector.load %arg8[%c0_208, %c0_209] : memref<4x1xf32, #tpu.memory_space<vmem>>, vector<4x1xf32>
    %1092 = vector.broadcast %1091 : vector<4x1xf32> to vector<4x256xf32>
    %1093 = arith.addf %1090, %1092 : vector<4x256xf32>
    %1094 = arith.mulf %1, %1093 : vector<4x256xf32>
    %c0_210 = arith.constant 0 : index
    %c0_211 = arith.constant 0 : index
    %c0_212 = arith.constant 0 : index
    %1095 = vector.load %arg9[%c0_210, %c0_211, %c0_212] : memref<1x4x256xf32, #tpu.memory_space<vmem>>, vector<1x4x256xf32>
    %1096 = vector.shape_cast %1095 : vector<1x4x256xf32> to vector<4x256xf32>
    %1097 = vector.shape_cast %1094 : vector<4x256xf32> to vector<1x4x256xf32>
    tpu.vector_store %arg9[%c0_210, %c0_211, %c0_212], %1097 {strides = array<i32>} : memref<1x4x256xf32, #tpu.memory_space<vmem>>, vector<1x4x256xf32>,
    return
  }
  func.func @transform_0(%arg0: i32) -> (i32, i32, i32) {
    %c0_i32 = arith.constant 0 : i32
    %c0_i32_0 = arith.constant 0 : i32
    %c0_i32_1 = arith.constant 0 : i32
    return %arg0, %c0_i32, %c0_i32_0 : i32, i32, i32
  }
  func.func @transform_1(%arg0: i32) -> (i32, i32) {
    %c0_i32 = arith.constant 0 : i32
    %c0_i32_0 = arith.constant 0 : i32
    %c0_i32_1 = arith.constant 0 : i32
    return %c0_i32, %c0_i32_0 : i32, i32
  }
  func.func @transform_2(%arg0: i32) -> (i32, i32) {
    %c0_i32 = arith.constant 0 : i32
    %c0_i32_0 = arith.constant 0 : i32
    %c0_i32_1 = arith.constant 0 : i32
    return %c0_i32, %c0_i32_0 : i32, i32
  }
  func.func @transform_3(%arg0: i32) -> (i32, i32) {
    %c0_i32 = arith.constant 0 : i32
    %c0_i32_0 = arith.constant 0 : i32
    %c0_i32_1 = arith.constant 0 : i32
    return %c0_i32, %c0_i32_0 : i32, i32
  }
  func.func @transform_4(%arg0: i32) -> (i32, i32) {
    %c0_i32 = arith.constant 0 : i32
    %c0_i32_0 = arith.constant 0 : i32
    %c0_i32_1 = arith.constant 0 : i32
    return %c0_i32, %c0_i32_0 : i32, i32
  }
  func.func @transform_5(%arg0: i32) -> (i32, i32) {
    %c0_i32 = arith.constant 0 : i32
    %c0_i32_0 = arith.constant 0 : i32
    %c0_i32_1 = arith.constant 0 : i32
    return %c0_i32, %c0_i32_0 : i32, i32
  }
  func.func @transform_6(%arg0: i32) -> (i32, i32) {
    %c0_i32 = arith.constant 0 : i32
    %c0_i32_0 = arith.constant 0 : i32
    %c0_i32_1 = arith.constant 0 : i32
    return %c0_i32, %c0_i32_0 : i32, i32
  }
  func.func @transform_7(%arg0: i32) -> (i32, i32) {
    %c0_i32 = arith.constant 0 : i32
    %c0_i32_0 = arith.constant 0 : i32
    %c0_i32_1 = arith.constant 0 : i32
    return %c0_i32, %c0_i32_0 : i32, i32
  }
  func.func @transform_8(%arg0: i32) -> (i32, i32, i32) {
    %c0_i32 = arith.constant 0 : i32
    %c0_i32_0 = arith.constant 0 : i32
    %c0_i32_1 = arith.constant 0 : i32
    return %arg0, %c0_i32, %c0_i32_0 : i32, i32, i32
  }
}

</mosaic_0001>

<llo_original>
// kernel: lka_forward.1
$region0: #{lka_forward.1}
  #allocation0 [shape = 'u32[]', space=smem, size = 0x4, offset = 0x4, fixed_abs, tag = 'smem constant byte address 0x4 - core index']
  #allocation1 [shape = 'u32[144,128]{1,0:T(1,128)}', space=vmem, size = 0x12000, scoped, tag = 'internal scratch']
  %s0 = inlined_call_operand.vmem [shape: f32[2,4,256], index: 0, kind: input, shape index: {}]
  %s1 = inlined_call_operand.vmem [shape: s32[1,256], index: 1, kind: input, shape index: {}]
  %s2 = inlined_call_operand.vmem [shape: f32[4,49], index: 2, kind: input, shape index: {}]
  %s3 = inlined_call_operand.vmem [shape: f32[4,1], index: 3, kind: input, shape index: {}]
  %s4 = inlined_call_operand.vmem [shape: f32[4,121], index: 4, kind: input, shape index: {}]
  %s5 = inlined_call_operand.vmem [shape: f32[4,1], index: 5, kind: input, shape index: {}]
  %s6 = inlined_call_operand.vmem [shape: f32[4,4], index: 6, kind: input, shape index: {}]
  %s7 = inlined_call_operand.vmem [shape: f32[4,1], index: 7, kind: input, shape index: {}]
  %s8 = inlined_call_operand.vmem [shape: f32[2,4,256], index: 8, kind: output, shape index: {}]
  %s9 = sld [smem:[#allocation0]]
  $region65: #{lka_forward.1} parent=0
    _
  %s11 = ssub.s32 1, %s9
  %s12 = scalar_select 0, %s11, %s9
  loop: start=0, step=1, limit=4
  $region2: #{lka_forward.1} parent=0 // loop_pre_header
    _
  $region3: #{lka_forward.1} parent=0 // loop_header
    %s14 = sphi 0, %s18
    %p15 = scmp.ge.s32.totalorder %s14, 4
    %s24 = sphi 0, %s26
    %s27 = sphi 0, %s24
    %s28 = sphi 0, %s27
    %s44 = sphi 0, %s28
    %s48 = sphi 0, %s48
    %s50 = sphi 0, %s48
    %s51 = sphi 0, %s50
    %s65 = sphi 0, %s51
    %s69 = sphi 0, %s69
    %s71 = sphi 0, %s69
    %s72 = sphi 0, %s71
    %s86 = sphi 0, %s72
    %s90 = sphi 0, %s90
    %s92 = sphi 0, %s90
    %s93 = sphi 0, %s92
    %s107 = sphi 0, %s93
    %s111 = sphi 0, %s111
    %s113 = sphi 0, %s111
    %s114 = sphi 0, %s113
    %s128 = sphi 0, %s114
    %s132 = sphi 0, %s132
    %s134 = sphi 0, %s132
    %s135 = sphi 0, %s134
    %s149 = sphi 0, %s135
    %s153 = sphi 0, %s153
    %s155 = sphi 0, %s153
    %s156 = sphi 0, %s155
    %s170 = sphi 0, %s156
    %s174 = sphi 0, %s174
    %s176 = sphi 0, %s174
    %s177 = sphi 0, %s176
    %s191 = sphi 0, %s177
    %s197 = sphi 0, %s199
    %s200 = sphi 0, %s197
    %s201 = sphi 0, %s200
    %s217 = sphi 0, %s201
  $region4: #{lka_forward.1} parent=0 // loop_header_branch
    %17 = sbr.rel (%p15) target = $region8
  $region5: #{lka_forward.1} parent=0 // loop_body
    %s19 = ssub.s32 %s14, 1
    %s20 = ssub.s32 %s14, 2
    %s21 = sadd.s32 %s14, 1
    %s22 = ssub.s32 %s14, %s21
    %p23 = scmp.eq.s32.totalorder %s22, 0
    %s25 = sadd.s32 %s24, 1
    %s26 = scalar_select %p23, %s24, %s25
    %p29 = pneg %p23
    %p30 = scmp.eq.s32.totalorder %s14, 1
    %p31 = por %p29, %p30
    %p32 = scmp.ne.s32.totalorder %s24, %s27
    %p33 = scmp.eq.s32.totalorder %s14, 0
    %p34 = por %p32, %p33
    %p35 = scmp.ne.s32.totalorder %s24, %s27
    %p36 = scmp.eq.s32.totalorder %s19, 1
    %p37 = por %p35, %p36
    %p38 = scmp.ne.s32.totalorder %s27, %s28
    %p39 = scmp.eq.s32.totalorder %s19, 0
    %p40 = por %p38, %p39
    %p41 = scmp.ne.s32.totalorder %s27, %s28
    %p42 = scmp.eq.s32.totalorder %s20, 1
    %p43 = por %p41, %p42
    %p45 = scmp.ne.s32.totalorder %s28, %s44
    %p46 = scmp.eq.s32.totalorder %s20, 0
    %p47 = por %p45, %p46
    %s49 = sadd.s32 %s48, 1
    %p52 = scmp.eq.s32.totalorder %s14, 1
    %p53 = scmp.ne.s32.totalorder %s48, %s50
    %p54 = scmp.eq.s32.totalorder %s14, 0
    %p55 = por %p53, %p54
    %p56 = scmp.ne.s32.totalorder %s48, %s50
    %p57 = scmp.eq.s32.totalorder %s19, 1
    %p58 = por %p56, %p57
    %p59 = scmp.ne.s32.totalorder %s50, %s51
    %p60 = scmp.eq.s32.totalorder %s19, 0
    %p61 = por %p59, %p60
    %p62 = scmp.ne.s32.totalorder %s50, %s51
    %p63 = scmp.eq.s32.totalorder %s20, 1
    %p64 = por %p62, %p63
    %p66 = scmp.ne.s32.totalorder %s51, %s65
    %p67 = scmp.eq.s32.totalorder %s20, 0
    %p68 = por %p66, %p67
    %s70 = sadd.s32 %s69, 1
    %p73 = scmp.eq.s32.totalorder %s14, 1
    %p74 = scmp.ne.s32.totalorder %s69, %s71
    %p75 = scmp.eq.s32.totalorder %s14, 0
    %p76 = por %p74, %p75
    %p77 = scmp.ne.s32.totalorder %s69, %s71
    %p78 = scmp.eq.s32.totalorder %s19, 1
    %p79 = por %p77, %p78
    %p80 = scmp.ne.s32.totalorder %s71, %s72
    %p81 = scmp.eq.s32.totalorder %s19, 0
    %p82 = por %p80, %p81
    %p83 = scmp.ne.s32.totalorder %s71, %s72
    %p84 = scmp.eq.s32.totalorder %s20, 1
    %p85 = por %p83, %p84
    %p87 = scmp.ne.s32.totalorder %s72, %s86
    %p88 = scmp.eq.s32.totalorder %s20, 0
    %p89 = por %p87, %p88
    %s91 = sadd.s32 %s90, 1
    %p94 = scmp.eq.s32.totalorder %s14, 1
    %p95 = scmp.ne.s32.totalorder %s90, %s92
    %p96 = scmp.eq.s32.totalorder %s14, 0
    %p97 = por %p95, %p96
    %p98 = scmp.ne.s32.totalorder %s90, %s92
    %p99 = scmp.eq.s32.totalorder %s19, 1
    %p100 = por %p98, %p99
    %p101 = scmp.ne.s32.totalorder %s92, %s93
    %p102 = scmp.eq.s32.totalorder %s19, 0
    %p103 = por %p101, %p102
    %p104 = scmp.ne.s32.totalorder %s92, %s93
    %p105 = scmp.eq.s32.totalorder %s20, 1
    %p106 = por %p104, %p105
    %p108 = scmp.ne.s32.totalorder %s93, %s107
    %p109 = scmp.eq.s32.totalorder %s20, 0
    %p110 = por %p108, %p109
    %s112 = sadd.s32 %s111, 1
    %p115 = scmp.eq.s32.totalorder %s14, 1
    %p116 = scmp.ne.s32.totalorder %s111, %s113
    %p117 = scmp.eq.s32.totalorder %s14, 0
    %p118 = por %p116, %p117
    %p119 = scmp.ne.s32.totalorder %s111, %s113
    %p120 = scmp.eq.s32.totalorder %s19, 1
    %p121 = por %p119, %p120
    %p122 = scmp.ne.s32.totalorder %s113, %s114
    %p123 = scmp.eq.s32.totalorder %s19, 0
    %p124 = por %p122, %p123
    %p125 = scmp.ne.s32.totalorder %s113, %s114
    %p126 = scmp.eq.s32.totalorder %s20, 1
    %p127 = por %p125, %p126
    %p129 = scmp.ne.s32.totalorder %s114, %s128
    %p130 = scmp.eq.s32.totalorder %s20, 0
    %p131 = por %p129, %p130
    %s133 = sadd.s32 %s132, 1
    %p136 = scmp.eq.s32.totalorder %s14, 1
    %p137 = scmp.ne.s32.totalorder %s132, %s134
    %p138 = scmp.eq.s32.totalorder %s14, 0
    %p139 = por %p137, %p138
    %p140 = scmp.ne.s32.totalorder %s132, %s134
    %p141 = scmp.eq.s32.totalorder %s19, 1
    %p142 = por %p140, %p141
    %p143 = scmp.ne.s32.totalorder %s134, %s135
    %p144 = scmp.eq.s32.totalorder %s19, 0
    %p145 = por %p143, %p144
    %p146 = scmp.ne.s32.totalorder %s134, %s135
    %p147 = scmp.eq.s32.totalorder %s20, 1
    %p148 = por %p146, %p147
    %p150 = scmp.ne.s32.totalorder %s135, %s149
    %p151 = scmp.eq.s32.totalorder %s20, 0
    %p152 = por %p150, %p151
    %s154 = sadd.s32 %s153, 1
    %p157 = scmp.eq.s32.totalorder %s14, 1
    %p158 = scmp.ne.s32.totalorder %s153, %s155
    %p159 = scmp.eq.s32.totalorder %s14, 0
    %p160 = por %p158, %p159
    %p161 = scmp.ne.s32.totalorder %s153, %s155
    %p162 = scmp.eq.s32.totalorder %s19, 1
    %p163 = por %p161, %p162
    %p164 = scmp.ne.s32.totalorder %s155, %s156
    %p165 = scmp.eq.s32.totalorder %s19, 0
    %p166 = por %p164, %p165
    %p167 = scmp.ne.s32.totalorder %s155, %s156
    %p168 = scmp.eq.s32.totalorder %s20, 1
    %p169 = por %p167, %p168
    %p171 = scmp.ne.s32.totalorder %s156, %s170
    %p172 = scmp.eq.s32.totalorder %s20, 0
    %p173 = por %p171, %p172
    %s175 = sadd.s32 %s174, 1
    %p178 = scmp.eq.s32.totalorder %s14, 1
    %p179 = scmp.ne.s32.totalorder %s174, %s176
    %p180 = scmp.eq.s32.totalorder %s14, 0
    %p181 = por %p179, %p180
    %p182 = scmp.ne.s32.totalorder %s174, %s176
    %p183 = scmp.eq.s32.totalorder %s19, 1
    %p184 = por %p182, %p183
    %p185 = scmp.ne.s32.totalorder %s176, %s177
    %p186 = scmp.eq.s32.totalorder %s19, 0
    %p187 = por %p185, %p186
    %p188 = scmp.ne.s32.totalorder %s176, %s177
    %p189 = scmp.eq.s32.totalorder %s20, 1
    %p190 = por %p188, %p189
    %p192 = scmp.ne.s32.totalorder %s177, %s191
    %p193 = scmp.eq.s32.totalorder %s20, 0
    %p194 = por %p192, %p193
    %s195 = ssub.s32 %s14, %s21
    %p196 = scmp.eq.s32.totalorder %s195, 0
    %s198 = sadd.s32 %s197, 1
    %s199 = scalar_select %p196, %s197, %s198
    %p202 = pneg %p196
    %p203 = scmp.eq.s32.totalorder %s14, 1
    %p204 = por %p202, %p203
    %p205 = scmp.ne.s32.totalorder %s197, %s200
    %p206 = scmp.eq.s32.totalorder %s14, 0
    %p207 = por %p205, %p206
    %p208 = scmp.ne.s32.totalorder %s197, %s200
    %p209 = scmp.eq.s32.totalorder %s19, 1
    %p210 = por %p208, %p209
    %p211 = scmp.ne.s32.totalorder %s200, %s201
    %p212 = scmp.eq.s32.totalorder %s19, 0
    %p213 = por %p211, %p212
    %p214 = scmp.ne.s32.totalorder %s200, %s201
    %p215 = scmp.eq.s32.totalorder %s20, 1
    %p216 = por %p214, %p215
    %p218 = scmp.ne.s32.totalorder %s201, %s217
    %p219 = scmp.eq.s32.totalorder %s20, 0
    %p220 = por %p218, %p219
    %p221 = scmp.le.s32.totalorder 1, %s14
    %p222 = scmp.lt.s32.totalorder %s14, 3
    %p223 = pnand %p221, %p222
    %p224 = pneg %p223
    // Predicated region
    $region9: #{lka_forward.1} parent=5 // pred_check
      _
    $region10: #{lka_forward.1} parent=5 // pred_check_branch
      %226 = sbr.rel (%p223) target = $region12
    $region11: #{lka_forward.1} parent=5 // pred_region
      %s227 = ssub.s32 %s14, 1
      // Predicated region
      $region13: #{lka_forward.1} parent=11 // pred_check
        %p228 = pneg %p61
      $region14: #{lka_forward.1} parent=11 // pred_check_branch
        %230 = sbr.rel (%p228) target = $region16
      $region15: #{lka_forward.1} parent=11 // pred_region
        _
      $region16: #{lka_forward.1} parent=11 // pred_fallthru
        _
      // Predicated region
      $region17: #{lka_forward.1} parent=11 // pred_check
        %p231 = pneg %p82
      $region18: #{lka_forward.1} parent=11 // pred_check_branch
        %233 = sbr.rel (%p231) target = $region20
      $region19: #{lka_forward.1} parent=11 // pred_region
        _
      $region20: #{lka_forward.1} parent=11 // pred_fallthru
        _
      // Predicated region
      $region21: #{lka_forward.1} parent=11 // pred_check
        %p234 = pneg %p103
      $region22: #{lka_forward.1} parent=11 // pred_check_branch
        %236 = sbr.rel (%p234) target = $region24
      $region23: #{lka_forward.1} parent=11 // pred_region
        _
      $region24: #{lka_forward.1} parent=11 // pred_fallthru
        _
      // Predicated region
      $region25: #{lka_forward.1} parent=11 // pred_check
        %p237 = pneg %p124
      $region26: #{lka_forward.1} parent=11 // pred_check_branch
        %239 = sbr.rel (%p237) target = $region28
      $region27: #{lka_forward.1} parent=11 // pred_region
        _
      $region28: #{lka_forward.1} parent=11 // pred_fallthru
        _
      // Predicated region
      $region29: #{lka_forward.1} parent=11 // pred_check
        %p240 = pneg %p145
      $region30: #{lka_forward.1} parent=11 // pred_check_branch
        %242 = sbr.rel (%p240) target = $region32
      $region31: #{lka_forward.1} parent=11 // pred_region
        _
      $region32: #{lka_forward.1} parent=11 // pred_fallthru
        _
      // Predicated region
      $region33: #{lka_forward.1} parent=11 // pred_check
        %p243 = pneg %p166
      $region34: #{lka_forward.1} parent=11 // pred_check_branch
        %245 = sbr.rel (%p243) target = $region36
      $region35: #{lka_forward.1} parent=11 // pred_region
        _
      $region36: #{lka_forward.1} parent=11 // pred_fallthru
        _
      // Predicated region
      $region37: #{lka_forward.1} parent=11 // pred_check
        %p246 = pneg %p187
      $region38: #{lka_forward.1} parent=11 // pred_check_branch
        %248 = sbr.rel (%p246) target = $region40
      $region39: #{lka_forward.1} parent=11 // pred_region
        _
      $region40: #{lka_forward.1} parent=11 // pred_fallthru
        _
    $region12: #{lka_forward.1} parent=5 // pred_fallthru
      _
    %p249 = scmp.lt.s32.totalorder %s14, 2
    // Predicated region
    $region41: #{lka_forward.1} parent=5 // pred_check
      %p250 = pneg %p249
    $region42: #{lka_forward.1} parent=5 // pred_check_branch
      %252 = sbr.rel (%p250) target = $region44
    $region43: #{lka_forward.1} parent=5 // pred_region
      // Predicated region
      $region45: #{lka_forward.1} parent=43 // pred_check
        %p253 = pneg %p34
      $region46: #{lka_forward.1} parent=43 // pred_check_branch
        %255 = sbr.rel (%p253) target = $region48
      $region47: #{lka_forward.1} parent=43 // pred_region
        %p256 = scmp.lt.s32.totalorder %s14, 1
        %s257 = scalar_select %p256, %s14, 1
        %s258 = smul.addr %s257, 2
        %s259 = smul.addr %s258, 4
        %s260 = scalar_lea.vmem %s0, %s259
      $region48: #{lka_forward.1} parent=43 // pred_fallthru
        _
    $region44: #{lka_forward.1} parent=5 // pred_fallthru
      _
    %p261 = scmp.le.s32.totalorder 1, %s14
    %p262 = scmp.lt.s32.totalorder %s14, 3
    %p263 = pnand %p261, %p262
    %p264 = pneg %p263
    // Predicated region
    $region49: #{lka_forward.1} parent=5 // pred_check
      _
    $region50: #{lka_forward.1} parent=5 // pred_check_branch
      %266 = sbr.rel (%p263) target = $region52
    $region51: #{lka_forward.1} parent=5 // pred_region
      %s267 = ssub.s32 %s14, 1
      %p268 = scmp.lt.s32.totalorder %s19, 1
      %s269 = scalar_select %p268, %s19, 1
      %s270 = smul.addr %s269, 2
      %s271 = smul.addr %s270, 4
      %s272 = scalar_lea.vmem %s0, %s271
      %p273 = pneg %p40
      %p274 = pneg %p37
      %p275 = pneg %p61
      %p276 = pneg %p58
      %p277 = pneg %p82
      %p278 = pneg %p79
      %p279 = pneg %p103
      %p280 = pneg %p100
      %p281 = pneg %p124
      %p282 = pneg %p121
      %p283 = pneg %p145
      %p284 = pneg %p142
      %p285 = pneg %p166
      %p286 = pneg %p163
      %p287 = pneg %p187
      %p288 = pneg %p184
      %p289 = pneg %p213
      %p290 = pneg %p210
      %p291 = scmp.lt.s32.totalorder %s19, 1
      %s292 = scalar_select %p291, %s19, 1
      %s293 = smul.addr %s292, 2
      %s294 = smul.addr %s293, 4
      %s295 = scalar_lea.vmem %s8, %s294
      %p296 = scmp.lt.s32.totalorder %s19, 1
      %s297 = scalar_select %p296, %s19, 1
      %s298 = smul.addr %s297, 2
      %s299 = smul.addr %s298, 4
      %s300 = scalar_lea.vmem %s0, %s299
      %p301 = scmp.lt.s32.totalorder %s19, 1
      %s302 = scalar_select %p301, %s19, 1
      %s303 = smul.addr %s302, 2
      %s304 = smul.addr %s303, 4
      %s305 = scalar_lea.vmem %s8, %s304
      %v306 = vld [vmem:[%s300] sm:$0xff]
      %v307 = vld [vmem:[%s1] sm:$0x3]
      %v308 = vld [vmem:[%s2] sm:$0xf]
      %vm309 = vcmp.ge.s32.totalorder %v307, 3
      %vm310 = vcmp.lt.s32.totalorder %v307, 16
      %vm311 = vmand %vm309, %vm310
      %v313 = vcombine.high %v306, %v306
      %314 = vrot.lane.b32.xlu0 %v306, 51
      %v315 = vpop.permute.xlu0 %314
      %316 = vrot.lane.b32.xlu0 %v313, 51
      %v317 = vpop.permute.xlu0 %316
      %vm318 = vcmask 416768
      %v319 = vsel %vm318, %v315, %v317
      %v322 = vsel %vm318, 0.0, %v315
      %v323 = vsel %vm311, 1, 0
      %v324 = vlaneseq
      %v325 = vshrl.u32 %v324, 7
      %v326 = vsub.s32 0, %v325
      %v327 = vrot.slane %v323, %v326
      %v328 = vlaneseq
      %v329 = vshrl.u32 %v328, 7
      %v330 = vsub.s32 1, %v329
      %v331 = vrot.slane %v323, %v330
      %vm332 = vcmp.eq.s32.totalorder %v327, 1
      %vm333 = vcmp.eq.s32.totalorder %v331, 1
      %v334 = vsel %vm332, %v322, 0.0
      %v335 = vsel %vm333, %v319, 0.0
      %337 = vset.pattern.permute.xlu0 0
      %338 = vperm.xlu0 %337, %v308
      %v339 = vpop.permute.xlu0 %338
      %v341 = vmul.f32 %v334, %v339
      %v342 = vmul.f32 %v335, %v339
      %v343 = vadd.f32 %v341, 0.0
      %v344 = vadd.f32 %v342, 0.0
      %345 = vrot.lane.b32.xlu0 %v306, 35
      %v346 = vpop.permute.xlu0 %345
      %347 = vrot.lane.b32.xlu0 %v313, 35
      %v348 = vpop.permute.xlu0 %347
      %vm349 = vcmask 285696
      %v350 = vsel %vm349, %v346, %v348
      %v353 = vsel %vm349, 0.0, %v346
      %v354 = vsel %vm332, %v353, 0.0
      %v355 = vsel %vm333, %v350, 0.0
      %356 = vset.pattern.permute.xlu0 7
      %357 = vperm.xlu0 %356, %v308
      %v358 = vpop.permute.xlu0 %357
      %v360 = vmul.f32 %v354, %v358
      %v361 = vmul.f32 %v355, %v358
      %v362 = vadd.f32 %v343, %v360
      %v363 = vadd.f32 %v344, %v361
      %364 = vrot.lane.b32.xlu0 %v306, 19
      %v365 = vpop.permute.xlu0 %364
      %366 = vrot.lane.b32.xlu0 %v313, 19
      %v367 = vpop.permute.xlu0 %366
      %vm368 = vcmask 154624
      %v369 = vsel %vm368, %v365, %v367
      %v372 = vsel %vm368, 0.0, %v365
      %v373 = vsel %vm332, %v372, 0.0
      %v374 = vsel %vm333, %v369, 0.0
      %375 = vset.pattern.permute.xlu0 14
      %376 = vperm.xlu0 %375, %v308
      %v377 = vpop.permute.xlu0 %376
      %v379 = vmul.f32 %v373, %v377
      %v380 = vmul.f32 %v374, %v377
      %v381 = vadd.f32 %v362, %v379
      %v382 = vadd.f32 %v363, %v380
      %383 = vrot.lane.b32.xlu0 %v306, 3
      %v384 = vpop.permute.xlu0 %383
      %385 = vrot.lane.b32.xlu0 %v313, 3
      %v386 = vpop.permute.xlu0 %385
      %vm387 = vcmask 23552
      %v388 = vsel %vm387, %v384, %v386
      %v391 = vsel %vm387, 0.0, %v384
      %v392 = vsel %vm332, %v391, 0.0
      %v393 = vsel %vm333, %v388, 0.0
      %394 = vset.pattern.permute.xlu0 21
      %395 = vperm.xlu0 %394, %v308
      %v396 = vpop.permute.xlu0 %395
      %v398 = vmul.f32 %v392, %v396
      %v399 = vmul.f32 %v393, %v396
      %v400 = vadd.f32 %v381, %v398
      %v401 = vadd.f32 %v382, %v399
      %402 = vrot.lane.b32.xlu0 %v306, 115
      %v403 = vpop.permute.xlu0 %402
      %404 = vrot.lane.b32.xlu0 %v313, 115
      %v405 = vpop.permute.xlu0 %404
      %vm406 = vcmask 941056
      %v407 = vsel %vm406, %v403, %v405
      %v410 = vsel %vm406, %v405, 0.0
      %v411 = vsel %vm332, %v407, 0.0
      %v412 = vsel %vm333, %v410, 0.0
      %413 = vset.pattern.permute.xlu0 28
      %414 = vperm.xlu0 %413, %v308
      %v415 = vpop.permute.xlu0 %414
      %v417 = vmul.f32 %v411, %v415
      %v418 = vmul.f32 %v412, %v415
      %v419 = vadd.f32 %v400, %v417
      %v420 = vadd.f32 %v401, %v418
      %421 = vrot.lane.b32.xlu0 %v306, 99
      %v422 = vpop.permute.xlu0 %421
      %423 = vrot.lane.b32.xlu0 %v313, 99
      %v424 = vpop.permute.xlu0 %423
      %vm425 = vcmask 809984
      %v426 = vsel %vm425, %v422, %v424
      %v429 = vsel %vm425, %v424, 0.0
      %v430 = vsel %vm332, %v426, 0.0
      %v431 = vsel %vm333, %v429, 0.0
      %432 = vset.pattern.permute.xlu0 35
      %433 = vperm.xlu0 %432, %v308
      %v434 = vpop.permute.xlu0 %433
      %v436 = vmul.f32 %v430, %v434
      %v437 = vmul.f32 %v431, %v434
      %v438 = vadd.f32 %v419, %v436
      %v439 = vadd.f32 %v420, %v437
      %440 = vrot.lane.b32.xlu0 %v306, 83
      %v441 = vpop.permute.xlu0 %440
      %442 = vrot.lane.b32.xlu0 %v313, 83
      %v443 = vpop.permute.xlu0 %442
      %vm444 = vcmask 678912
      %v445 = vsel %vm444, %v441, %v443
      %v448 = vsel %vm444, %v443, 0.0
      %v449 = vsel %vm332, %v445, 0.0
      %v450 = vsel %vm333, %v448, 0.0
      %451 = vset.pattern.permute.xlu0 42
      %452 = vperm.xlu0 %451, %v308
      %v453 = vpop.permute.xlu0 %452
      %v455 = vmul.f32 %v449, %v453
      %v456 = vmul.f32 %v450, %v453
      %v457 = vadd.f32 %v438, %v455
      %v458 = vadd.f32 %v439, %v456
      %vm459 = vcmp.ge.s32.totalorder %v307, 2
      %vm460 = vmand %vm459, %vm310
      %461 = vrot.lane.b32.xlu0 %v306, 50
      %v462 = vpop.permute.xlu0 %461
      %463 = vrot.lane.b32.xlu0 %v313, 50
      %v464 = vpop.permute.xlu0 %463
      %vm465 = vcmask 408576
      %v466 = vsel %vm465, %v462, %v464
      %v469 = vsel %vm465, 0.0, %v462
      %v470 = vsel %vm460, 1, 0
      %v471 = vlaneseq
      %v472 = vshrl.u32 %v471, 7
      %v473 = vsub.s32 0, %v472
      %v474 = vrot.slane %v470, %v473
      %v475 = vlaneseq
      %v476 = vshrl.u32 %v475, 7
      %v477 = vsub.s32 1, %v476
      %v478 = vrot.slane %v470, %v477
      %vm479 = vcmp.eq.s32.totalorder %v474, 1
      %vm480 = vcmp.eq.s32.totalorder %v478, 1
      %v481 = vsel %vm479, %v469, 0.0
      %v482 = vsel %vm480, %v466, 0.0
      %483 = vset.pattern.permute.xlu0 1
      %484 = vperm.xlu0 %483, %v308
      %v485 = vpop.permute.xlu0 %484
      %v487 = vmul.f32 %v481, %v485
      %v488 = vmul.f32 %v482, %v485
      %v489 = vadd.f32 %v457, %v487
      %v490 = vadd.f32 %v458, %v488
      %491 = vrot.lane.b32.xlu0 %v306, 34
      %v492 = vpop.permute.xlu0 %491
      %493 = vrot.lane.b32.xlu0 %v313, 34
      %v494 = vpop.permute.xlu0 %493
      %vm495 = vcmask 277504
      %v496 = vsel %vm495, %v492, %v494
      %v499 = vsel %vm495, 0.0, %v492
      %v500 = vsel %vm479, %v499, 0.0
      %v501 = vsel %vm480, %v496, 0.0
      %502 = vset.pattern.permute.xlu0 8
      %503 = vperm.xlu0 %502, %v308
      %v504 = vpop.permute.xlu0 %503
      %v506 = vmul.f32 %v500, %v504
      %v507 = vmul.f32 %v501, %v504
      %v508 = vadd.f32 %v489, %v506
      %v509 = vadd.f32 %v490, %v507
      %510 = vrot.lane.b32.xlu0 %v306, 18
      %v511 = vpop.permute.xlu0 %510
      %512 = vrot.lane.b32.xlu0 %v313, 18
      %v513 = vpop.permute.xlu0 %512
      %vm514 = vcmask 146432
      %v515 = vsel %vm514, %v511, %v513
      %v518 = vsel %vm514, 0.0, %v511
      %v519 = vsel %vm479, %v518, 0.0
      %v520 = vsel %vm480, %v515, 0.0
      %521 = vset.pattern.permute.xlu0 15
      %522 = vperm.xlu0 %521, %v308
      %v523 = vpop.permute.xlu0 %522
      %v525 = vmul.f32 %v519, %v523
      %v526 = vmul.f32 %v520, %v523
      %v527 = vadd.f32 %v508, %v525
      %v528 = vadd.f32 %v509, %v526
      %529 = vrot.lane.b32.xlu0 %v306, 2
      %v530 = vpop.permute.xlu0 %529
      %531 = vrot.lane.b32.xlu0 %v313, 2
      %v532 = vpop.permute.xlu0 %531
      %vm533 = vcmask 15360
      %v534 = vsel %vm533, %v530, %v532
      %v537 = vsel %vm533, 0.0, %v530
      %v538 = vsel %vm479, %v537, 0.0
      %v539 = vsel %vm480, %v534, 0.0
      %540 = vset.pattern.permute.xlu0 22
      %541 = vperm.xlu0 %540, %v308
      %v542 = vpop.permute.xlu0 %541
      %v544 = vmul.f32 %v538, %v542
      %v545 = vmul.f32 %v539, %v542
      %v546 = vadd.f32 %v527, %v544
      %v547 = vadd.f32 %v528, %v545
      %548 = vrot.lane.b32.xlu0 %v306, 114
      %v549 = vpop.permute.xlu0 %548
      %550 = vrot.lane.b32.xlu0 %v313, 114
      %v551 = vpop.permute.xlu0 %550
      %vm552 = vcmask 932864
      %v553 = vsel %vm552, %v549, %v551
      %v556 = vsel %vm552, %v551, 0.0
      %v557 = vsel %vm479, %v553, 0.0
      %v558 = vsel %vm480, %v556, 0.0
      %559 = vset.pattern.permute.xlu0 29
      %560 = vperm.xlu0 %559, %v308
      %v561 = vpop.permute.xlu0 %560
      %v563 = vmul.f32 %v557, %v561
      %v564 = vmul.f32 %v558, %v561
      %v565 = vadd.f32 %v546, %v563
      %v566 = vadd.f32 %v547, %v564
      %567 = vrot.lane.b32.xlu0 %v306, 98
      %v568 = vpop.permute.xlu0 %567
      %569 = vrot.lane.b32.xlu0 %v313, 98
      %v570 = vpop.permute.xlu0 %569
      %vm571 = vcmask 801792
      %v572 = vsel %vm571, %v568, %v570
      %v575 = vsel %vm571, %v570, 0.0
      %v576 = vsel %vm479, %v572, 0.0
      %v577 = vsel %vm480, %v575, 0.0
      %578 = vset.pattern.permute.xlu0 36
      %579 = vperm.xlu0 %578, %v308
      %v580 = vpop.permute.xlu0 %579
      %v582 = vmul.f32 %v576, %v580
      %v583 = vmul.f32 %v577, %v580
      %v584 = vadd.f32 %v565, %v582
      %v585 = vadd.f32 %v566, %v583
      %586 = vrot.lane.b32.xlu0 %v306, 82
      %v587 = vpop.permute.xlu0 %586
      %588 = vrot.lane.b32.xlu0 %v313, 82
      %v589 = vpop.permute.xlu0 %588
      %vm590 = vcmask 670720
      %v591 = vsel %vm590, %v587, %v589
      %v594 = vsel %vm590, %v589, 0.0
      %v595 = vsel %vm479, %v591, 0.0
      %v596 = vsel %vm480, %v594, 0.0
      %597 = vset.pattern.permute.xlu0 43
      %598 = vperm.xlu0 %597, %v308
      %v599 = vpop.permute.xlu0 %598
      %v601 = vmul.f32 %v595, %v599
      %v602 = vmul.f32 %v596, %v599
      %v603 = vadd.f32 %v584, %v601
      %v604 = vadd.f32 %v585, %v602
      %vm605 = vcmp.ge.s32.totalorder %v307, 1
      %vm606 = vmand %vm605, %vm310
      %607 = vrot.lane.b32.xlu0 %v306, 49
      %v608 = vpop.permute.xlu0 %607
      %609 = vrot.lane.b32.xlu0 %v313, 49
      %v610 = vpop.permute.xlu0 %609
      %vm611 = vcmask 400384
      %v612 = vsel %vm611, %v608, %v610
      %v615 = vsel %vm611, 0.0, %v608
      %v616 = vsel %vm606, 1, 0
      %v617 = vlaneseq
      %v618 = vshrl.u32 %v617, 7
      %v619 = vsub.s32 0, %v618
      %v620 = vrot.slane %v616, %v619
      %v621 = vlaneseq
      %v622 = vshrl.u32 %v621, 7
      %v623 = vsub.s32 1, %v622
      %v624 = vrot.slane %v616, %v623
      %vm625 = vcmp.eq.s32.totalorder %v620, 1
      %vm626 = vcmp.eq.s32.totalorder %v624, 1
      %v627 = vsel %vm625, %v615, 0.0
      %v628 = vsel %vm626, %v612, 0.0
      %629 = vset.pattern.permute.xlu0 2
      %630 = vperm.xlu0 %629, %v308
      %v631 = vpop.permute.xlu0 %630
      %v633 = vmul.f32 %v627, %v631
      %v634 = vmul.f32 %v628, %v631
      %v635 = vadd.f32 %v603, %v633
      %v636 = vadd.f32 %v604, %v634
      %637 = vrot.lane.b32.xlu0 %v306, 33
      %v638 = vpop.permute.xlu0 %637
      %639 = vrot.lane.b32.xlu0 %v313, 33
      %v640 = vpop.permute.xlu0 %639
      %vm641 = vcmask 269312
      %v642 = vsel %vm641, %v638, %v640
      %v645 = vsel %vm641, 0.0, %v638
      %v646 = vsel %vm625, %v645, 0.0
      %v647 = vsel %vm626, %v642, 0.0
      %648 = vset.pattern.permute.xlu0 9
      %649 = vperm.xlu0 %648, %v308
      %v650 = vpop.permute.xlu0 %649
      %v652 = vmul.f32 %v646, %v650
      %v653 = vmul.f32 %v647, %v650
      %v654 = vadd.f32 %v635, %v652
      %v655 = vadd.f32 %v636, %v653
      %656 = vrot.lane.b32.xlu0 %v306, 17
      %v657 = vpop.permute.xlu0 %656
      %658 = vrot.lane.b32.xlu0 %v313, 17
      %v659 = vpop.permute.xlu0 %658
      %vm660 = vcmask 138240
      %v661 = vsel %vm660, %v657, %v659
      %v664 = vsel %vm660, 0.0, %v657
      %v665 = vsel %vm625, %v664, 0.0
      %v666 = vsel %vm626, %v661, 0.0
      %667 = vset.pattern.permute.xlu0 16
      %668 = vperm.xlu0 %667, %v308
      %v669 = vpop.permute.xlu0 %668
      %v671 = vmul.f32 %v665, %v669
      %v672 = vmul.f32 %v666, %v669
      %v673 = vadd.f32 %v654, %v671
      %v674 = vadd.f32 %v655, %v672
      %675 = vrot.lane.b32.xlu0 %v306, 1
      %v676 = vpop.permute.xlu0 %675
      %677 = vrot.lane.b32.xlu0 %v313, 1
      %v678 = vpop.permute.xlu0 %677
      %vm679 = vcmask 7168
      %v680 = vsel %vm679, %v676, %v678
      %v683 = vsel %vm679, 0.0, %v676
      %v684 = vsel %vm625, %v683, 0.0
      %v685 = vsel %vm626, %v680, 0.0
      %686 = vset.pattern.permute.xlu0 23
      %687 = vperm.xlu0 %686, %v308
      %v688 = vpop.permute.xlu0 %687
      %v690 = vmul.f32 %v684, %v688
      %v691 = vmul.f32 %v685, %v688
      %v692 = vadd.f32 %v673, %v690
      %v693 = vadd.f32 %v674, %v691
      %694 = vrot.lane.b32.xlu0 %v306, 113
      %v695 = vpop.permute.xlu0 %694
      %696 = vrot.lane.b32.xlu0 %v313, 113
      %v697 = vpop.permute.xlu0 %696
      %vm698 = vcmask 924672
      %v699 = vsel %vm698, %v695, %v697
      %v702 = vsel %vm698, %v697, 0.0
      %v703 = vsel %vm625, %v699, 0.0
      %v704 = vsel %vm626, %v702, 0.0
      %705 = vset.pattern.permute.xlu0 30
      %706 = vperm.xlu0 %705, %v308
      %v707 = vpop.permute.xlu0 %706
      %v709 = vmul.f32 %v703, %v707
      %v710 = vmul.f32 %v704, %v707
      %v711 = vadd.f32 %v692, %v709
      %v712 = vadd.f32 %v693, %v710
      %713 = vrot.lane.b32.xlu0 %v306, 97
      %v714 = vpop.permute.xlu0 %713
      %715 = vrot.lane.b32.xlu0 %v313, 97
      %v716 = vpop.permute.xlu0 %715
      %vm717 = vcmask 793600
      %v718 = vsel %vm717, %v714, %v716
      %v721 = vsel %vm717, %v716, 0.0
      %v722 = vsel %vm625, %v718, 0.0
      %v723 = vsel %vm626, %v721, 0.0
      %724 = vset.pattern.permute.xlu0 37
      %725 = vperm.xlu0 %724, %v308
      %v726 = vpop.permute.xlu0 %725
      %v728 = vmul.f32 %v722, %v726
      %v729 = vmul.f32 %v723, %v726
      %v730 = vadd.f32 %v711, %v728
      %v731 = vadd.f32 %v712, %v729
      %732 = vrot.lane.b32.xlu0 %v306, 81
      %v733 = vpop.permute.xlu0 %732
      %734 = vrot.lane.b32.xlu0 %v313, 81
      %v735 = vpop.permute.xlu0 %734
      %vm736 = vcmask 662528
      %v737 = vsel %vm736, %v733, %v735
      %v740 = vsel %vm736, %v735, 0.0
      %v741 = vsel %vm625, %v737, 0.0
      %v742 = vsel %vm626, %v740, 0.0
      %743 = vset.pattern.permute.xlu0 44
      %744 = vperm.xlu0 %743, %v308
      %v745 = vpop.permute.xlu0 %744
      %v747 = vmul.f32 %v741, %v745
      %v748 = vmul.f32 %v742, %v745
      %v749 = vadd.f32 %v730, %v747
      %v750 = vadd.f32 %v731, %v748
      %751 = vrot.lane.b32.xlu0 %v306, 48
      %v752 = vpop.permute.xlu0 %751
      %753 = vrot.lane.b32.xlu0 %v313, 48
      %v754 = vpop.permute.xlu0 %753
      %vm755 = vcmask 392192
      %v756 = vsel %vm755, %v752, %v754
      %v759 = vsel %vm755, 0.0, %v752
      %760 = vset.pattern.permute.xlu0 3
      %761 = vperm.xlu0 %760, %v308
      %v762 = vpop.permute.xlu0 %761
      %v764 = vmul.f32 %v759, %v762
      %v765 = vmul.f32 %v756, %v762
      %v766 = vadd.f32 %v749, %v764
      %v767 = vadd.f32 %v750, %v765
      %768 = vrot.lane.b32.xlu0 %v306, 32
      %v769 = vpop.permute.xlu0 %768
      %770 = vrot.lane.b32.xlu0 %v313, 32
      %v771 = vpop.permute.xlu0 %770
      %vm772 = vcmask 261120
      %v773 = vsel %vm772, %v769, %v771
      %v776 = vsel %vm772, 0.0, %v769
      %777 = vset.pattern.permute.xlu0 10
      %778 = vperm.xlu0 %777, %v308
      %v779 = vpop.permute.xlu0 %778
      %v781 = vmul.f32 %v776, %v779
      %v782 = vmul.f32 %v773, %v779
      %v783 = vadd.f32 %v766, %v781
      %v784 = vadd.f32 %v767, %v782
      %785 = vrot.lane.b32.xlu0 %v306, 16
      %v786 = vpop.permute.xlu0 %785
      %787 = vrot.lane.b32.xlu0 %v313, 16
      %v788 = vpop.permute.xlu0 %787
      %vm789 = vcmask 130048
      %v790 = vsel %vm789, %v786, %v788
      %v793 = vsel %vm789, 0.0, %v786
      %794 = vset.pattern.permute.xlu0 17
      %795 = vperm.xlu0 %794, %v308
      %v796 = vpop.permute.xlu0 %795
      %v798 = vmul.f32 %v793, %v796
      %v799 = vmul.f32 %v790, %v796
      %v800 = vadd.f32 %v783, %v798
      %v801 = vadd.f32 %v784, %v799
      %802 = vset.pattern.permute.xlu0 24
      %803 = vperm.xlu0 %802, %v308
      %v804 = vpop.permute.xlu0 %803
      %v806 = vunpack.c.l.s4 839922192
      %v807 = vunpack.c.0.s8 %v806
      %v808 = vlaneseq
      %v809 = vshrl.u32 %v808, 7
      %v810 = vsub.s32 %v807, %v809
      %v811 = vrot.slane %v804, %v810
      %v813 = vmul.f32 %v306, %v811
      %v815 = vcombine.high %v813, %v813
      %v817 = vadd.f32 %v800, %v813
      %v818 = vadd.f32 %v801, %v815
      %819 = vrot.lane.b32.xlu0 %v306, 112
      %v820 = vpop.permute.xlu0 %819
      %821 = vrot.lane.b32.xlu0 %v313, 112
      %v822 = vpop.permute.xlu0 %821
      %vm823 = vcmask 916480
      %v824 = vsel %vm823, %v820, %v822
      %v827 = vsel %vm823, %v822, 0.0
      %828 = vset.pattern.permute.xlu0 31
      %829 = vperm.xlu0 %828, %v308
      %v830 = vpop.permute.xlu0 %829
      %v832 = vmul.f32 %v824, %v830
      %v833 = vmul.f32 %v827, %v830
      %v834 = vadd.f32 %v817, %v832
      %v835 = vadd.f32 %v818, %v833
      %836 = vrot.lane.b32.xlu0 %v306, 96
      %v837 = vpop.permute.xlu0 %836
      %838 = vrot.lane.b32.xlu0 %v313, 96
      %v839 = vpop.permute.xlu0 %838
      %vm840 = vcmask 785408
      %v841 = vsel %vm840, %v837, %v839
      %v844 = vsel %vm840, %v839, 0.0
      %845 = vset.pattern.permute.xlu0 38
      %846 = vperm.xlu0 %845, %v308
      %v847 = vpop.permute.xlu0 %846
      %v849 = vmul.f32 %v841, %v847
      %v850 = vmul.f32 %v844, %v847
      %v851 = vadd.f32 %v834, %v849
      %v852 = vadd.f32 %v835, %v850
      %853 = vrot.lane.b32.xlu0 %v306, 80
      %v854 = vpop.permute.xlu0 %853
      %855 = vrot.lane.b32.xlu0 %v313, 80
      %v856 = vpop.permute.xlu0 %855
      %vm857 = vcmask 654336
      %v858 = vsel %vm857, %v854, %v856
      %v861 = vsel %vm857, %v856, 0.0
      %862 = vset.pattern.permute.xlu0 45
      %863 = vperm.xlu0 %862, %v308
      %v864 = vpop.permute.xlu0 %863
      %v866 = vmul.f32 %v858, %v864
      %v867 = vmul.f32 %v861, %v864
      %v868 = vadd.f32 %v851, %v866
      %v869 = vadd.f32 %v852, %v867
      %vm870 = vcmp.ge.s32.totalorder %v307, 0
      %vm871 = vcmp.lt.s32.totalorder %v307, 15
      %vm872 = vmand %vm870, %vm871
      %873 = vrot.lane.b32.xlu0 %v306, 47
      %v874 = vpop.permute.xlu0 %873
      %875 = vrot.lane.b32.xlu0 %v313, 47
      %v876 = vpop.permute.xlu0 %875
      %vm877 = vcmask 384000
      %v878 = vsel %vm877, %v874, %v876
      %v881 = vsel %vm877, 0.0, %v874
      %v882 = vsel %vm872, 1, 0
      %v883 = vlaneseq
      %v884 = vshrl.u32 %v883, 7
      %v885 = vsub.s32 0, %v884
      %v886 = vrot.slane %v882, %v885
      %v887 = vlaneseq
      %v888 = vshrl.u32 %v887, 7
      %v889 = vsub.s32 1, %v888
      %v890 = vrot.slane %v882, %v889
      %vm891 = vcmp.eq.s32.totalorder %v886, 1
      %vm892 = vcmp.eq.s32.totalorder %v890, 1
      %v893 = vsel %vm891, %v881, 0.0
      %v894 = vsel %vm892, %v878, 0.0
      %895 = vset.pattern.permute.xlu0 4
      %896 = vperm.xlu0 %895, %v308
      %v897 = vpop.permute.xlu0 %896
      %v899 = vmul.f32 %v893, %v897
      %v900 = vmul.f32 %v894, %v897
      %v901 = vadd.f32 %v868, %v899
      %v902 = vadd.f32 %v869, %v900
      %903 = vrot.lane.b32.xlu0 %v306, 31
      %v904 = vpop.permute.xlu0 %903
      %905 = vrot.lane.b32.xlu0 %v313, 31
      %v906 = vpop.permute.xlu0 %905
      %vm907 = vcmask 252928
      %v908 = vsel %vm907, %v904, %v906
      %v911 = vsel %vm907, 0.0, %v904
      %v912 = vsel %vm891, %v911, 0.0
      %v913 = vsel %vm892, %v908, 0.0
      %914 = vset.pattern.permute.xlu0 11
      %915 = vperm.xlu0 %914, %v308
      %v916 = vpop.permute.xlu0 %915
      %v918 = vmul.f32 %v912, %v916
      %v919 = vmul.f32 %v913, %v916
      %v920 = vadd.f32 %v901, %v918
      %v921 = vadd.f32 %v902, %v919
      %922 = vrot.lane.b32.xlu0 %v306, 15
      %v923 = vpop.permute.xlu0 %922
      %924 = vrot.lane.b32.xlu0 %v313, 15
      %v925 = vpop.permute.xlu0 %924
      %vm926 = vcmask 121856
      %v927 = vsel %vm926, %v923, %v925
      %v930 = vsel %vm926, 0.0, %v923
      %v931 = vsel %vm891, %v930, 0.0
      %v932 = vsel %vm892, %v927, 0.0
      %933 = vset.pattern.permute.xlu0 18
      %934 = vperm.xlu0 %933, %v308
      %v935 = vpop.permute.xlu0 %934
      %v937 = vmul.f32 %v931, %v935
      %v938 = vmul.f32 %v932, %v935
      %v939 = vadd.f32 %v920, %v937
      %v940 = vadd.f32 %v921, %v938
      %941 = vrot.lane.b32.xlu0 %v306, 127
      %v942 = vpop.permute.xlu0 %941
      %943 = vrot.lane.b32.xlu0 %v313, 127
      %v944 = vpop.permute.xlu0 %943
      %vm945 = vcmask 1039360
      %v946 = vsel %vm945, %v942, %v944
      %v949 = vsel %vm945, %v944, 0.0
      %v950 = vsel %vm891, %v946, 0.0
      %v951 = vsel %vm892, %v949, 0.0
      %952 = vset.pattern.permute.xlu0 25
      %953 = vperm.xlu0 %952, %v308
      %v954 = vpop.permute.xlu0 %953
      %v956 = vmul.f32 %v950, %v954
      %v957 = vmul.f32 %v951, %v954
      %v958 = vadd.f32 %v939, %v956
      %v959 = vadd.f32 %v940, %v957
      %960 = vrot.lane.b32.xlu0 %v306, 111
      %v961 = vpop.permute.xlu0 %960
      %962 = vrot.lane.b32.xlu0 %v313, 111
      %v963 = vpop.permute.xlu0 %962
      %vm964 = vcmask 908288
      %v965 = vsel %vm964, %v961, %v963
      %v968 = vsel %vm964, %v963, 0.0
      %v969 = vsel %vm891, %v965, 0.0
      %v970 = vsel %vm892, %v968, 0.0
      %971 = vset.pattern.permute.xlu0 32
      %972 = vperm.xlu0 %971, %v308
      %v973 = vpop.permute.xlu0 %972
      %v975 = vmul.f32 %v969, %v973
      %v976 = vmul.f32 %v970, %v973
      %v977 = vadd.f32 %v958, %v975
      %v978 = vadd.f32 %v959, %v976
      %979 = vrot.lane.b32.xlu0 %v306, 95
      %v980 = vpop.permute.xlu0 %979
      %981 = vrot.lane.b32.xlu0 %v313, 95
      %v982 = vpop.permute.xlu0 %981
      %vm983 = vcmask 777216
      %v984 = vsel %vm983, %v980, %v982
      %v987 = vsel %vm983, %v982, 0.0
      %v988 = vsel %vm891, %v984, 0.0
      %v989 = vsel %vm892, %v987, 0.0
      %990 = vset.pattern.permute.xlu0 39
      %991 = vperm.xlu0 %990, %v308
      %v992 = vpop.permute.xlu0 %991
      %v994 = vmul.f32 %v988, %v992
      %v995 = vmul.f32 %v989, %v992
      %v996 = vadd.f32 %v977, %v994
      %v997 = vadd.f32 %v978, %v995
      %998 = vrot.lane.b32.xlu0 %v306, 79
      %v999 = vpop.permute.xlu0 %998
      %1000 = vrot.lane.b32.xlu0 %v313, 79
      %v1001 = vpop.permute.xlu0 %1000
      %vm1002 = vcmask 646144
      %v1003 = vsel %vm1002, %v999, %v1001
      %v1006 = vsel %vm1002, %v1001, 0.0
      %v1007 = vsel %vm891, %v1003, 0.0
      %v1008 = vsel %vm892, %v1006, 0.0
      %1009 = vset.pattern.permute.xlu0 46
      %1010 = vperm.xlu0 %1009, %v308
      %v1011 = vpop.permute.xlu0 %1010
      %v1013 = vmul.f32 %v1007, %v1011
      %v1014 = vmul.f32 %v1008, %v1011
      %v1015 = vadd.f32 %v996, %v1013
      %v1016 = vadd.f32 %v997, %v1014
      %vm1017 = vcmp.lt.s32.totalorder %v307, 14
      %vm1018 = vmand %vm870, %vm1017
      %1019 = vrot.lane.b32.xlu0 %v306, 46
      %v1020 = vpop.permute.xlu0 %1019
      %1021 = vrot.lane.b32.xlu0 %v313, 46
      %v1022 = vpop.permute.xlu0 %1021
      %vm1023 = vcmask 375808
      %v1024 = vsel %vm1023, %v1020, %v1022
      %v1027 = vsel %vm1023, 0.0, %v1020
      %v1028 = vsel %vm1018, 1, 0
      %v1029 = vlaneseq
      %v1030 = vshrl.u32 %v1029, 7
      %v1031 = vsub.s32 0, %v1030
      %v1032 = vrot.slane %v1028, %v1031
      %v1033 = vlaneseq
      %v1034 = vshrl.u32 %v1033, 7
      %v1035 = vsub.s32 1, %v1034
      %v1036 = vrot.slane %v1028, %v1035
      %vm1037 = vcmp.eq.s32.totalorder %v1032, 1
      %vm1038 = vcmp.eq.s32.totalorder %v1036, 1
      %v1039 = vsel %vm1037, %v1027, 0.0
      %v1040 = vsel %vm1038, %v1024, 0.0
      %1041 = vset.pattern.permute.xlu0 5
      %1042 = vperm.xlu0 %1041, %v308
      %v1043 = vpop.permute.xlu0 %1042
      %v1045 = vmul.f32 %v1039, %v1043
      %v1046 = vmul.f32 %v1040, %v1043
      %v1047 = vadd.f32 %v1015, %v1045
      %v1048 = vadd.f32 %v1016, %v1046
      %1049 = vrot.lane.b32.xlu0 %v306, 30
      %v1050 = vpop.permute.xlu0 %1049
      %1051 = vrot.lane.b32.xlu0 %v313, 30
      %v1052 = vpop.permute.xlu0 %1051
      %vm1053 = vcmask 244736
      %v1054 = vsel %vm1053, %v1050, %v1052
      %v1057 = vsel %vm1053, 0.0, %v1050
      %v1058 = vsel %vm1037, %v1057, 0.0
      %v1059 = vsel %vm1038, %v1054, 0.0
      %1060 = vset.pattern.permute.xlu0 12
      %1061 = vperm.xlu0 %1060, %v308
      %v1062 = vpop.permute.xlu0 %1061
      %v1064 = vmul.f32 %v1058, %v1062
      %v1065 = vmul.f32 %v1059, %v1062
      %v1066 = vadd.f32 %v1047, %v1064
      %v1067 = vadd.f32 %v1048, %v1065
      %1068 = vrot.lane.b32.xlu0 %v306, 14
      %v1069 = vpop.permute.xlu0 %1068
      %1070 = vrot.lane.b32.xlu0 %v313, 14
      %v1071 = vpop.permute.xlu0 %1070
      %vm1072 = vcmask 113664
      %v1073 = vsel %vm1072, %v1069, %v1071
      %v1076 = vsel %vm1072, 0.0, %v1069
      %v1077 = vsel %vm1037, %v1076, 0.0
      %v1078 = vsel %vm1038, %v1073, 0.0
      %1079 = vset.pattern.permute.xlu0 19
      %1080 = vperm.xlu0 %1079, %v308
      %v1081 = vpop.permute.xlu0 %1080
      %v1083 = vmul.f32 %v1077, %v1081
      %v1084 = vmul.f32 %v1078, %v1081
      %v1085 = vadd.f32 %v1066, %v1083
      %v1086 = vadd.f32 %v1067, %v1084
      %1087 = vrot.lane.b32.xlu0 %v306, 126
      %v1088 = vpop.permute.xlu0 %1087
      %1089 = vrot.lane.b32.xlu0 %v313, 126
      %v1090 = vpop.permute.xlu0 %1089
      %vm1091 = vcmask 1031168
      %v1092 = vsel %vm1091, %v1088, %v1090
      %v1095 = vsel %vm1091, %v1090, 0.0
      %v1096 = vsel %vm1037, %v1092, 0.0
      %v1097 = vsel %vm1038, %v1095, 0.0
      %1098 = vset.pattern.permute.xlu0 26
      %1099 = vperm.xlu0 %1098, %v308
      %v1100 = vpop.permute.xlu0 %1099
      %v1102 = vmul.f32 %v1096, %v1100
      %v1103 = vmul.f32 %v1097, %v1100
      %v1104 = vadd.f32 %v1085, %v1102
      %v1105 = vadd.f32 %v1086, %v1103
      %1106 = vrot.lane.b32.xlu0 %v306, 110
      %v1107 = vpop.permute.xlu0 %1106
      %1108 = vrot.lane.b32.xlu0 %v313, 110
      %v1109 = vpop.permute.xlu0 %1108
      %vm1110 = vcmask 900096
      %v1111 = vsel %vm1110, %v1107, %v1109
      %v1114 = vsel %vm1110, %v1109, 0.0
      %v1115 = vsel %vm1037, %v1111, 0.0
      %v1116 = vsel %vm1038, %v1114, 0.0
      %1117 = vset.pattern.permute.xlu0 33
      %1118 = vperm.xlu0 %1117, %v308
      %v1119 = vpop.permute.xlu0 %1118
      %v1121 = vmul.f32 %v1115, %v1119
      %v1122 = vmul.f32 %v1116, %v1119
      %v1123 = vadd.f32 %v1104, %v1121
      %v1124 = vadd.f32 %v1105, %v1122
      %1125 = vrot.lane.b32.xlu0 %v306, 94
      %v1126 = vpop.permute.xlu0 %1125
      %1127 = vrot.lane.b32.xlu0 %v313, 94
      %v1128 = vpop.permute.xlu0 %1127
      %vm1129 = vcmask 769024
      %v1130 = vsel %vm1129, %v1126, %v1128
      %v1133 = vsel %vm1129, %v1128, 0.0
      %v1134 = vsel %vm1037, %v1130, 0.0
      %v1135 = vsel %vm1038, %v1133, 0.0
      %1136 = vset.pattern.permute.xlu0 40
      %1137 = vperm.xlu0 %1136, %v308
      %v1138 = vpop.permute.xlu0 %1137
      %v1140 = vmul.f32 %v1134, %v1138
      %v1141 = vmul.f32 %v1135, %v1138
      %v1142 = vadd.f32 %v1123, %v1140
      %v1143 = vadd.f32 %v1124, %v1141
      %1144 = vrot.lane.b32.xlu0 %v306, 78
      %v1145 = vpop.permute.xlu0 %1144
      %1146 = vrot.lane.b32.xlu0 %v313, 78
      %v1147 = vpop.permute.xlu0 %1146
      %vm1148 = vcmask 637952
      %v1149 = vsel %vm1148, %v1145, %v1147
      %v1152 = vsel %vm1148, %v1147, 0.0
      %v1153 = vsel %vm1037, %v1149, 0.0
      %v1154 = vsel %vm1038, %v1152, 0.0
      %1155 = vset.pattern.permute.xlu0 47
      %1156 = vperm.xlu0 %1155, %v308
      %v1157 = vpop.permute.xlu0 %1156
      %v1159 = vmul.f32 %v1153, %v1157
      %v1160 = vmul.f32 %v1154, %v1157
      %v1161 = vadd.f32 %v1142, %v1159
      %v1162 = vadd.f32 %v1143, %v1160
      %vm1163 = vcmp.lt.s32.totalorder %v307, 13
      %vm1164 = vmand %vm870, %vm1163
      %1165 = vrot.lane.b32.xlu0 %v306, 45
      %v1166 = vpop.permute.xlu0 %1165
      %1167 = vrot.lane.b32.xlu0 %v313, 45
      %v1168 = vpop.permute.xlu0 %1167
      %vm1169 = vcmask 367616
      %v1170 = vsel %vm1169, %v1166, %v1168
      %v1173 = vsel %vm1169, 0.0, %v1166
      %v1174 = vsel %vm1164, 1, 0
      %v1175 = vlaneseq
      %v1176 = vshrl.u32 %v1175, 7
      %v1177 = vsub.s32 0, %v1176
      %v1178 = vrot.slane %v1174, %v1177
      %v1179 = vlaneseq
      %v1180 = vshrl.u32 %v1179, 7
      %v1181 = vsub.s32 1, %v1180
      %v1182 = vrot.slane %v1174, %v1181
      %vm1183 = vcmp.eq.s32.totalorder %v1178, 1
      %vm1184 = vcmp.eq.s32.totalorder %v1182, 1
      %v1185 = vsel %vm1183, %v1173, 0.0
      %v1186 = vsel %vm1184, %v1170, 0.0
      %1187 = vset.pattern.permute.xlu0 6
      %1188 = vperm.xlu0 %1187, %v308
      %v1189 = vpop.permute.xlu0 %1188
      %v1191 = vmul.f32 %v1185, %v1189
      %v1192 = vmul.f32 %v1186, %v1189
      %v1193 = vadd.f32 %v1161, %v1191
      %v1194 = vadd.f32 %v1162, %v1192
      %1195 = vrot.lane.b32.xlu0 %v306, 29
      %v1196 = vpop.permute.xlu0 %1195
      %1197 = vrot.lane.b32.xlu0 %v313, 29
      %v1198 = vpop.permute.xlu0 %1197
      %vm1199 = vcmask 236544
      %v1200 = vsel %vm1199, %v1196, %v1198
      %v1203 = vsel %vm1199, 0.0, %v1196
      %v1204 = vsel %vm1183, %v1203, 0.0
      %v1205 = vsel %vm1184, %v1200, 0.0
      %1206 = vset.pattern.permute.xlu0 13
      %1207 = vperm.xlu0 %1206, %v308
      %v1208 = vpop.permute.xlu0 %1207
      %v1210 = vmul.f32 %v1204, %v1208
      %v1211 = vmul.f32 %v1205, %v1208
      %v1212 = vadd.f32 %v1193, %v1210
      %v1213 = vadd.f32 %v1194, %v1211
      %1214 = vrot.lane.b32.xlu0 %v306, 13
      %v1215 = vpop.permute.xlu0 %1214
      %1216 = vrot.lane.b32.xlu0 %v313, 13
      %v1217 = vpop.permute.xlu0 %1216
      %vm1218 = vcmask 105472
      %v1219 = vsel %vm1218, %v1215, %v1217
      %v1222 = vsel %vm1218, 0.0, %v1215
      %v1223 = vsel %vm1183, %v1222, 0.0
      %v1224 = vsel %vm1184, %v1219, 0.0
      %1225 = vset.pattern.permute.xlu0 20
      %1226 = vperm.xlu0 %1225, %v308
      %v1227 = vpop.permute.xlu0 %1226
      %v1229 = vmul.f32 %v1223, %v1227
      %v1230 = vmul.f32 %v1224, %v1227
      %v1231 = vadd.f32 %v1212, %v1229
      %v1232 = vadd.f32 %v1213, %v1230
      %1233 = vrot.lane.b32.xlu0 %v306, 125
      %v1234 = vpop.permute.xlu0 %1233
      %1235 = vrot.lane.b32.xlu0 %v313, 125
      %v1236 = vpop.permute.xlu0 %1235
      %vm1237 = vcmask 1022976
      %v1238 = vsel %vm1237, %v1234, %v1236
      %v1241 = vsel %vm1237, %v1236, 0.0
      %v1242 = vsel %vm1183, %v1238, 0.0
      %v1243 = vsel %vm1184, %v1241, 0.0
      %1244 = vset.pattern.permute.xlu0 27
      %1245 = vperm.xlu0 %1244, %v308
      %v1246 = vpop.permute.xlu0 %1245
      %v1248 = vmul.f32 %v1242, %v1246
      %v1249 = vmul.f32 %v1243, %v1246
      %v1250 = vadd.f32 %v1231, %v1248
      %v1251 = vadd.f32 %v1232, %v1249
      %1252 = vrot.lane.b32.xlu0 %v306, 109
      %v1253 = vpop.permute.xlu0 %1252
      %1254 = vrot.lane.b32.xlu0 %v313, 109
      %v1255 = vpop.permute.xlu0 %1254
      %vm1256 = vcmask 891904
      %v1257 = vsel %vm1256, %v1253, %v1255
      %v1260 = vsel %vm1256, %v1255, 0.0
      %v1261 = vsel %vm1183, %v1257, 0.0
      %v1262 = vsel %vm1184, %v1260, 0.0
      %1263 = vset.pattern.permute.xlu0 34
      %1264 = vperm.xlu0 %1263, %v308
      %v1265 = vpop.permute.xlu0 %1264
      %v1267 = vmul.f32 %v1261, %v1265
      %v1268 = vmul.f32 %v1262, %v1265
      %v1269 = vadd.f32 %v1250, %v1267
      %v1270 = vadd.f32 %v1251, %v1268
      %1271 = vrot.lane.b32.xlu0 %v306, 93
      %v1272 = vpop.permute.xlu0 %1271
      %1273 = vrot.lane.b32.xlu0 %v313, 93
      %v1274 = vpop.permute.xlu0 %1273
      %vm1275 = vcmask 760832
      %v1276 = vsel %vm1275, %v1272, %v1274
      %v1279 = vsel %vm1275, %v1274, 0.0
      %v1280 = vsel %vm1183, %v1276, 0.0
      %v1281 = vsel %vm1184, %v1279, 0.0
      %1282 = vset.pattern.permute.xlu0 41
      %1283 = vperm.xlu0 %1282, %v308
      %v1284 = vpop.permute.xlu0 %1283
      %v1286 = vmul.f32 %v1280, %v1284
      %v1287 = vmul.f32 %v1281, %v1284
      %v1288 = vadd.f32 %v1269, %v1286
      %v1289 = vadd.f32 %v1270, %v1287
      %1290 = vrot.lane.b32.xlu0 %v306, 77
      %v1291 = vpop.permute.xlu0 %1290
      %1292 = vrot.lane.b32.xlu0 %v313, 77
      %v1293 = vpop.permute.xlu0 %1292
      %vm1294 = vcmask 629760
      %v1295 = vsel %vm1294, %v1291, %v1293
      %v1298 = vsel %vm1294, %v1293, 0.0
      %v1299 = vsel %vm1183, %v1295, 0.0
      %v1300 = vsel %vm1184, %v1298, 0.0
      %1301 = vset.pattern.permute.xlu0 48
      %1302 = vperm.xlu0 %1301, %v308
      %v1303 = vpop.permute.xlu0 %1302
      %v1305 = vmul.f32 %v1299, %v1303
      %v1306 = vmul.f32 %v1300, %v1303
      %v1307 = vadd.f32 %v1288, %v1305
      %v1308 = vadd.f32 %v1289, %v1306
      %v1309 = vld [vmem:[%s3] sm:$0xf]
      %1311 = vset.pattern.permute.xlu0 0
      %1312 = vperm.xlu0 %1311, %v1309
      %v1313 = vpop.permute.xlu0 %1312
      %v1315 = vadd.f32 %v1307, %v1313
      %v1316 = vadd.f32 %v1308, %v1313
      %v1317 = vld [vmem:[%s4] sm:$0xf]
      %vm1318 = vcmp.ge.s32.totalorder %v307, 15
      %vm1319 = vmand %vm1318, %vm310
      %1321 = vrot.lane.b32.xlu0 %v1315, 127
      %v1322 = vpop.permute.xlu0 %1321
      %v1324 = vsel %vm945, 0.0, %v1322
      %v1325 = vsel %vm1319, 1, 0
      %v1326 = vlaneseq
      %v1327 = vshrl.u32 %v1326, 7
      %v1328 = vsub.s32 0, %v1327
      %v1329 = vrot.slane %v1325, %v1328
      %v1330 = vlaneseq
      %v1331 = vshrl.u32 %v1330, 7
      %v1332 = vsub.s32 1, %v1331
      %v1333 = vrot.slane %v1325, %v1332
      %vm1334 = vcmp.eq.s32.totalorder %v1329, 1
      %vm1335 = vcmp.eq.s32.totalorder %v1333, 1
      %v1336 = vsel %vm1335, %v1324, 0.0
      %1338 = vset.pattern.permute.xlu0 24
      %1339 = vperm.xlu0 %1338, %v1317
      %v1340 = vpop.permute.xlu0 %1339
      %v1342 = vmul.f32 %v1340, 0.0
      %v1343 = vmul.f32 %v1336, %v1340
      %v1344 = vadd.f32 %v1342, 0.0
      %v1345 = vadd.f32 %v1343, 0.0
      %1346 = vrot.lane.b32.xlu0 %v1315, 47
      %v1347 = vpop.permute.xlu0 %1346
      %v1349 = vsel %vm877, 0.0, %v1347
      %v1350 = vsel %vm1335, %v1349, 0.0
      %1351 = vset.pattern.permute.xlu0 35
      %1352 = vperm.xlu0 %1351, %v1317
      %v1353 = vpop.permute.xlu0 %1352
      %v1355 = vmul.f32 %v1353, 0.0
      %v1356 = vmul.f32 %v1350, %v1353
      %v1357 = vadd.f32 %v1344, %v1355
      %v1358 = vadd.f32 %v1345, %v1356
      %1360 = vrot.lane.b32.xlu0 %v1315, 95
      %v1361 = vpop.permute.xlu0 %1360
      %1362 = vrot.lane.b32.xlu0 %v1316, 95
      %v1363 = vpop.permute.xlu0 %1362
      %v1364 = vsel %vm983, %v1361, %v1363
      %v1367 = vsel %vm983, 0.0, %v1361
      %v1368 = vsel %vm1334, %v1367, 0.0
      %v1369 = vsel %vm1335, %v1364, 0.0
      %1370 = vset.pattern.permute.xlu0 46
      %1371 = vperm.xlu0 %1370, %v1317
      %v1372 = vpop.permute.xlu0 %1371
      %v1374 = vmul.f32 %v1368, %v1372
      %v1375 = vmul.f32 %v1369, %v1372
      %v1376 = vadd.f32 %v1357, %v1374
      %v1377 = vadd.f32 %v1358, %v1375
      %1378 = vrot.lane.b32.xlu0 %v1315, 15
      %v1379 = vpop.permute.xlu0 %1378
      %1380 = vrot.lane.b32.xlu0 %v1316, 15
      %v1381 = vpop.permute.xlu0 %1380
      %v1382 = vsel %vm926, %v1379, %v1381
      %v1385 = vsel %vm926, 0.0, %v1379
      %v1386 = vsel %vm1334, %v1385, 0.0
      %v1387 = vsel %vm1335, %v1382, 0.0
      %1388 = vset.pattern.permute.xlu0 57
      %1389 = vperm.xlu0 %1388, %v1317
      %v1390 = vpop.permute.xlu0 %1389
      %v1392 = vmul.f32 %v1386, %v1390
      %v1393 = vmul.f32 %v1387, %v1390
      %v1394 = vadd.f32 %v1376, %v1392
      %v1395 = vadd.f32 %v1377, %v1393
      %1396 = vrot.lane.b32.xlu0 %v1315, 63
      %v1397 = vpop.permute.xlu0 %1396
      %1398 = vrot.lane.b32.xlu0 %v1316, 63
      %v1399 = vpop.permute.xlu0 %1398
      %vm1400 = vcmask 515072
      %v1401 = vsel %vm1400, %v1397, %v1399
      %v1404 = vsel %vm1400, %v1399, 0.0
      %v1405 = vsel %vm1334, %v1401, 0.0
      %v1406 = vsel %vm1335, %v1404, 0.0
      %1407 = vset.pattern.permute.xlu0 68
      %1408 = vperm.xlu0 %1407, %v1317
      %v1409 = vpop.permute.xlu0 %1408
      %v1411 = vmul.f32 %v1405, %v1409
      %v1412 = vmul.f32 %v1406, %v1409
      %v1413 = vadd.f32 %v1394, %v1411
      %v1414 = vadd.f32 %v1395, %v1412
      %1415 = vrot.lane.b32.xlu0 %v1316, 111
      %v1416 = vpop.permute.xlu0 %1415
      %v1418 = vsel %vm964, %v1416, 0.0
      %v1419 = vsel %vm1334, %v1418, 0.0
      %1420 = vset.pattern.permute.xlu0 79
      %1421 = vperm.xlu0 %1420, %v1317
      %v1422 = vpop.permute.xlu0 %1421
      %v1424 = vmul.f32 %v1419, %v1422
      %v1425 = vmul.f32 %v1422, 0.0
      %v1426 = vadd.f32 %v1413, %v1424
      %v1427 = vadd.f32 %v1414, %v1425
      %1428 = vrot.lane.b32.xlu0 %v1316, 31
      %v1429 = vpop.permute.xlu0 %1428
      %v1431 = vsel %vm907, %v1429, 0.0
      %v1432 = vsel %vm1334, %v1431, 0.0
      %1433 = vset.pattern.permute.xlu0 90
      %1434 = vperm.xlu0 %1433, %v1317
      %v1435 = vpop.permute.xlu0 %1434
      %v1437 = vmul.f32 %v1432, %v1435
      %v1438 = vmul.f32 %v1435, 0.0
      %v1439 = vadd.f32 %v1426, %v1437
      %v1440 = vadd.f32 %v1427, %v1438
      %vm1441 = vcmp.ge.s32.totalorder %v307, 10
      %vm1442 = vmand %vm1441, %vm310
      %1443 = vrot.lane.b32.xlu0 %v1315, 122
      %v1444 = vpop.permute.xlu0 %1443
      %vm1446 = vcmask 998400
      %v1447 = vsel %vm1446, 0.0, %v1444
      %v1448 = vsel %vm1442, 1, 0
      %v1449 = vlaneseq
      %v1450 = vshrl.u32 %v1449, 7
      %v1451 = vsub.s32 0, %v1450
      %v1452 = vrot.slane %v1448, %v1451
      %v1453 = vlaneseq
      %v1454 = vshrl.u32 %v1453, 7
      %v1455 = vsub.s32 1, %v1454
      %v1456 = vrot.slane %v1448, %v1455
      %vm1457 = vcmp.eq.s32.totalorder %v1452, 1
      %vm1458 = vcmp.eq.s32.totalorder %v1456, 1
      %v1459 = vsel %vm1458, %v1447, 0.0
      %1460 = vset.pattern.permute.xlu0 25
      %1461 = vperm.xlu0 %1460, %v1317
      %v1462 = vpop.permute.xlu0 %1461
      %v1464 = vmul.f32 %v1462, 0.0
      %v1465 = vmul.f32 %v1459, %v1462
      %v1466 = vadd.f32 %v1439, %v1464
      %v1467 = vadd.f32 %v1440, %v1465
      %1468 = vrot.lane.b32.xlu0 %v1315, 42
      %v1469 = vpop.permute.xlu0 %1468
      %vm1471 = vcmask 343040
      %v1472 = vsel %vm1471, 0.0, %v1469
      %v1473 = vsel %vm1458, %v1472, 0.0
      %1474 = vset.pattern.permute.xlu0 36
      %1475 = vperm.xlu0 %1474, %v1317
      %v1476 = vpop.permute.xlu0 %1475
      %v1478 = vmul.f32 %v1476, 0.0
      %v1479 = vmul.f32 %v1473, %v1476
      %v1480 = vadd.f32 %v1466, %v1478
      %v1481 = vadd.f32 %v1467, %v1479
      %1482 = vrot.lane.b32.xlu0 %v1315, 90
      %v1483 = vpop.permute.xlu0 %1482
      %1484 = vrot.lane.b32.xlu0 %v1316, 90
      %v1485 = vpop.permute.xlu0 %1484
      %vm1486 = vcmask 736256
      %v1487 = vsel %vm1486, %v1483, %v1485
      %v1490 = vsel %vm1486, 0.0, %v1483
      %v1491 = vsel %vm1457, %v1490, 0.0
      %v1492 = vsel %vm1458, %v1487, 0.0
      %1493 = vset.pattern.permute.xlu0 47
      %1494 = vperm.xlu0 %1493, %v1317
      %v1495 = vpop.permute.xlu0 %1494
      %v1497 = vmul.f32 %v1491, %v1495
      %v1498 = vmul.f32 %v1492, %v1495
      %v1499 = vadd.f32 %v1480, %v1497
      %v1500 = vadd.f32 %v1481, %v1498
      %1501 = vrot.lane.b32.xlu0 %v1315, 10
      %v1502 = vpop.permute.xlu0 %1501
      %1503 = vrot.lane.b32.xlu0 %v1316, 10
      %v1504 = vpop.permute.xlu0 %1503
      %vm1505 = vcmask 80896
      %v1506 = vsel %vm1505, %v1502, %v1504
      %v1509 = vsel %vm1505, 0.0, %v1502
      %v1510 = vsel %vm1457, %v1509, 0.0
      %v1511 = vsel %vm1458, %v1506, 0.0
      %1512 = vset.pattern.permute.xlu0 58
      %1513 = vperm.xlu0 %1512, %v1317
      %v1514 = vpop.permute.xlu0 %1513
      %v1516 = vmul.f32 %v1510, %v1514
      %v1517 = vmul.f32 %v1511, %v1514
      %v1518 = vadd.f32 %v1499, %v1516
      %v1519 = vadd.f32 %v1500, %v1517
      %1520 = vrot.lane.b32.xlu0 %v1315, 58
      %v1521 = vpop.permute.xlu0 %1520
      %1522 = vrot.lane.b32.xlu0 %v1316, 58
      %v1523 = vpop.permute.xlu0 %1522
      %vm1524 = vcmask 474112
      %v1525 = vsel %vm1524, %v1521, %v1523
      %v1528 = vsel %vm1524, %v1523, 0.0
      %v1529 = vsel %vm1457, %v1525, 0.0
      %v1530 = vsel %vm1458, %v1528, 0.0
      %1531 = vset.pattern.permute.xlu0 69
      %1532 = vperm.xlu0 %1531, %v1317
      %v1533 = vpop.permute.xlu0 %1532
      %v1535 = vmul.f32 %v1529, %v1533
      %v1536 = vmul.f32 %v1530, %v1533
      %v1537 = vadd.f32 %v1518, %v1535
      %v1538 = vadd.f32 %v1519, %v1536
      %1539 = vrot.lane.b32.xlu0 %v1316, 106
      %v1540 = vpop.permute.xlu0 %1539
      %vm1542 = vcmask 867328
      %v1543 = vsel %vm1542, %v1540, 0.0
      %v1544 = vsel %vm1457, %v1543, 0.0
      %1545 = vset.pattern.permute.xlu0 80
      %1546 = vperm.xlu0 %1545, %v1317
      %v1547 = vpop.permute.xlu0 %1546
      %v1549 = vmul.f32 %v1544, %v1547
      %v1550 = vmul.f32 %v1547, 0.0
      %v1551 = vadd.f32 %v1537, %v1549
      %v1552 = vadd.f32 %v1538, %v1550
      %1553 = vrot.lane.b32.xlu0 %v1316, 26
      %v1554 = vpop.permute.xlu0 %1553
      %vm1556 = vcmask 211968
      %v1557 = vsel %vm1556, %v1554, 0.0
      %v1558 = vsel %vm1457, %v1557, 0.0
      %1559 = vset.pattern.permute.xlu0 91
      %1560 = vperm.xlu0 %1559, %v1317
      %v1561 = vpop.permute.xlu0 %1560
      %v1563 = vmul.f32 %v1558, %v1561
      %v1564 = vmul.f32 %v1561, 0.0
      %v1565 = vadd.f32 %v1551, %v1563
      %v1566 = vadd.f32 %v1552, %v1564
      %vm1567 = vcmp.ge.s32.totalorder %v307, 5
      %vm1568 = vmand %vm1567, %vm310
      %1569 = vrot.lane.b32.xlu0 %v1315, 117
      %v1570 = vpop.permute.xlu0 %1569
      %vm1572 = vcmask 957440
      %v1573 = vsel %vm1572, 0.0, %v1570
      %v1574 = vsel %vm1568, 1, 0
      %v1575 = vlaneseq
      %v1576 = vshrl.u32 %v1575, 7
      %v1577 = vsub.s32 0, %v1576
      %v1578 = vrot.slane %v1574, %v1577
      %v1579 = vlaneseq
      %v1580 = vshrl.u32 %v1579, 7
      %v1581 = vsub.s32 1, %v1580
      %v1582 = vrot.slane %v1574, %v1581
      %vm1583 = vcmp.eq.s32.totalorder %v1578, 1
      %vm1584 = vcmp.eq.s32.totalorder %v1582, 1
      %v1585 = vsel %vm1584, %v1573, 0.0
      %1586 = vset.pattern.permute.xlu0 26
      %1587 = vperm.xlu0 %1586, %v1317
      %v1588 = vpop.permute.xlu0 %1587
      %v1590 = vmul.f32 %v1588, 0.0
      %v1591 = vmul.f32 %v1585, %v1588
      %v1592 = vadd.f32 %v1565, %v1590
      %v1593 = vadd.f32 %v1566, %v1591
      %1594 = vrot.lane.b32.xlu0 %v1315, 37
      %v1595 = vpop.permute.xlu0 %1594
      %vm1597 = vcmask 302080
      %v1598 = vsel %vm1597, 0.0, %v1595
      %v1599 = vsel %vm1584, %v1598, 0.0
      %1600 = vset.pattern.permute.xlu0 37
      %1601 = vperm.xlu0 %1600, %v1317
      %v1602 = vpop.permute.xlu0 %1601
      %v1604 = vmul.f32 %v1602, 0.0
      %v1605 = vmul.f32 %v1599, %v1602
      %v1606 = vadd.f32 %v1592, %v1604
      %v1607 = vadd.f32 %v1593, %v1605
      %1608 = vrot.lane.b32.xlu0 %v1315, 85
      %v1609 = vpop.permute.xlu0 %1608
      %1610 = vrot.lane.b32.xlu0 %v1316, 85
      %v1611 = vpop.permute.xlu0 %1610
      %vm1612 = vcmask 695296
      %v1613 = vsel %vm1612, %v1609, %v1611
      %v1616 = vsel %vm1612, 0.0, %v1609
      %v1617 = vsel %vm1583, %v1616, 0.0
      %v1618 = vsel %vm1584, %v1613, 0.0
      %1619 = vset.pattern.permute.xlu0 48
      %1620 = vperm.xlu0 %1619, %v1317
      %v1621 = vpop.permute.xlu0 %1620
      %v1623 = vmul.f32 %v1617, %v1621
      %v1624 = vmul.f32 %v1618, %v1621
      %v1625 = vadd.f32 %v1606, %v1623
      %v1626 = vadd.f32 %v1607, %v1624
      %1627 = vrot.lane.b32.xlu0 %v1315, 5
      %v1628 = vpop.permute.xlu0 %1627
      %1629 = vrot.lane.b32.xlu0 %v1316, 5
      %v1630 = vpop.permute.xlu0 %1629
      %vm1631 = vcmask 39936
      %v1632 = vsel %vm1631, %v1628, %v1630
      %v1635 = vsel %vm1631, 0.0, %v1628
      %v1636 = vsel %vm1583, %v1635, 0.0
      %v1637 = vsel %vm1584, %v1632, 0.0
      %1638 = vset.pattern.permute.xlu0 59
      %1639 = vperm.xlu0 %1638, %v1317
      %v1640 = vpop.permute.xlu0 %1639
      %v1642 = vmul.f32 %v1636, %v1640
      %v1643 = vmul.f32 %v1637, %v1640
      %v1644 = vadd.f32 %v1625, %v1642
      %v1645 = vadd.f32 %v1626, %v1643
      %1646 = vrot.lane.b32.xlu0 %v1315, 53
      %v1647 = vpop.permute.xlu0 %1646
      %1648 = vrot.lane.b32.xlu0 %v1316, 53
      %v1649 = vpop.permute.xlu0 %1648
      %vm1650 = vcmask 433152
      %v1651 = vsel %vm1650, %v1647, %v1649
      %v1654 = vsel %vm1650, %v1649, 0.0
      %v1655 = vsel %vm1583, %v1651, 0.0
      %v1656 = vsel %vm1584, %v1654, 0.0
      %1657 = vset.pattern.permute.xlu0 70
      %1658 = vperm.xlu0 %1657, %v1317
      %v1659 = vpop.permute.xlu0 %1658
      %v1661 = vmul.f32 %v1655, %v1659
      %v1662 = vmul.f32 %v1656, %v1659
      %v1663 = vadd.f32 %v1644, %v1661
      %v1664 = vadd.f32 %v1645, %v1662
      %1665 = vrot.lane.b32.xlu0 %v1316, 101
      %v1666 = vpop.permute.xlu0 %1665
      %vm1668 = vcmask 826368
      %v1669 = vsel %vm1668, %v1666, 0.0
      %v1670 = vsel %vm1583, %v1669, 0.0
      %1671 = vset.pattern.permute.xlu0 81
      %1672 = vperm.xlu0 %1671, %v1317
      %v1673 = vpop.permute.xlu0 %1672
      %v1675 = vmul.f32 %v1670, %v1673
      %v1676 = vmul.f32 %v1673, 0.0
      %v1677 = vadd.f32 %v1663, %v1675
      %v1678 = vadd.f32 %v1664, %v1676
      %1679 = vrot.lane.b32.xlu0 %v1316, 21
      %v1680 = vpop.permute.xlu0 %1679
      %vm1682 = vcmask 171008
      %v1683 = vsel %vm1682, %v1680, 0.0
      %v1684 = vsel %vm1583, %v1683, 0.0
      %1685 = vset.pattern.permute.xlu0 92
      %1686 = vperm.xlu0 %1685, %v1317
      %v1687 = vpop.permute.xlu0 %1686
      %v1689 = vmul.f32 %v1684, %v1687
      %v1690 = vmul.f32 %v1687, 0.0
      %v1691 = vadd.f32 %v1677, %v1689
      %v1692 = vadd.f32 %v1678, %v1690
      %1693 = vrot.lane.b32.xlu0 %v1315, 112
      %v1694 = vpop.permute.xlu0 %1693
      %v1696 = vsel %vm823, 0.0, %v1694
      %1697 = vset.pattern.permute.xlu0 27
      %1698 = vperm.xlu0 %1697, %v1317
      %v1699 = vpop.permute.xlu0 %1698
      %v1701 = vmul.f32 %v1699, 0.0
      %v1702 = vmul.f32 %v1696, %v1699
      %v1703 = vadd.f32 %v1691, %v1701
      %v1704 = vadd.f32 %v1692, %v1702
      %1705 = vrot.lane.b32.xlu0 %v1315, 32
      %v1706 = vpop.permute.xlu0 %1705
      %v1708 = vsel %vm772, 0.0, %v1706
      %1709 = vset.pattern.permute.xlu0 38
      %1710 = vperm.xlu0 %1709, %v1317
      %v1711 = vpop.permute.xlu0 %1710
      %v1713 = vmul.f32 %v1711, 0.0
      %v1714 = vmul.f32 %v1708, %v1711
      %v1715 = vadd.f32 %v1703, %v1713
      %v1716 = vadd.f32 %v1704, %v1714
      %1717 = vrot.lane.b32.xlu0 %v1315, 80
      %v1718 = vpop.permute.xlu0 %1717
      %1719 = vrot.lane.b32.xlu0 %v1316, 80
      %v1720 = vpop.permute.xlu0 %1719
      %v1721 = vsel %vm857, %v1718, %v1720
      %v1724 = vsel %vm857, 0.0, %v1718
      %1725 = vset.pattern.permute.xlu0 49
      %1726 = vperm.xlu0 %1725, %v1317
      %v1727 = vpop.permute.xlu0 %1726
      %v1729 = vmul.f32 %v1724, %v1727
      %v1730 = vmul.f32 %v1721, %v1727
      %v1731 = vadd.f32 %v1715, %v1729
      %v1732 = vadd.f32 %v1716, %v1730
      %1733 = vset.pattern.permute.xlu0 60
      %1734 = vperm.xlu0 %1733, %v1317
      %v1735 = vpop.permute.xlu0 %1734
      %v1737 = vmul.f32 %v1315, %v1735
      %v1738 = vmul.f32 %v1316, %v1735
      %v1739 = vadd.f32 %v1731, %v1737
      %v1740 = vadd.f32 %v1732, %v1738
      %1741 = vrot.lane.b32.xlu0 %v1315, 48
      %v1742 = vpop.permute.xlu0 %1741
      %1743 = vrot.lane.b32.xlu0 %v1316, 48
      %v1744 = vpop.permute.xlu0 %1743
      %v1745 = vsel %vm755, %v1742, %v1744
      %v1748 = vsel %vm755, %v1744, 0.0
      %1749 = vset.pattern.permute.xlu0 71
      %1750 = vperm.xlu0 %1749, %v1317
      %v1751 = vpop.permute.xlu0 %1750
      %v1753 = vmul.f32 %v1745, %v1751
      %v1754 = vmul.f32 %v1748, %v1751
      %v1755 = vadd.f32 %v1739, %v1753
      %v1756 = vadd.f32 %v1740, %v1754
      %1757 = vrot.lane.b32.xlu0 %v1316, 96
      %v1758 = vpop.permute.xlu0 %1757
      %v1760 = vsel %vm840, %v1758, 0.0
      %1761 = vset.pattern.permute.xlu0 82
      %1762 = vperm.xlu0 %1761, %v1317
      %v1763 = vpop.permute.xlu0 %1762
      %v1765 = vmul.f32 %v1760, %v1763
      %v1766 = vmul.f32 %v1763, 0.0
      %v1767 = vadd.f32 %v1755, %v1765
      %v1768 = vadd.f32 %v1756, %v1766
      %1769 = vrot.lane.b32.xlu0 %v1316, 16
      %v1770 = vpop.permute.xlu0 %1769
      %v1772 = vsel %vm789, %v1770, 0.0
      %1773 = vset.pattern.permute.xlu0 93
      %1774 = vperm.xlu0 %1773, %v1317
      %v1775 = vpop.permute.xlu0 %1774
      %v1777 = vmul.f32 %v1772, %v1775
      %v1778 = vmul.f32 %v1775, 0.0
      %v1779 = vadd.f32 %v1767, %v1777
      %v1780 = vadd.f32 %v1768, %v1778
      %vm1781 = vcmp.lt.s32.totalorder %v307, 11
      %vm1782 = vmand %vm870, %vm1781
      %1783 = vrot.lane.b32.xlu0 %v1315, 107
      %v1784 = vpop.permute.xlu0 %1783
      %vm1786 = vcmask 875520
      %v1787 = vsel %vm1786, 0.0, %v1784
      %v1788 = vsel %vm1782, 1, 0
      %v1789 = vlaneseq
      %v1790 = vshrl.u32 %v1789, 7
      %v1791 = vsub.s32 0, %v1790
      %v1792 = vrot.slane %v1788, %v1791
      %v1793 = vlaneseq
      %v1794 = vshrl.u32 %v1793, 7
      %v1795 = vsub.s32 1, %v1794
      %v1796 = vrot.slane %v1788, %v1795
      %vm1797 = vcmp.eq.s32.totalorder %v1792, 1
      %vm1798 = vcmp.eq.s32.totalorder %v1796, 1
      %v1799 = vsel %vm1798, %v1787, 0.0
      %1800 = vset.pattern.permute.xlu0 28
      %1801 = vperm.xlu0 %1800, %v1317
      %v1802 = vpop.permute.xlu0 %1801
      %v1804 = vmul.f32 %v1802, 0.0
      %v1805 = vmul.f32 %v1799, %v1802
      %v1806 = vadd.f32 %v1779, %v1804
      %v1807 = vadd.f32 %v1780, %v1805
      %1808 = vrot.lane.b32.xlu0 %v1315, 27
      %v1809 = vpop.permute.xlu0 %1808
      %vm1811 = vcmask 220160
      %v1812 = vsel %vm1811, 0.0, %v1809
      %v1813 = vsel %vm1798, %v1812, 0.0
      %1814 = vset.pattern.permute.xlu0 39
      %1815 = vperm.xlu0 %1814, %v1317
      %v1816 = vpop.permute.xlu0 %1815
      %v1818 = vmul.f32 %v1816, 0.0
      %v1819 = vmul.f32 %v1813, %v1816
      %v1820 = vadd.f32 %v1806, %v1818
      %v1821 = vadd.f32 %v1807, %v1819
      %1822 = vrot.lane.b32.xlu0 %v1315, 75
      %v1823 = vpop.permute.xlu0 %1822
      %1824 = vrot.lane.b32.xlu0 %v1316, 75
      %v1825 = vpop.permute.xlu0 %1824
      %vm1826 = vcmask 613376
      %v1827 = vsel %vm1826, %v1823, %v1825
      %v1830 = vsel %vm1826, 0.0, %v1823
      %v1831 = vsel %vm1797, %v1830, 0.0
      %v1832 = vsel %vm1798, %v1827, 0.0
      %1833 = vset.pattern.permute.xlu0 50
      %1834 = vperm.xlu0 %1833, %v1317
      %v1835 = vpop.permute.xlu0 %1834
      %v1837 = vmul.f32 %v1831, %v1835
      %v1838 = vmul.f32 %v1832, %v1835
      %v1839 = vadd.f32 %v1820, %v1837
      %v1840 = vadd.f32 %v1821, %v1838
      %1841 = vrot.lane.b32.xlu0 %v1315, 123
      %v1842 = vpop.permute.xlu0 %1841
      %1843 = vrot.lane.b32.xlu0 %v1316, 123
      %v1844 = vpop.permute.xlu0 %1843
      %vm1845 = vcmask 1006592
      %v1846 = vsel %vm1845, %v1842, %v1844
      %v1849 = vsel %vm1845, %v1844, 0.0
      %v1850 = vsel %vm1797, %v1846, 0.0
      %v1851 = vsel %vm1798, %v1849, 0.0
      %1852 = vset.pattern.permute.xlu0 61
      %1853 = vperm.xlu0 %1852, %v1317
      %v1854 = vpop.permute.xlu0 %1853
      %v1856 = vmul.f32 %v1850, %v1854
      %v1857 = vmul.f32 %v1851, %v1854
      %v1858 = vadd.f32 %v1839, %v1856
      %v1859 = vadd.f32 %v1840, %v1857
      %1860 = vrot.lane.b32.xlu0 %v1315, 43
      %v1861 = vpop.permute.xlu0 %1860
      %1862 = vrot.lane.b32.xlu0 %v1316, 43
      %v1863 = vpop.permute.xlu0 %1862
      %vm1864 = vcmask 351232
      %v1865 = vsel %vm1864, %v1861, %v1863
      %v1868 = vsel %vm1864, %v1863, 0.0
      %v1869 = vsel %vm1797, %v1865, 0.0
      %v1870 = vsel %vm1798, %v1868, 0.0
      %1871 = vset.pattern.permute.xlu0 72
      %1872 = vperm.xlu0 %1871, %v1317
      %v1873 = vpop.permute.xlu0 %1872
      %v1875 = vmul.f32 %v1869, %v1873
      %v1876 = vmul.f32 %v1870, %v1873
      %v1877 = vadd.f32 %v1858, %v1875
      %v1878 = vadd.f32 %v1859, %v1876
      %1879 = vrot.lane.b32.xlu0 %v1316, 91
      %v1880 = vpop.permute.xlu0 %1879
      %vm1882 = vcmask 744448
      %v1883 = vsel %vm1882, %v1880, 0.0
      %v1884 = vsel %vm1797, %v1883, 0.0
      %1885 = vset.pattern.permute.xlu0 83
      %1886 = vperm.xlu0 %1885, %v1317
      %v1887 = vpop.permute.xlu0 %1886
      %v1889 = vmul.f32 %v1884, %v1887
      %v1890 = vmul.f32 %v1887, 0.0
      %v1891 = vadd.f32 %v1877, %v1889
      %v1892 = vadd.f32 %v1878, %v1890
      %1893 = vrot.lane.b32.xlu0 %v1316, 11
      %v1894 = vpop.permute.xlu0 %1893
      %vm1896 = vcmask 89088
      %v1897 = vsel %vm1896, %v1894, 0.0
      %v1898 = vsel %vm1797, %v1897, 0.0
      %1899 = vset.pattern.permute.xlu0 94
      %1900 = vperm.xlu0 %1899, %v1317
      %v1901 = vpop.permute.xlu0 %1900
      %v1903 = vmul.f32 %v1898, %v1901
      %v1904 = vmul.f32 %v1901, 0.0
      %v1905 = vadd.f32 %v1891, %v1903
      %v1906 = vadd.f32 %v1892, %v1904
      %vm1907 = vcmp.lt.s32.totalorder %v307, 6
      %vm1908 = vmand %vm870, %vm1907
      %1909 = vrot.lane.b32.xlu0 %v1315, 102
      %v1910 = vpop.permute.xlu0 %1909
      %vm1912 = vcmask 834560
      %v1913 = vsel %vm1912, 0.0, %v1910
      %v1914 = vsel %vm1908, 1, 0
      %v1915 = vlaneseq
      %v1916 = vshrl.u32 %v1915, 7
      %v1917 = vsub.s32 0, %v1916
      %v1918 = vrot.slane %v1914, %v1917
      %v1919 = vlaneseq
      %v1920 = vshrl.u32 %v1919, 7
      %v1921 = vsub.s32 1, %v1920
      %v1922 = vrot.slane %v1914, %v1921
      %vm1923 = vcmp.eq.s32.totalorder %v1918, 1
      %vm1924 = vcmp.eq.s32.totalorder %v1922, 1
      %v1925 = vsel %vm1924, %v1913, 0.0
      %1926 = vset.pattern.permute.xlu0 29
      %1927 = vperm.xlu0 %1926, %v1317
      %v1928 = vpop.permute.xlu0 %1927
      %v1930 = vmul.f32 %v1928, 0.0
      %v1931 = vmul.f32 %v1925, %v1928
      %v1932 = vadd.f32 %v1905, %v1930
      %v1933 = vadd.f32 %v1906, %v1931
      %1934 = vrot.lane.b32.xlu0 %v1315, 22
      %v1935 = vpop.permute.xlu0 %1934
      %vm1937 = vcmask 179200
      %v1938 = vsel %vm1937, 0.0, %v1935
      %v1939 = vsel %vm1924, %v1938, 0.0
      %1940 = vset.pattern.permute.xlu0 40
      %1941 = vperm.xlu0 %1940, %v1317
      %v1942 = vpop.permute.xlu0 %1941
      %v1944 = vmul.f32 %v1942, 0.0
      %v1945 = vmul.f32 %v1939, %v1942
      %v1946 = vadd.f32 %v1932, %v1944
      %v1947 = vadd.f32 %v1933, %v1945
      %1948 = vrot.lane.b32.xlu0 %v1315, 70
      %v1949 = vpop.permute.xlu0 %1948
      %1950 = vrot.lane.b32.xlu0 %v1316, 70
      %v1951 = vpop.permute.xlu0 %1950
      %vm1952 = vcmask 572416
      %v1953 = vsel %vm1952, %v1949, %v1951
      %v1956 = vsel %vm1952, 0.0, %v1949
      %v1957 = vsel %vm1923, %v1956, 0.0
      %v1958 = vsel %vm1924, %v1953, 0.0
      %1959 = vset.pattern.permute.xlu0 51
      %1960 = vperm.xlu0 %1959, %v1317
      %v1961 = vpop.permute.xlu0 %1960
      %v1963 = vmul.f32 %v1957, %v1961
      %v1964 = vmul.f32 %v1958, %v1961
      %v1965 = vadd.f32 %v1946, %v1963
      %v1966 = vadd.f32 %v1947, %v1964
      %1967 = vrot.lane.b32.xlu0 %v1315, 118
      %v1968 = vpop.permute.xlu0 %1967
      %1969 = vrot.lane.b32.xlu0 %v1316, 118
      %v1970 = vpop.permute.xlu0 %1969
      %vm1971 = vcmask 965632
      %v1972 = vsel %vm1971, %v1968, %v1970
      %v1975 = vsel %vm1971, %v1970, 0.0
      %v1976 = vsel %vm1923, %v1972, 0.0
      %v1977 = vsel %vm1924, %v1975, 0.0
      %1978 = vset.pattern.permute.xlu0 62
      %1979 = vperm.xlu0 %1978, %v1317
      %v1980 = vpop.permute.xlu0 %1979
      %v1982 = vmul.f32 %v1976, %v1980
      %v1983 = vmul.f32 %v1977, %v1980
      %v1984 = vadd.f32 %v1965, %v1982
      %v1985 = vadd.f32 %v1966, %v1983
      %1986 = vrot.lane.b32.xlu0 %v1315, 38
      %v1987 = vpop.permute.xlu0 %1986
      %1988 = vrot.lane.b32.xlu0 %v1316, 38
      %v1989 = vpop.permute.xlu0 %1988
      %vm1990 = vcmask 310272
      %v1991 = vsel %vm1990, %v1987, %v1989
      %v1994 = vsel %vm1990, %v1989, 0.0
      %v1995 = vsel %vm1923, %v1991, 0.0
      %v1996 = vsel %vm1924, %v1994, 0.0
      %1997 = vset.pattern.permute.xlu0 73
      %1998 = vperm.xlu0 %1997, %v1317
      %v1999 = vpop.permute.xlu0 %1998
      %v2001 = vmul.f32 %v1995, %v1999
      %v2002 = vmul.f32 %v1996, %v1999
      %v2003 = vadd.f32 %v1984, %v2001
      %v2004 = vadd.f32 %v1985, %v2002
      %2005 = vrot.lane.b32.xlu0 %v1316, 86
      %v2006 = vpop.permute.xlu0 %2005
      %vm2008 = vcmask 703488
      %v2009 = vsel %vm2008, %v2006, 0.0
      %v2010 = vsel %vm1923, %v2009, 0.0
      %2011 = vset.pattern.permute.xlu0 84
      %2012 = vperm.xlu0 %2011, %v1317
      %v2013 = vpop.permute.xlu0 %2012
      %v2015 = vmul.f32 %v2010, %v2013
      %v2016 = vmul.f32 %v2013, 0.0
      %v2017 = vadd.f32 %v2003, %v2015
      %v2018 = vadd.f32 %v2004, %v2016
      %2019 = vrot.lane.b32.xlu0 %v1316, 6
      %v2020 = vpop.permute.xlu0 %2019
      %vm2022 = vcmask 48128
      %v2023 = vsel %vm2022, %v2020, 0.0
      %v2024 = vsel %vm1923, %v2023, 0.0
      %2025 = vset.pattern.permute.xlu0 95
      %2026 = vperm.xlu0 %2025, %v1317
      %v2027 = vpop.permute.xlu0 %2026
      %v2029 = vmul.f32 %v2024, %v2027
      %v2030 = vmul.f32 %v2027, 0.0
      %v2031 = vadd.f32 %v2017, %v2029
      %v2032 = vadd.f32 %v2018, %v2030
      %vm2033 = vcmp.lt.s32.totalorder %v307, 1
      %vm2034 = vmand %vm870, %vm2033
      %2035 = vrot.lane.b32.xlu0 %v1315, 97
      %v2036 = vpop.permute.xlu0 %2035
      %v2038 = vsel %vm717, 0.0, %v2036
      %v2039 = vsel %vm2034, 1, 0
      %v2040 = vlaneseq
      %v2041 = vshrl.u32 %v2040, 7
      %v2042 = vsub.s32 0, %v2041
      %v2043 = vrot.slane %v2039, %v2042
      %v2044 = vlaneseq
      %v2045 = vshrl.u32 %v2044, 7
      %v2046 = vsub.s32 1, %v2045
      %v2047 = vrot.slane %v2039, %v2046
      %vm2048 = vcmp.eq.s32.totalorder %v2043, 1
      %vm2049 = vcmp.eq.s32.totalorder %v2047, 1
      %v2050 = vsel %vm2049, %v2038, 0.0
      %2051 = vset.pattern.permute.xlu0 30
      %2052 = vperm.xlu0 %2051, %v1317
      %v2053 = vpop.permute.xlu0 %2052
      %v2055 = vmul.f32 %v2053, 0.0
      %v2056 = vmul.f32 %v2050, %v2053
      %v2057 = vadd.f32 %v2031, %v2055
      %v2058 = vadd.f32 %v2032, %v2056
      %2059 = vrot.lane.b32.xlu0 %v1315, 17
      %v2060 = vpop.permute.xlu0 %2059
      %v2062 = vsel %vm660, 0.0, %v2060
      %v2063 = vsel %vm2049, %v2062, 0.0
      %2064 = vset.pattern.permute.xlu0 41
      %2065 = vperm.xlu0 %2064, %v1317
      %v2066 = vpop.permute.xlu0 %2065
      %v2068 = vmul.f32 %v2066, 0.0
      %v2069 = vmul.f32 %v2063, %v2066
      %v2070 = vadd.f32 %v2057, %v2068
      %v2071 = vadd.f32 %v2058, %v2069
      %2072 = vrot.lane.b32.xlu0 %v1315, 65
      %v2073 = vpop.permute.xlu0 %2072
      %2074 = vrot.lane.b32.xlu0 %v1316, 65
      %v2075 = vpop.permute.xlu0 %2074
      %vm2076 = vcmask 531456
      %v2077 = vsel %vm2076, %v2073, %v2075
      %v2080 = vsel %vm2076, 0.0, %v2073
      %v2081 = vsel %vm2048, %v2080, 0.0
      %v2082 = vsel %vm2049, %v2077, 0.0
      %2083 = vset.pattern.permute.xlu0 52
      %2084 = vperm.xlu0 %2083, %v1317
      %v2085 = vpop.permute.xlu0 %2084
      %v2087 = vmul.f32 %v2081, %v2085
      %v2088 = vmul.f32 %v2082, %v2085
      %v2089 = vadd.f32 %v2070, %v2087
      %v2090 = vadd.f32 %v2071, %v2088
      %2091 = vrot.lane.b32.xlu0 %v1315, 113
      %v2092 = vpop.permute.xlu0 %2091
      %2093 = vrot.lane.b32.xlu0 %v1316, 113
      %v2094 = vpop.permute.xlu0 %2093
      %v2095 = vsel %vm698, %v2092, %v2094
      %v2098 = vsel %vm698, %v2094, 0.0
      %v2099 = vsel %vm2048, %v2095, 0.0
      %v2100 = vsel %vm2049, %v2098, 0.0
      %2101 = vset.pattern.permute.xlu0 63
      %2102 = vperm.xlu0 %2101, %v1317
      %v2103 = vpop.permute.xlu0 %2102
      %v2105 = vmul.f32 %v2099, %v2103
      %v2106 = vmul.f32 %v2100, %v2103
      %v2107 = vadd.f32 %v2089, %v2105
      %v2108 = vadd.f32 %v2090, %v2106
      %2109 = vrot.lane.b32.xlu0 %v1315, 33
      %v2110 = vpop.permute.xlu0 %2109
      %2111 = vrot.lane.b32.xlu0 %v1316, 33
      %v2112 = vpop.permute.xlu0 %2111
      %v2113 = vsel %vm641, %v2110, %v2112
      %v2116 = vsel %vm641, %v2112, 0.0
      %v2117 = vsel %vm2048, %v2113, 0.0
      %v2118 = vsel %vm2049, %v2116, 0.0
      %2119 = vset.pattern.permute.xlu0 74
      %2120 = vperm.xlu0 %2119, %v1317
      %v2121 = vpop.permute.xlu0 %2120
      %v2123 = vmul.f32 %v2117, %v2121
      %v2124 = vmul.f32 %v2118, %v2121
      %v2125 = vadd.f32 %v2107, %v2123
      %v2126 = vadd.f32 %v2108, %v2124
      %2127 = vrot.lane.b32.xlu0 %v1316, 81
      %v2128 = vpop.permute.xlu0 %2127
      %v2130 = vsel %vm736, %v2128, 0.0
      %v2131 = vsel %vm2048, %v2130, 0.0
      %2132 = vset.pattern.permute.xlu0 85
      %2133 = vperm.xlu0 %2132, %v1317
      %v2134 = vpop.permute.xlu0 %2133
      %v2136 = vmul.f32 %v2131, %v2134
      %v2137 = vmul.f32 %v2134, 0.0
      %v2138 = vadd.f32 %v2125, %v2136
      %v2139 = vadd.f32 %v2126, %v2137
      %2140 = vrot.lane.b32.xlu0 %v1316, 1
      %v2141 = vpop.permute.xlu0 %2140
      %v2143 = vsel %vm679, %v2141, 0.0
      %v2144 = vsel %vm2048, %v2143, 0.0
      %2145 = vset.pattern.permute.xlu0 96
      %2146 = vperm.xlu0 %2145, %v1317
      %v2147 = vpop.permute.xlu0 %2146
      %v2149 = vmul.f32 %v2144, %v2147
      %v2150 = vmul.f32 %v2147, 0.0
      %v2151 = vadd.f32 %v2138, %v2149
      %v2152 = vadd.f32 %v2139, %v2150
      %v2153 = vld [vmem:[%s5] sm:$0xf]
      %2155 = vset.pattern.permute.xlu0 0
      %2156 = vperm.xlu0 %2155, %v2153
      %v2157 = vpop.permute.xlu0 %2156
      %v2159 = vadd.f32 %v2151, %v2157
      %v2160 = vadd.f32 %v2152, %v2157
      %v2161 = vld [vmem:[%s6] sm:$0xf]
      %v2162 = vld [vmem:[%s7] sm:$0xf]
      %2164 = vset.pattern.permute.xlu0 0
      %2165 = vperm.xlu0 %2164, %v2162
      %v2166 = vpop.permute.xlu0 %2165
      %vm2168 = vcmask 31744
      %v2170 = vsel %vm2168, %v2161, 0
      %vm2172 = vcmask 1043456
      %v2174 = vsel %vm2172, %v2159, 0
      %v2177 = vsel %vm2172, %v2160, 0
      %2179 = vmatprep.subr.mxu0 %v2177
      %2180 = vmatpush1.msra.mxu0 %v2174
      %2181 = vmatprep.subr.mxu0 0.0
      %2182 = vmatpush1.msra.mxu0 0.0
      %2183 = vmatprep.subr.mxu0 0.0
      %2184 = vmatpush1.msra.mxu0 0.0
      %2185 = vmatprep.subr.mxu0 0.0
      %2186 = vmatpush1.msra.mxu0 0.0
      %2187 = vmatprep.subr.mxu0 0.0
      %2188 = vmatpush1.msra.mxu0 0.0
      %2189 = vmatprep.subr.mxu0 0.0
      %2190 = vmatpush1.msra.mxu0 0.0
      %2191 = vmatprep.subr.mxu0 0.0
      %2192 = vmatpush1.msra.mxu0 0.0
      %2193 = vmatprep.subr.mxu0 0.0
      %2194 = vmatpush1.msra.mxu0 0.0
      %2195 = vmatprep.subr.mxu0 0.0
      %2196 = vmatpush1.msra.mxu0 0.0
      %2197 = vmatprep.subr.mxu0 0.0
      %2198 = vmatpush1.msra.mxu0 0.0
      %2199 = vmatprep.subr.mxu0 0.0
      %2200 = vmatpush1.msra.mxu0 0.0
      %2201 = vmatprep.subr.mxu0 0.0
      %2202 = vmatpush1.msra.mxu0 0.0
      %2203 = vmatprep.subr.mxu0 0.0
      %2204 = vmatpush1.msra.mxu0 0.0
      %2205 = vmatprep.subr.mxu0 0.0
      %2206 = vmatpush1.msra.mxu0 0.0
      %2207 = vmatprep.subr.mxu0 0.0
      %2208 = vmatpush1.msra.mxu0 0.0
      %2209 = vmatprep.subr.mxu0 0.0
      %2210 = vmatpush1.msra.mxu0 0.0
      %2211 = vmatprep.subr.mxu0 0.0
      %2212 = vmatpush1.msra.mxu0 0.0
      %2213 = vmatprep.subr.mxu0 0.0
      %2214 = vmatpush1.msra.mxu0 0.0
      %2215 = vmatprep.subr.mxu0 0.0
      %2216 = vmatpush1.msra.mxu0 0.0
      %2217 = vmatprep.subr.mxu0 0.0
      %2218 = vmatpush1.msra.mxu0 0.0
      %2219 = vmatprep.subr.mxu0 0.0
      %2220 = vmatpush1.msra.mxu0 0.0
      %2221 = vmatprep.subr.mxu0 0.0
      %2222 = vmatpush1.msra.mxu0 0.0
      %2223 = vmatprep.subr.mxu0 0.0
      %2224 = vmatpush1.msra.mxu0 0.0
      %2225 = vmatprep.subr.mxu0 0.0
      %2226 = vmatpush1.msra.mxu0 0.0
      %2227 = vmatprep.subr.mxu0 0.0
      %2228 = vmatpush1.msra.mxu0 0.0
      %2229 = vmatprep.subr.mxu0 0.0
      %2230 = vmatpush1.msra.mxu0 0.0
      %2231 = vmatprep.subr.mxu0 0.0
      %2232 = vmatpush1.msra.mxu0 0.0
      %2233 = vmatprep.subr.mxu0 0.0
      %2234 = vmatpush1.msra.mxu0 0.0
      %2235 = vmatprep.subr.mxu0 0.0
      %2236 = vmatpush1.msra.mxu0 0.0
      %2237 = vmatprep.subr.mxu0 0.0
      %2238 = vmatpush1.msra.mxu0 0.0
      %2239 = vmatprep.subr.mxu0 0.0
      %2240 = vmatpush1.msra.mxu0 0.0
      %2241 = vmatprep.subr.mxu0 0.0
      %2242 = vmatpush1.msra.mxu0 0.0
      %2243 = vmatprep.mubr.f32.mxu0 0.0
      %2244 = vmatmul.mubr.f32.gmra.mrb[0].mxu0 %v2170
      %v2245 = vpop.f32.mrb[0].mxu0
      %v2246 = vadd.f32 %v2166, %v2245
      %v2247 = vpop.f32.mrb[0].mxu0
      %v2248 = vadd.f32 %v2166, %v2247
      %2249 = vdwg.mxu0
      %v2252 = vcombine.low %v2246, %v2248
      %v2254 = vmul.f32 %v306, %v2252
      %2255 = vst [vmem:[%s305] sm:$0xff] %v2254
      %p2256 = scmp.lt.s32.totalorder %s19, 1
      %s2257 = scalar_select %p2256, %s19, 1
      %s2258 = smul.addr %s2257, 2
      %s2259 = smul.addr %s2258, 4
      %s2260 = scalar_lea.vmem %s8, %s2259
      // Predicated region
      $region53: #{lka_forward.1} parent=51 // pred_check
        %p2261 = pneg %p210
      $region54: #{lka_forward.1} parent=51 // pred_check_branch
        %2263 = sbr.rel (%p2261) target = $region56
      $region55: #{lka_forward.1} parent=51 // pred_region
        _
      $region56: #{lka_forward.1} parent=51 // pred_fallthru
        _
    $region52: #{lka_forward.1} parent=5 // pred_fallthru
      _
    %p2264 = scmp.le.s32.totalorder 2, %s14
    // Predicated region
    $region57: #{lka_forward.1} parent=5 // pred_check
      %p2265 = pneg %p2264
    $region58: #{lka_forward.1} parent=5 // pred_check_branch
      %2267 = sbr.rel (%p2265) target = $region60
    $region59: #{lka_forward.1} parent=5 // pred_region
      %s2268 = ssub.s32 %s14, 2
      // Predicated region
      $region61: #{lka_forward.1} parent=59 // pred_check
        %p2269 = pneg %p216
      $region62: #{lka_forward.1} parent=59 // pred_check_branch
        %2271 = sbr.rel (%p2269) target = $region64
      $region63: #{lka_forward.1} parent=59 // pred_region
        %p2272 = scmp.lt.s32.totalorder %s20, 1
        %s2273 = scalar_select %p2272, %s20, 1
        %s2274 = smul.addr %s2273, 2
        %s2275 = smul.addr %s2274, 4
        %s2276 = scalar_lea.vmem %s8, %s2275
      $region64: #{lka_forward.1} parent=59 // pred_fallthru
        _
    $region60: #{lka_forward.1} parent=5 // pred_fallthru
      _
  $region6: #{lka_forward.1} parent=0 // loop_footer
    %s18 = sadd.s32 1, %s14
  $region7: #{lka_forward.1} parent=0 // loop_footer_branch
    %13 = sbr.rel target = $region3
  $region8: #{lka_forward.1} parent=0 // loop_exit
    _

</llo_original>
